<compile_context>
chip_gen: v7x
topology: tpu7x:2x2x1
jax: 0.10.0
libtpu: 0.0.40
codegen_flags: <defaults>
</compile_context>

<pallas_src>
import functools

import jax
import jax.numpy as jnp
from jax.experimental import pallas as pl
from jax.experimental.pallas import tpu as pltpu


# ---------------------------------------------------------------------------
# small helpers
# ---------------------------------------------------------------------------
def _silu(x):
    return x * jax.nn.sigmoid(x)


def _mm_bf(x, w):
    """bf16-operand matmul, f32 accumulation (w already bf16)."""
    return jnp.dot(x.astype(jnp.bfloat16), w, preferred_element_type=jnp.float32)


def _mm_ref(x, w):
    """Reference-side matmul with the same bf16-operand semantics."""
    return jnp.dot(x.astype(jnp.bfloat16), w.astype(jnp.bfloat16),
                   preferred_element_type=jnp.float32)


def _const_spec(a):
    nd = a.ndim
    return pl.BlockSpec(a.shape, lambda g, _nd=nd: (0,) * _nd)


def _largest_divisor_leq(x, cap):
    cap = max(1, min(x, cap))
    for d in range(cap, 0, -1):
        if x % d == 0:
            return d
    return 1


def _pick_graph_batch(B, n, target_rows=512):
    """Gb graphs / grid step: fill ~target_rows edge rows, keep >=2 steps."""
    gb = _largest_divisor_leq(B, max(1, target_rows // max(1, n * n)))
    if B // gb < 2 and B >= 2:          # ensure both v7x TensorCores get work
        gb = _largest_divisor_leq(B, max(1, B // 2))
    return gb


def _pick_frontend_batch(B, target=256):
    """Graph batch for the frontend; 2-D blocks need Gb % 8 == 0 or Gb == B."""
    if B <= target:
        return B
    for d in range(min(B, target), 0, -1):
        if B % d == 0 and d % 8 == 0:
            return d
    return B


_VMEM_LIMIT = 48 * 1024 * 1024   # headroom under v7x's 64 MiB physical VMEM


# ---------------------------------------------------------------------------
# Kernel 1: decoder front-end (embedding + 3 MLP heads), grid over graphs
# ---------------------------------------------------------------------------
def _frontend_kernel(z_ref, zg_ref,
                     emb_w, emb_b, pw1, pb1, pw2, pb2,
                     ew1, eb1, ew2, eb2, aw1, ab1, aw2, ab2,
                     h_out, x_out, ea_out, an_out, *, gb, n, feat):
    z2 = z_ref[...].reshape(gb * n, feat)        # per-node rows
    zg = zg_ref[...]                             # (gb, n*feat) per-graph rows

    # embedding (plain Linear)
    h_out[...] = (_mm_bf(z2, emb_w[...]) + emb_b[...]).reshape(gb, n, -1)

    # re_atom_position MLP
    hp = _silu(_mm_bf(z2, pw1[...]) + pb1[...])
    x_out[...] = (_mm_bf(hp, pw2[...]) + pb2[...]).reshape(gb, n, 3)

    # re_edge_attr MLP (per-graph input)
    he = _silu(_mm_bf(zg, ew1[...]) + eb1[...])
    ea_out[...] = _mm_bf(he, ew2[...]) + eb2[...]

    # atom_num MLP (per-graph input)
    ha = _silu(_mm_bf(zg, aw1[...]) + ab1[...])
    an_out[...] = _mm_bf(ha, aw2[...]) + ab2[...]


def frontend_call(prep, z_, z_graph, n, feat):
    B = z_graph.shape[0]
    H = prep["embedding"]["w"].shape[1]
    pos, ea, an = (prep["re_atom_position"], prep["re_edge_attr"],
                   prep["atom_num_mlp"])
    gb = _pick_frontend_batch(B)
    grid = (B // gb,)
    z3 = z_.reshape(B, n, feat)

    weights = (prep["embedding"]["w"], prep["embedding"]["b"],
               pos[0]["w"], pos[0]["b"], pos[1]["w"], pos[1]["b"],
               ea[0]["w"], ea[0]["b"], ea[1]["w"], ea[1]["b"],
               an[0]["w"], an[0]["b"], an[1]["w"], an[1]["b"])

    in_specs = [pl.BlockSpec((gb, n, feat), lambda g: (g, 0, 0)),
                pl.BlockSpec((gb, n * feat), lambda g: (g, 0))]
    in_specs += [_const_spec(a) for a in weights]

    ea_dim = ea[1]["w"].shape[1]
    an_dim = an[1]["w"].shape[1]
    out_specs = (pl.BlockSpec((gb, n, H), lambda g: (g, 0, 0)),
                 pl.BlockSpec((gb, n, 3), lambda g: (g, 0, 0)),
                 pl.BlockSpec((gb, ea_dim), lambda g: (g, 0)),
                 pl.BlockSpec((gb, an_dim), lambda g: (g, 0)))
    out_shape = (jax.ShapeDtypeStruct((B, n, H), jnp.float32),
                 jax.ShapeDtypeStruct((B, n, 3), jnp.float32),
                 jax.ShapeDtypeStruct((B, ea_dim), jnp.float32),
                 jax.ShapeDtypeStruct((B, an_dim), jnp.float32))

    kernel = functools.partial(_frontend_kernel, gb=gb, n=n, feat=feat)
    return pl.pallas_call(
        kernel, grid=grid, in_specs=in_specs, out_specs=out_specs,
        out_shape=out_shape,
        compiler_params=pltpu.CompilerParams(
            dimension_semantics=("parallel",),
            vmem_limit_bytes=_VMEM_LIMIT),
    )(z3, z_graph, *weights)


# ---------------------------------------------------------------------------
# Kernel 2: all E_GCL_mask layers + re_nodes MLP fused, grid over graph batches
# ---------------------------------------------------------------------------
def _egcl_stack_kernel(h_ref, x_ref, ea_ref,
                       e1w, e1b, e2w, e2b, c1w, c1b, c2w, c2b,
                       n1w, n1b, n2w, n2b,
                       rn1w, rn1b, rn2w, rn2b,
                       h_out, coord_out,
                       *, gb, n, hidden, n_layers, coords_weight):
    H = hidden
    h = h_ref[...].reshape(gb * n, H)                       # (Gb*n, H) f32
    coord = x_ref[...]                                      # (Gb, n, 3) f32
    ea_bf = ea_ref[...].reshape(gb * n * n, 5).astype(jnp.bfloat16)

    # geometry is layer-invariant: every layer consumes the original x_re
    cd = coord[:, :, None, :] - coord[:, None, :, :]        # (Gb, n, n, 3)
    radial = jnp.sum(cd * cd, axis=-1, keepdims=True)       # (Gb, n, n, 1)
    radial = radial.astype(jnp.bfloat16).astype(jnp.float32)

    for l in range(n_layers):                               # short static loop
        we1 = e1w[l]                                        # (2H+1+E_in, H) bf16
        w_src, w_dst = we1[:H], we1[H:2 * H]
        w_rad = we1[2 * H:2 * H + 1].astype(jnp.float32)    # (1, H)
        w_ea = we1[2 * H + 1:]

        h_bf = h.astype(jnp.bfloat16)
        hs = jnp.dot(h_bf, w_src, preferred_element_type=jnp.float32)
        hd = jnp.dot(h_bf, w_dst, preferred_element_type=jnp.float32)
        eap = jnp.dot(ea_bf, w_ea, preferred_element_type=jnp.float32)

        # edge MLP over all Gb*n^2 edges at once (no concat materialized)
        pre = (hs.reshape(gb, n, 1, H) + hd.reshape(gb, 1, n, H)
               + radial * w_rad + eap.reshape(gb, n, n, H) + e1b[l])
        m = _silu(pre).reshape(gb * n * n, H)
        m = _silu(_mm_bf(m, e2w[l]) + e2b[l])               # (Gb*n^2, H)

        if l == n_layers - 1:       # coord work on earlier layers is dead
            cm = _silu(_mm_bf(m, c1w[l]) + c1b[l])
            cm = _mm_bf(cm, c2w[l]) + c2b[l]                # (Gb*n^2, 1)
            trans = cd.reshape(gb * n * n, 3) * cm
            agg_c = jnp.sum(trans.reshape(gb, n, n, 3), axis=2)
            coord_out[...] = coord + agg_c * coords_weight

        # node MLP (node_attr = h, recurrent=False)
        agg_m = jnp.sum(m.reshape(gb, n, n, H), axis=2).reshape(gb * n, H)
        wn1 = n1w[l]                                        # (3H, H) bf16
        w_nh, w_na, w_nat = wn1[:H], wn1[H:2 * H], wn1[2 * H:]
        nh = _silu(_mm_bf(h, w_nh) + _mm_bf(agg_m, w_na)
                   + _mm_bf(h, w_nat) + n1b[l])
        h = _mm_bf(nh, n2w[l]) + n2b[l]

    # fused re_nodes head: Linear -> SiLU -> Linear
    hr = _silu(_mm_bf(h, rn1w[...]) + rn1b[...])
    hr = _mm_bf(hr, rn2w[...]) + rn2b[...]
    h_out[...] = hr.reshape(gb, n, -1)


def egcl_stack_call(gcl, rn, h3, x3, ea3, *, coords_weight, out_nf):
    B, n, H = h3.shape
    L = gcl["e1_w"].shape[0]
    gb = _pick_graph_batch(B, n)
    grid = (B // gb,)

    weights = (gcl["e1_w"], gcl["e1_b"], gcl["e2_w"], gcl["e2_b"],
               gcl["c1_w"], gcl["c1_b"], gcl["c2_w"], gcl["c2_b"],
               gcl["n1_w"], gcl["n1_b"], gcl["n2_w"], gcl["n2_b"],
               rn[0]["w"], rn[0]["b"], rn[1]["w"], rn[1]["b"])

    in_specs = [pl.BlockSpec((gb, n, H), lambda g: (g, 0, 0)),
                pl.BlockSpec((gb, n, 3), lambda g: (g, 0, 0)),
                pl.BlockSpec((gb, n * n, 5), lambda g: (g, 0, 0))]
    in_specs += [_const_spec(a) for a in weights]

    out_specs = (pl.BlockSpec((gb, n, out_nf), lambda g: (g, 0, 0)),
                 pl.BlockSpec((gb, n, 3), lambda g: (g, 0, 0)))
    out_shape = (jax.ShapeDtypeStruct((B, n, out_nf), jnp.float32),
                 jax.ShapeDtypeStruct((B, n, 3), jnp.float32))

    kernel = functools.partial(_egcl_stack_kernel, gb=gb, n=n, hidden=H,
                               n_layers=L, coords_weight=coords_weight)
    return pl.pallas_call(
        kernel, grid=grid, in_specs=in_specs, out_specs=out_specs,
        out_shape=out_shape,
        compiler_params=pltpu.CompilerParams(
            dimension_semantics=("parallel",),
            vmem_limit_bytes=_VMEM_LIMIT),
    )(h3, x3, ea3, *weights)


# ---------------------------------------------------------------------------
# Deterministic parameter init (xavier_uniform_ weights, zero biases)
# ---------------------------------------------------------------------------
def xavier_uniform(key, fan_in, fan_out, gain=1.0):
    bound = gain * (6.0 / (fan_in + fan_out)) ** 0.5
    return jax.random.uniform(key, (fan_in, fan_out), jnp.float32, -bound, bound)


def linear_params(key, nin, nout, gain=1.0):
    return {"w": xavier_uniform(key, nin, nout, gain),
            "b": jnp.zeros((nout,), jnp.float32)}


def mlp_params(key, nin, nout, nh, gain=1.0):
    k1, k2 = jax.random.split(key)
    return [linear_params(k1, nin, nh, gain), linear_params(k2, nh, nout, gain)]


def egcl_params(key, hidden_nf, edges_in_d, nodes_attr_dim, gain=1.0):
    ks = jax.random.split(key, 6)
    input_edge = hidden_nf * 2
    return {
        "edge1": linear_params(ks[0], input_edge + 1 + edges_in_d, hidden_nf, gain),
        "edge2": linear_params(ks[1], hidden_nf, hidden_nf, gain),
        "coord1": linear_params(ks[2], hidden_nf, hidden_nf, gain),
        "coord2": linear_params(ks[3], hidden_nf, 1, 0.001),
        "node1": linear_params(ks[4], hidden_nf + hidden_nf + nodes_attr_dim,
                               hidden_nf, gain),
        "node2": linear_params(ks[5], hidden_nf, hidden_nf, gain),
    }


def init_decoder(key, in_node_nf, in_edge_nf, hidden_nf, latent_dim,
                 n_layers, padding_dim, gain3=1.0):
    ks = jax.random.split(key, 5 + n_layers)
    feat = latent_dim + 7
    return {
        "embedding": linear_params(ks[0], feat, hidden_nf, gain3),
        "re_nodes": mlp_params(ks[1], hidden_nf, in_node_nf, hidden_nf // 2),
        "re_atom_position": mlp_params(ks[2], feat, 3, padding_dim // 2),
        "re_edge_attr": mlp_params(ks[3], padding_dim * feat,
                                   padding_dim ** 2 * 5, padding_dim * 2, gain3),
        "atom_num_mlp": mlp_params(ks[4], padding_dim * feat,
                                   padding_dim, padding_dim * 2, gain3),
        "gcl": [egcl_params(ks[5 + i], hidden_nf, in_edge_nf, hidden_nf)
                for i in range(n_layers)],
        # TODO(synk): graph_dec exists in __init__ but is never used in forward(); omitted.
    }


def prepare_decoder_params(params):
    """One-time prep: bf16 matmul weights, (1,N) biases, stacked GCL layers."""
    bf = jnp.bfloat16

    def lin2(p):
        return {"w": p["w"].astype(bf), "b": p["b"].reshape(1, -1)}

    def mlp2(p):
        return [lin2(p[0]), lin2(p[1])]

    gcl = params["gcl"]

    def stack_w(name):
        return jnp.stack([g[name]["w"] for g in gcl]).astype(bf)

    def stack_b(name):
        return jnp.stack([g[name]["b"].reshape(1, -1) for g in gcl])

    return {
        "embedding": lin2(params["embedding"]),
        "re_nodes": mlp2(params["re_nodes"]),
        "re_atom_position": mlp2(params["re_atom_position"]),
        "re_edge_attr": mlp2(params["re_edge_attr"]),
        "atom_num_mlp": mlp2(params["atom_num_mlp"]),
        "gcl_stack": {
            "e1_w": stack_w("edge1"), "e1_b": stack_b("edge1"),
            "e2_w": stack_w("edge2"), "e2_b": stack_b("edge2"),
            "c1_w": stack_w("coord1"), "c1_b": stack_b("coord1"),
            "c2_w": stack_w("coord2"), "c2_b": stack_b("coord2"),
            "n1_w": stack_w("node1"), "n1_b": stack_b("node1"),
            "n2_w": stack_w("node2"), "n2_b": stack_b("node2"),
        },
    }


# ---------------------------------------------------------------------------
# Decoder forward (2 fused pallas_calls)
# ---------------------------------------------------------------------------
def decoder_forward(prep, z, label, *, latent_dim, padding_dim, n_layers,
                    coords_weight=1.0):
    if n_layers < 1:
        raise ValueError("n_layers must be >= 1 (coord output undefined otherwise)")
    feat = latent_dim + 7
    n = padding_dim
    z_ = jnp.concatenate([z, label], axis=1)                 # (B*n, latent+7)
    B = z_.shape[0] // n
    z_graph = z_.reshape(B, n * feat)

    h3, x3, ea2, atom_num = frontend_call(prep, z_, z_graph, n, feat)
    ea3 = ea2.reshape(B, n * n, 5)

    out_nf = prep["re_nodes"][1]["w"].shape[1]
    h_node, coord3 = egcl_stack_call(prep["gcl_stack"], prep["re_nodes"],
                                     h3, x3, ea3,
                                     coords_weight=coords_weight,
                                     out_nf=out_nf)

    h_out = h_node.reshape(B * n, out_nf)
    coord_out = coord3.reshape(B * n, 3)
    edge_attr_out = ea2.reshape(B * n * n, 5)                # returned unchanged
    return h_out, coord_out, edge_attr_out, atom_num


# ---------------------------------------------------------------------------
# Pure-JAX reference (gather / concat formulation) used as a self-check.
# Uses the same bf16-operand matmuls so parity stays tight.
# ---------------------------------------------------------------------------
def decoder_forward_ref(params, z, label, rows, cols,
                        latent_dim, padding_dim, n_layers, n_nodes,
                        coords_weight=1.0):
    feat = latent_dim + 7

    def lin(q, x, act=False):
        y = _mm_ref(x, q["w"]) + q["b"]
        return _silu(y) if act else y

    def mlp(p, x):
        return lin(p[1], lin(p[0], x, True))

    z_ = jnp.concatenate([z, label], axis=1)
    z_graph = z_.reshape(-1, padding_dim * feat)
    atom_num = mlp(params["atom_num_mlp"], z_graph)
    h = lin(params["embedding"], z_)
    x_re = mlp(params["re_atom_position"], z_)
    ea = mlp(params["re_edge_attr"], z_graph).reshape(-1, 5)

    num_nodes = h.shape[0]
    coord = None
    for i in range(n_layers):
        p = params["gcl"][i]
        coord_in = x_re
        coord_diff = coord_in[rows] - coord_in[cols]
        radial = jnp.sum(coord_diff ** 2, axis=1, keepdims=True)
        edge_in = jnp.concatenate([h[rows], h[cols], radial, ea], axis=1)
        m = lin(p["edge2"], lin(p["edge1"], edge_in, True), True)
        cm = lin(p["coord2"], lin(p["coord1"], m, True))
        trans = coord_diff * cm
        agg_c = jnp.sum(trans.reshape(num_nodes, n_nodes, 3), axis=1)
        coord = coord_in + agg_c * coords_weight
        agg_m = jnp.sum(m.reshape(num_nodes, n_nodes, -1), axis=1)
        node_in = jnp.concatenate([h, agg_m, h], axis=1)
        h = lin(p["node2"], lin(p["node1"], node_in, True))
    h = mlp(params["re_nodes"], h)
    return h, coord, ea, atom_num


# ---------------------------------------------------------------------------
if __name__ == "__main__":
    B = 2
    padding_dim = n_nodes = 4
    latent_dim = 8
    hidden_nf = 32
    in_node_nf = 5
    in_edge_nf = 5
    n_layers = 2

    key = jax.random.PRNGKey(0)
    k_param, k_z, k_lab = jax.random.split(key, 3)
    params = init_decoder(k_param, in_node_nf, in_edge_nf, hidden_nf,
                          latent_dim, n_layers, padding_dim)
    prep = prepare_decoder_params(params)

    z = jax.random.normal(k_z, (B * n_nodes, latent_dim), jnp.float32)
    label = jax.random.normal(k_lab, (B * n_nodes, 7), jnp.float32)

    # fully connected graph per molecule (self-loops included, source-major)
    rows, cols = [], []
    for b in range(B):
        for i in range(n_nodes):
            for j in range(n_nodes):
                rows.append(b * n_nodes + i)
                cols.append(b * n_nodes + j)
    rows = jnp.asarray(rows, jnp.int32)
    cols = jnp.asarray(cols, jnp.int32)

    fwd = jax.jit(functools.partial(decoder_forward, latent_dim=latent_dim,
                                    padding_dim=padding_dim, n_layers=n_layers))
    h_re, coord_re, edge_attr_re, atom_num = fwd(prep, z, label)
    jax.block_until_ready((h_re, coord_re, edge_attr_re, atom_num))

    assert h_re.shape == (B * n_nodes, in_node_nf)
    assert coord_re.shape == (B * n_nodes, 3)
    assert edge_attr_re.shape == (B * n_nodes * n_nodes, 5)
    assert atom_num.shape == (B, padding_dim)

    # numerical parity with the gather-based pure-JAX reference (bf16 matmul
    # operands in both paths -> only f32 accumulation-order differences).
    ref = decoder_forward_ref(params, z, label, rows, cols,
                              latent_dim, padding_dim, n_layers, n_nodes)
    for got, want in zip((h_re, coord_re, edge_attr_re, atom_num), ref):
        assert bool(jnp.allclose(got, want, rtol=1e-2, atol=1e-2)), (
            got.shape, float(jnp.max(jnp.abs(got - want))))

    print("KERNEL_OK")
</pallas_src>

<mosaic_0001>
module attributes {stable_mosaic.version = 11 : i64} {
  func.func @_frontend_kernel(%arg0: i32, %arg1: memref<2x4x15xf32, #tpu.memory_space<vmem>>, %arg2: memref<2x60xf32, #tpu.memory_space<vmem>>, %arg3: memref<15x32xbf16, #tpu.memory_space<vmem>>, %arg4: memref<1x32xf32, #tpu.memory_space<vmem>>, %arg5: memref<15x2xbf16, #tpu.memory_space<vmem>>, %arg6: memref<1x2xf32, #tpu.memory_space<vmem>>, %arg7: memref<2x3xbf16, #tpu.memory_space<vmem>>, %arg8: memref<1x3xf32, #tpu.memory_space<vmem>>, %arg9: memref<60x8xbf16, #tpu.memory_space<vmem>>, %arg10: memref<1x8xf32, #tpu.memory_space<vmem>>, %arg11: memref<8x80xbf16, #tpu.memory_space<vmem>>, %arg12: memref<1x80xf32, #tpu.memory_space<vmem>>, %arg13: memref<60x8xbf16, #tpu.memory_space<vmem>>, %arg14: memref<1x8xf32, #tpu.memory_space<vmem>>, %arg15: memref<8x4xbf16, #tpu.memory_space<vmem>>, %arg16: memref<1x4xf32, #tpu.memory_space<vmem>>, %arg17: memref<2x4x32xf32, #tpu.memory_space<vmem>>, %arg18: memref<2x4x3xf32, #tpu.memory_space<vmem>>, %arg19: memref<2x80xf32, #tpu.memory_space<vmem>>, %arg20: memref<2x4xf32, #tpu.memory_space<vmem>>) attributes {dimension_semantics = [#tpu.dimension_semantics<parallel>], iteration_bounds = array<i64: 1>, scalar_prefetch = 0 : i64, scratch_operands = 0 : i64, tpu.core_type = #tpu.core_type<tc>, window_params = [{transform_indices = @transform_0, window_bounds = array<i64: 2, 4, 15>}, {transform_indices = @transform_1, window_bounds = array<i64: 2, 60>}, {pipeline_mode = #tpu.pipeline_mode<synchronous>, transform_indices = @transform_2, window_bounds = array<i64: 15, 32>}, {pipeline_mode = #tpu.pipeline_mode<synchronous>, transform_indices = @transform_3, window_bounds = array<i64: 1, 32>}, {pipeline_mode = #tpu.pipeline_mode<synchronous>, transform_indices = @transform_4, window_bounds = array<i64: 15, 2>}, {pipeline_mode = #tpu.pipeline_mode<synchronous>, transform_indices = @transform_5, window_bounds = array<i64: 1, 2>}, {pipeline_mode = #tpu.pipeline_mode<synchronous>, transform_indices = @transform_6, window_bounds = array<i64: 2, 3>}, {pipeline_mode = #tpu.pipeline_mode<synchronous>, transform_indices = @transform_7, window_bounds = array<i64: 1, 3>}, {pipeline_mode = #tpu.pipeline_mode<synchronous>, transform_indices = @transform_8, window_bounds = array<i64: 60, 8>}, {pipeline_mode = #tpu.pipeline_mode<synchronous>, transform_indices = @transform_9, window_bounds = array<i64: 1, 8>}, {pipeline_mode = #tpu.pipeline_mode<synchronous>, transform_indices = @transform_10, window_bounds = array<i64: 8, 80>}, {pipeline_mode = #tpu.pipeline_mode<synchronous>, transform_indices = @transform_11, window_bounds = array<i64: 1, 80>}, {pipeline_mode = #tpu.pipeline_mode<synchronous>, transform_indices = @transform_12, window_bounds = array<i64: 60, 8>}, {pipeline_mode = #tpu.pipeline_mode<synchronous>, transform_indices = @transform_13, window_bounds = array<i64: 1, 8>}, {pipeline_mode = #tpu.pipeline_mode<synchronous>, transform_indices = @transform_14, window_bounds = array<i64: 8, 4>}, {pipeline_mode = #tpu.pipeline_mode<synchronous>, transform_indices = @transform_15, window_bounds = array<i64: 1, 4>}, {transform_indices = @transform_16, window_bounds = array<i64: 2, 4, 32>}, {transform_indices = @transform_17, window_bounds = array<i64: 2, 4, 3>}, {transform_indices = @transform_18, window_bounds = array<i64: 2, 80>}, {transform_indices = @transform_19, window_bounds = array<i64: 2, 4>}]} {
    %c0 = arith.constant 0 : index
    %c0_0 = arith.constant 0 : index
    %c0_1 = arith.constant 0 : index
    %0 = vector.load %arg1[%c0, %c0_0, %c0_1] : memref<2x4x15xf32, #tpu.memory_space<vmem>>, vector<2x4x15xf32>
    %1 = vector.shape_cast %0 : vector<2x4x15xf32> to vector<8x15xf32>
    %c0_2 = arith.constant 0 : index
    %c0_3 = arith.constant 0 : index
    %2 = vector.load %arg2[%c0_2, %c0_3] : memref<2x60xf32, #tpu.memory_space<vmem>>, vector<2x60xf32>
    %c0_4 = arith.constant 0 : index
    %c0_5 = arith.constant 0 : index
    %3 = vector.load %arg3[%c0_4, %c0_5] : memref<15x32xbf16, #tpu.memory_space<vmem>>, vector<15x32xbf16>
    %4 = arith.truncf %1 : vector<8x15xf32> to vector<8x15xbf16>
    %cst = arith.constant dense<0.000000e+00> : vector<8x32xf32>
    %5 = tpu.matmul %4, %3, %cst {dimension_numbers = #tpu.dot_dimension_numbers<[1], [0], [0], [1], [0, 0, 1, 1], [], []>} : vector<8x15xbf16>, vector<15x32xbf16>, vector<8x32xf32> -> vector<8x32xf32>
    %c0_6 = arith.constant 0 : index
    %c0_7 = arith.constant 0 : index
    %6 = vector.load %arg4[%c0_6, %c0_7] : memref<1x32xf32, #tpu.memory_space<vmem>>, vector<1x32xf32>
    %7 = vector.broadcast %6 : vector<1x32xf32> to vector<8x32xf32>
    %8 = arith.addf %5, %7 : vector<8x32xf32>
    %9 = vector.shape_cast %8 : vector<8x32xf32> to vector<2x4x32xf32>
    %c0_8 = arith.constant 0 : index
    %c0_9 = arith.constant 0 : index
    %c0_10 = arith.constant 0 : index
    %10 = vector.load %arg17[%c0_8, %c0_9, %c0_10] : memref<2x4x32xf32, #tpu.memory_space<vmem>>, vector<2x4x32xf32>
    tpu.vector_store %arg17[%c0_8, %c0_9, %c0_10], %9 {strides = array<i32>} : memref<2x4x32xf32, #tpu.memory_space<vmem>>, vector<2x4x32xf32>,
    %c0_11 = arith.constant 0 : index
    %c0_12 = arith.constant 0 : index
    %11 = vector.load %arg5[%c0_11, %c0_12] : memref<15x2xbf16, #tpu.memory_space<vmem>>, vector<15x2xbf16>
    %12 = arith.truncf %1 : vector<8x15xf32> to vector<8x15xbf16>
    %cst_13 = arith.constant dense<0.000000e+00> : vector<8x2xf32>
    %13 = tpu.matmul %12, %11, %cst_13 {dimension_numbers = #tpu.dot_dimension_numbers<[1], [0], [0], [1], [0, 0, 1, 1], [], []>} : vector<8x15xbf16>, vector<15x2xbf16>, vector<8x2xf32> -> vector<8x2xf32>
    %c0_14 = arith.constant 0 : index
    %c0_15 = arith.constant 0 : index
    %14 = vector.load %arg6[%c0_14, %c0_15] : memref<1x2xf32, #tpu.memory_space<vmem>>, vector<1x2xf32>
    %15 = vector.broadcast %14 : vector<1x2xf32> to vector<8x2xf32>
    %16 = arith.addf %13, %15 : vector<8x2xf32>
    %17 = arith.negf %16 : vector<8x2xf32>
    %18 = math.exp %17 : vector<8x2xf32>
    %cst_16 = arith.constant 1.000000e+00 : f32
    %19 = vector.broadcast %cst_16 : f32 to vector<8x2xf32>
    %20 = arith.addf %19, %18 : vector<8x2xf32>
    %21 = arith.divf %19, %20 : vector<8x2xf32>
    %22 = arith.mulf %16, %21 : vector<8x2xf32>
    %c0_17 = arith.constant 0 : index
    %c0_18 = arith.constant 0 : index
    %23 = vector.load %arg7[%c0_17, %c0_18] : memref<2x3xbf16, #tpu.memory_space<vmem>>, vector<2x3xbf16>
    %24 = arith.truncf %22 : vector<8x2xf32> to vector<8x2xbf16>
    %cst_19 = arith.constant dense<0.000000e+00> : vector<8x3xf32>
    %25 = tpu.matmul %24, %23, %cst_19 {dimension_numbers = #tpu.dot_dimension_numbers<[1], [0], [0], [1], [0, 0, 1, 1], [], []>} : vector<8x2xbf16>, vector<2x3xbf16>, vector<8x3xf32> -> vector<8x3xf32>
    %c0_20 = arith.constant 0 : index
    %c0_21 = arith.constant 0 : index
    %26 = vector.load %arg8[%c0_20, %c0_21] : memref<1x3xf32, #tpu.memory_space<vmem>>, vector<1x3xf32>
    %27 = vector.broadcast %26 : vector<1x3xf32> to vector<8x3xf32>
    %28 = arith.addf %25, %27 : vector<8x3xf32>
    %29 = vector.shape_cast %28 : vector<8x3xf32> to vector<2x4x3xf32>
    %c0_22 = arith.constant 0 : index
    %c0_23 = arith.constant 0 : index
    %c0_24 = arith.constant 0 : index
    %30 = vector.load %arg18[%c0_22, %c0_23, %c0_24] : memref<2x4x3xf32, #tpu.memory_space<vmem>>, vector<2x4x3xf32>
    tpu.vector_store %arg18[%c0_22, %c0_23, %c0_24], %29 {strides = array<i32>} : memref<2x4x3xf32, #tpu.memory_space<vmem>>, vector<2x4x3xf32>,
    %c0_25 = arith.constant 0 : index
    %c0_26 = arith.constant 0 : index
    %31 = vector.load %arg9[%c0_25, %c0_26] : memref<60x8xbf16, #tpu.memory_space<vmem>>, vector<60x8xbf16>
    %32 = arith.truncf %2 : vector<2x60xf32> to vector<2x60xbf16>
    %cst_27 = arith.constant dense<0.000000e+00> : vector<2x8xf32>
    %33 = tpu.matmul %32, %31, %cst_27 {dimension_numbers = #tpu.dot_dimension_numbers<[1], [0], [0], [1], [0, 0, 1, 1], [], []>} : vector<2x60xbf16>, vector<60x8xbf16>, vector<2x8xf32> -> vector<2x8xf32>
    %c0_28 = arith.constant 0 : index
    %c0_29 = arith.constant 0 : index
    %34 = vector.load %arg10[%c0_28, %c0_29] : memref<1x8xf32, #tpu.memory_space<vmem>>, vector<1x8xf32>
    %35 = vector.broadcast %34 : vector<1x8xf32> to vector<2x8xf32>
    %36 = arith.addf %33, %35 : vector<2x8xf32>
    %37 = arith.negf %36 : vector<2x8xf32>
    %38 = math.exp %37 : vector<2x8xf32>
    %cst_30 = arith.constant 1.000000e+00 : f32
    %39 = vector.broadcast %cst_30 : f32 to vector<2x8xf32>
    %40 = arith.addf %39, %38 : vector<2x8xf32>
    %41 = arith.divf %39, %40 : vector<2x8xf32>
    %42 = arith.mulf %36, %41 : vector<2x8xf32>
    %c0_31 = arith.constant 0 : index
    %c0_32 = arith.constant 0 : index
    %43 = vector.load %arg11[%c0_31, %c0_32] : memref<8x80xbf16, #tpu.memory_space<vmem>>, vector<8x80xbf16>
    %44 = arith.truncf %42 : vector<2x8xf32> to vector<2x8xbf16>
    %cst_33 = arith.constant dense<0.000000e+00> : vector<2x80xf32>
    %45 = tpu.matmul %44, %43, %cst_33 {dimension_numbers = #tpu.dot_dimension_numbers<[1], [0], [0], [1], [0, 0, 1, 1], [], []>} : vector<2x8xbf16>, vector<8x80xbf16>, vector<2x80xf32> -> vector<2x80xf32>
    %c0_34 = arith.constant 0 : index
    %c0_35 = arith.constant 0 : index
    %46 = vector.load %arg12[%c0_34, %c0_35] : memref<1x80xf32, #tpu.memory_space<vmem>>, vector<1x80xf32>
    %47 = vector.broadcast %46 : vector<1x80xf32> to vector<2x80xf32>
    %48 = arith.addf %45, %47 : vector<2x80xf32>
    %c0_36 = arith.constant 0 : index
    %c0_37 = arith.constant 0 : index
    %49 = vector.load %arg19[%c0_36, %c0_37] : memref<2x80xf32, #tpu.memory_space<vmem>>, vector<2x80xf32>
    tpu.vector_store %arg19[%c0_36, %c0_37], %48 {strides = array<i32>} : memref<2x80xf32, #tpu.memory_space<vmem>>, vector<2x80xf32>,
    %c0_38 = arith.constant 0 : index
    %c0_39 = arith.constant 0 : index
    %50 = vector.load %arg13[%c0_38, %c0_39] : memref<60x8xbf16, #tpu.memory_space<vmem>>, vector<60x8xbf16>
    %51 = arith.truncf %2 : vector<2x60xf32> to vector<2x60xbf16>
    %cst_40 = arith.constant dense<0.000000e+00> : vector<2x8xf32>
    %52 = tpu.matmul %51, %50, %cst_40 {dimension_numbers = #tpu.dot_dimension_numbers<[1], [0], [0], [1], [0, 0, 1, 1], [], []>} : vector<2x60xbf16>, vector<60x8xbf16>, vector<2x8xf32> -> vector<2x8xf32>
    %c0_41 = arith.constant 0 : index
    %c0_42 = arith.constant 0 : index
    %53 = vector.load %arg14[%c0_41, %c0_42] : memref<1x8xf32, #tpu.memory_space<vmem>>, vector<1x8xf32>
    %54 = vector.broadcast %53 : vector<1x8xf32> to vector<2x8xf32>
    %55 = arith.addf %52, %54 : vector<2x8xf32>
    %56 = arith.negf %55 : vector<2x8xf32>
    %57 = math.exp %56 : vector<2x8xf32>
    %cst_43 = arith.constant 1.000000e+00 : f32
    %58 = vector.broadcast %cst_43 : f32 to vector<2x8xf32>
    %59 = arith.addf %58, %57 : vector<2x8xf32>
    %60 = arith.divf %58, %59 : vector<2x8xf32>
    %61 = arith.mulf %55, %60 : vector<2x8xf32>
    %c0_44 = arith.constant 0 : index
    %c0_45 = arith.constant 0 : index
    %62 = vector.load %arg15[%c0_44, %c0_45] : memref<8x4xbf16, #tpu.memory_space<vmem>>, vector<8x4xbf16>
    %63 = arith.truncf %61 : vector<2x8xf32> to vector<2x8xbf16>
    %cst_46 = arith.constant dense<0.000000e+00> : vector<2x4xf32>
    %64 = tpu.matmul %63, %62, %cst_46 {dimension_numbers = #tpu.dot_dimension_numbers<[1], [0], [0], [1], [0, 0, 1, 1], [], []>} : vector<2x8xbf16>, vector<8x4xbf16>, vector<2x4xf32> -> vector<2x4xf32>
    %c0_47 = arith.constant 0 : index
    %c0_48 = arith.constant 0 : index
    %65 = vector.load %arg16[%c0_47, %c0_48] : memref<1x4xf32, #tpu.memory_space<vmem>>, vector<1x4xf32>
    %66 = vector.broadcast %65 : vector<1x4xf32> to vector<2x4xf32>
    %67 = arith.addf %64, %66 : vector<2x4xf32>
    %c0_49 = arith.constant 0 : index
    %c0_50 = arith.constant 0 : index
    %68 = vector.load %arg20[%c0_49, %c0_50] : memref<2x4xf32, #tpu.memory_space<vmem>>, vector<2x4xf32>
    tpu.vector_store %arg20[%c0_49, %c0_50], %67 {strides = array<i32>} : memref<2x4xf32, #tpu.memory_space<vmem>>, vector<2x4xf32>,
    return
  }
  func.func @transform_0(%arg0: i32) -> (i32, i32, i32) {
    %c0_i32 = arith.constant 0 : i32
    %c0_i32_0 = arith.constant 0 : i32
    %c0_i32_1 = arith.constant 0 : i32
    return %arg0, %c0_i32, %c0_i32_0 : i32, i32, i32
  }
  func.func @transform_1(%arg0: i32) -> (i32, i32) {
    %c0_i32 = arith.constant 0 : i32
    %c0_i32_0 = arith.constant 0 : i32
    return %arg0, %c0_i32 : i32, i32
  }
  func.func @transform_2(%arg0: i32) -> (i32, i32) {
    %c0_i32 = arith.constant 0 : i32
    %c0_i32_0 = arith.constant 0 : i32
    %c0_i32_1 = arith.constant 0 : i32
    return %c0_i32, %c0_i32_0 : i32, i32
  }
  func.func @transform_3(%arg0: i32) -> (i32, i32) {
    %c0_i32 = arith.constant 0 : i32
    %c0_i32_0 = arith.constant 0 : i32
    %c0_i32_1 = arith.constant 0 : i32
    return %c0_i32, %c0_i32_0 : i32, i32
  }
  func.func @transform_4(%arg0: i32) -> (i32, i32) {
    %c0_i32 = arith.constant 0 : i32
    %c0_i32_0 = arith.constant 0 : i32
    %c0_i32_1 = arith.constant 0 : i32
    return %c0_i32, %c0_i32_0 : i32, i32
  }
  func.func @transform_5(%arg0: i32) -> (i32, i32) {
    %c0_i32 = arith.constant 0 : i32
    %c0_i32_0 = arith.constant 0 : i32
    %c0_i32_1 = arith.constant 0 : i32
    return %c0_i32, %c0_i32_0 : i32, i32
  }
  func.func @transform_6(%arg0: i32) -> (i32, i32) {
    %c0_i32 = arith.constant 0 : i32
    %c0_i32_0 = arith.constant 0 : i32
    %c0_i32_1 = arith.constant 0 : i32
    return %c0_i32, %c0_i32_0 : i32, i32
  }
  func.func @transform_7(%arg0: i32) -> (i32, i32) {
    %c0_i32 = arith.constant 0 : i32
    %c0_i32_0 = arith.constant 0 : i32
    %c0_i32_1 = arith.constant 0 : i32
    return %c0_i32, %c0_i32_0 : i32, i32
  }
  func.func @transform_8(%arg0: i32) -> (i32, i32) {
    %c0_i32 = arith.constant 0 : i32
    %c0_i32_0 = arith.constant 0 : i32
    %c0_i32_1 = arith.constant 0 : i32
    return %c0_i32, %c0_i32_0 : i32, i32
  }
  func.func @transform_9(%arg0: i32) -> (i32, i32) {
    %c0_i32 = arith.constant 0 : i32
    %c0_i32_0 = arith.constant 0 : i32
    %c0_i32_1 = arith.constant 0 : i32
    return %c0_i32, %c0_i32_0 : i32, i32
  }
  func.func @transform_10(%arg0: i32) -> (i32, i32) {
    %c0_i32 = arith.constant 0 : i32
    %c0_i32_0 = arith.constant 0 : i32
    %c0_i32_1 = arith.constant 0 : i32
    return %c0_i32, %c0_i32_0 : i32, i32
  }
  func.func @transform_11(%arg0: i32) -> (i32, i32) {
    %c0_i32 = arith.constant 0 : i32
    %c0_i32_0 = arith.constant 0 : i32
    %c0_i32_1 = arith.constant 0 : i32
    return %c0_i32, %c0_i32_0 : i32, i32
  }
  func.func @transform_12(%arg0: i32) -> (i32, i32) {
    %c0_i32 = arith.constant 0 : i32
    %c0_i32_0 = arith.constant 0 : i32
    %c0_i32_1 = arith.constant 0 : i32
    return %c0_i32, %c0_i32_0 : i32, i32
  }
  func.func @transform_13(%arg0: i32) -> (i32, i32) {
    %c0_i32 = arith.constant 0 : i32
    %c0_i32_0 = arith.constant 0 : i32
    %c0_i32_1 = arith.constant 0 : i32
    return %c0_i32, %c0_i32_0 : i32, i32
  }
  func.func @transform_14(%arg0: i32) -> (i32, i32) {
    %c0_i32 = arith.constant 0 : i32
    %c0_i32_0 = arith.constant 0 : i32
    %c0_i32_1 = arith.constant 0 : i32
    return %c0_i32, %c0_i32_0 : i32, i32
  }
  func.func @transform_15(%arg0: i32) -> (i32, i32) {
    %c0_i32 = arith.constant 0 : i32
    %c0_i32_0 = arith.constant 0 : i32
    %c0_i32_1 = arith.constant 0 : i32
    return %c0_i32, %c0_i32_0 : i32, i32
  }
  func.func @transform_16(%arg0: i32) -> (i32, i32, i32) {
    %c0_i32 = arith.constant 0 : i32
    %c0_i32_0 = arith.constant 0 : i32
    %c0_i32_1 = arith.constant 0 : i32
    return %arg0, %c0_i32, %c0_i32_0 : i32, i32, i32
  }
  func.func @transform_17(%arg0: i32) -> (i32, i32, i32) {
    %c0_i32 = arith.constant 0 : i32
    %c0_i32_0 = arith.constant 0 : i32
    %c0_i32_1 = arith.constant 0 : i32
    return %arg0, %c0_i32, %c0_i32_0 : i32, i32, i32
  }
  func.func @transform_18(%arg0: i32) -> (i32, i32) {
    %c0_i32 = arith.constant 0 : i32
    %c0_i32_0 = arith.constant 0 : i32
    return %arg0, %c0_i32 : i32, i32
  }
  func.func @transform_19(%arg0: i32) -> (i32, i32) {
    %c0_i32 = arith.constant 0 : i32
    %c0_i32_0 = arith.constant 0 : i32
    return %arg0, %c0_i32 : i32, i32
  }
}

module attributes {stable_mosaic.version = 11 : i64} {
  func.func @_egcl_stack_kernel(%arg0: i32, %arg1: memref<1x4x32xf32, #tpu.memory_space<vmem>>, %arg2: memref<1x4x3xf32, #tpu.memory_space<vmem>>, %arg3: memref<1x16x5xf32, #tpu.memory_space<vmem>>, %arg4: memref<2x70x32xbf16, #tpu.memory_space<vmem>>, %arg5: memref<2x1x32xf32, #tpu.memory_space<vmem>>, %arg6: memref<2x32x32xbf16, #tpu.memory_space<vmem>>, %arg7: memref<2x1x32xf32, #tpu.memory_space<vmem>>, %arg8: memref<2x32x32xbf16, #tpu.memory_space<vmem>>, %arg9: memref<2x1x32xf32, #tpu.memory_space<vmem>>, %arg10: memref<2x32x1xbf16, #tpu.memory_space<vmem>>, %arg11: memref<2x1x1xf32, #tpu.memory_space<vmem>>, %arg12: memref<2x96x32xbf16, #tpu.memory_space<vmem>>, %arg13: memref<2x1x32xf32, #tpu.memory_space<vmem>>, %arg14: memref<2x32x32xbf16, #tpu.memory_space<vmem>>, %arg15: memref<2x1x32xf32, #tpu.memory_space<vmem>>, %arg16: memref<32x16xbf16, #tpu.memory_space<vmem>>, %arg17: memref<1x16xf32, #tpu.memory_space<vmem>>, %arg18: memref<16x5xbf16, #tpu.memory_space<vmem>>, %arg19: memref<1x5xf32, #tpu.memory_space<vmem>>, %arg20: memref<1x4x5xf32, #tpu.memory_space<vmem>>, %arg21: memref<1x4x3xf32, #tpu.memory_space<vmem>>) attributes {dimension_semantics = [#tpu.dimension_semantics<parallel>], iteration_bounds = array<i64: 2>, scalar_prefetch = 0 : i64, scratch_operands = 0 : i64, tpu.core_type = #tpu.core_type<tc>, window_params = [{transform_indices = @transform_0, window_bounds = array<i64: 1, 4, 32>}, {transform_indices = @transform_1, window_bounds = array<i64: 1, 4, 3>}, {transform_indices = @transform_2, window_bounds = array<i64: 1, 16, 5>}, {pipeline_mode = #tpu.pipeline_mode<synchronous>, transform_indices = @transform_3, window_bounds = array<i64: 2, 70, 32>}, {pipeline_mode = #tpu.pipeline_mode<synchronous>, transform_indices = @transform_4, window_bounds = array<i64: 2, 1, 32>}, {pipeline_mode = #tpu.pipeline_mode<synchronous>, transform_indices = @transform_5, window_bounds = array<i64: 2, 32, 32>}, {pipeline_mode = #tpu.pipeline_mode<synchronous>, transform_indices = @transform_6, window_bounds = array<i64: 2, 1, 32>}, {pipeline_mode = #tpu.pipeline_mode<synchronous>, transform_indices = @transform_7, window_bounds = array<i64: 2, 32, 32>}, {pipeline_mode = #tpu.pipeline_mode<synchronous>, transform_indices = @transform_8, window_bounds = array<i64: 2, 1, 32>}, {pipeline_mode = #tpu.pipeline_mode<synchronous>, transform_indices = @transform_9, window_bounds = array<i64: 2, 32, 1>}, {pipeline_mode = #tpu.pipeline_mode<synchronous>, transform_indices = @transform_10, window_bounds = array<i64: 2, 1, 1>}, {pipeline_mode = #tpu.pipeline_mode<synchronous>, transform_indices = @transform_11, window_bounds = array<i64: 2, 96, 32>}, {pipeline_mode = #tpu.pipeline_mode<synchronous>, transform_indices = @transform_12, window_bounds = array<i64: 2, 1, 32>}, {pipeline_mode = #tpu.pipeline_mode<synchronous>, transform_indices = @transform_13, window_bounds = array<i64: 2, 32, 32>}, {pipeline_mode = #tpu.pipeline_mode<synchronous>, transform_indices = @transform_14, window_bounds = array<i64: 2, 1, 32>}, {pipeline_mode = #tpu.pipeline_mode<synchronous>, transform_indices = @transform_15, window_bounds = array<i64: 32, 16>}, {pipeline_mode = #tpu.pipeline_mode<synchronous>, transform_indices = @transform_16, window_bounds = array<i64: 1, 16>}, {pipeline_mode = #tpu.pipeline_mode<synchronous>, transform_indices = @transform_17, window_bounds = array<i64: 16, 5>}, {pipeline_mode = #tpu.pipeline_mode<synchronous>, transform_indices = @transform_18, window_bounds = array<i64: 1, 5>}, {transform_indices = @transform_19, window_bounds = array<i64: 1, 4, 5>}, {transform_indices = @transform_20, window_bounds = array<i64: 1, 4, 3>}]} {
    %c0 = arith.constant 0 : index
    %c0_0 = arith.constant 0 : index
    %c0_1 = arith.constant 0 : index
    %0 = vector.load %arg1[%c0, %c0_0, %c0_1] : memref<1x4x32xf32, #tpu.memory_space<vmem>>, vector<1x4x32xf32>
    %1 = vector.shape_cast %0 : vector<1x4x32xf32> to vector<4x32xf32>
    %c0_2 = arith.constant 0 : index
    %c0_3 = arith.constant 0 : index
    %c0_4 = arith.constant 0 : index
    %2 = vector.load %arg2[%c0_2, %c0_3, %c0_4] : memref<1x4x3xf32, #tpu.memory_space<vmem>>, vector<1x4x3xf32>
    %c0_5 = arith.constant 0 : index
    %c0_6 = arith.constant 0 : index
    %c0_7 = arith.constant 0 : index
    %3 = vector.load %arg3[%c0_5, %c0_6, %c0_7] : memref<1x16x5xf32, #tpu.memory_space<vmem>>, vector<1x16x5xf32>
    %4 = vector.shape_cast %3 : vector<1x16x5xf32> to vector<16x5xf32>
    %5 = arith.truncf %4 : vector<16x5xf32> to vector<16x5xbf16>
    %6 = vector.shape_cast %2 : vector<1x4x3xf32> to vector<1x4x1x3xf32>
    %7 = vector.shape_cast %2 : vector<1x4x3xf32> to vector<1x1x4x3xf32>
    %8 = vector.broadcast %6 : vector<1x4x1x3xf32> to vector<1x4x4x3xf32>
    %9 = vector.broadcast %7 : vector<1x1x4x3xf32> to vector<1x4x4x3xf32>
    %10 = arith.subf %8, %9 : vector<1x4x4x3xf32>
    %11 = arith.mulf %10, %10 : vector<1x4x4x3xf32>
    %cst = arith.constant dense<0.000000e+00> : vector<1x4x4xf32>
    %12 = vector.multi_reduction <add>, %11, %cst [3] : vector<1x4x4x3xf32> to vector<1x4x4xf32>
    %13 = vector.shape_cast %12 : vector<1x4x4xf32> to vector<1x4x4x1xf32>
    %14 = arith.truncf %13 : vector<1x4x4x1xf32> to vector<1x4x4x1xbf16>
    %15 = arith.extf %14 : vector<1x4x4x1xbf16> to vector<1x4x4x1xf32>
    %c0_8 = arith.constant 0 : index
    %c0_9 = arith.constant 0 : index
    %c0_10 = arith.constant 0 : index
    %16 = vector.load %arg4[%c0_8, %c0_9, %c0_10] : memref<2x70x32xbf16, #tpu.memory_space<vmem>>, vector<1x70x32xbf16>
    %17 = vector.shape_cast %16 : vector<1x70x32xbf16> to vector<70x32xbf16>
    %18 = vector.extract_strided_slice %17 {offsets = [0, 0], sizes = [32, 32], strides = [1, 1]} : vector<70x32xbf16> to vector<32x32xbf16>
    %19 = vector.extract_strided_slice %17 {offsets = [32, 0], sizes = [32, 32], strides = [1, 1]} : vector<70x32xbf16> to vector<32x32xbf16>
    %20 = vector.extract_strided_slice %17 {offsets = [64, 0], sizes = [1, 32], strides = [1, 1]} : vector<70x32xbf16> to vector<1x32xbf16>
    %21 = arith.extf %20 : vector<1x32xbf16> to vector<1x32xf32>
    %22 = vector.extract_strided_slice %17 {offsets = [65, 0], sizes = [5, 32], strides = [1, 1]} : vector<70x32xbf16> to vector<5x32xbf16>
    %23 = arith.truncf %1 : vector<4x32xf32> to vector<4x32xbf16>
    %cst_11 = arith.constant dense<0.000000e+00> : vector<4x32xf32>
    %24 = tpu.matmul %23, %18, %cst_11 {dimension_numbers = #tpu.dot_dimension_numbers<[1], [0], [0], [1], [0, 0, 1, 1], [], []>} : vector<4x32xbf16>, vector<32x32xbf16>, vector<4x32xf32> -> vector<4x32xf32>
    %cst_12 = arith.constant dense<0.000000e+00> : vector<4x32xf32>
    %25 = tpu.matmul %23, %19, %cst_12 {dimension_numbers = #tpu.dot_dimension_numbers<[1], [0], [0], [1], [0, 0, 1, 1], [], []>} : vector<4x32xbf16>, vector<32x32xbf16>, vector<4x32xf32> -> vector<4x32xf32>
    %cst_13 = arith.constant dense<0.000000e+00> : vector<16x32xf32>
    %26 = tpu.matmul %5, %22, %cst_13 {dimension_numbers = #tpu.dot_dimension_numbers<[1], [0], [0], [1], [0, 0, 1, 1], [], []>} : vector<16x5xbf16>, vector<5x32xbf16>, vector<16x32xf32> -> vector<16x32xf32>
    %27 = vector.shape_cast %24 : vector<4x32xf32> to vector<1x4x1x32xf32>
    %28 = vector.shape_cast %25 : vector<4x32xf32> to vector<1x1x4x32xf32>
    %29 = vector.broadcast %27 : vector<1x4x1x32xf32> to vector<1x4x4x32xf32>
    %30 = vector.broadcast %28 : vector<1x1x4x32xf32> to vector<1x4x4x32xf32>
    %31 = arith.addf %29, %30 : vector<1x4x4x32xf32>
    %32 = vector.shape_cast %21 : vector<1x32xf32> to vector<1x1x1x32xf32>
    %33 = vector.broadcast %15 : vector<1x4x4x1xf32> to vector<1x4x4x32xf32>
    %34 = vector.broadcast %32 : vector<1x1x1x32xf32> to vector<1x4x4x32xf32>
    %35 = arith.mulf %33, %34 : vector<1x4x4x32xf32>
    %36 = arith.addf %31, %35 : vector<1x4x4x32xf32>
    %37 = vector.shape_cast %26 : vector<16x32xf32> to vector<1x4x4x32xf32>
    %38 = arith.addf %36, %37 : vector<1x4x4x32xf32>
    %c0_14 = arith.constant 0 : index
    %c0_15 = arith.constant 0 : index
    %c0_16 = arith.constant 0 : index
    %39 = vector.load %arg5[%c0_14, %c0_15, %c0_16] : memref<2x1x32xf32, #tpu.memory_space<vmem>>, vector<1x1x32xf32>
    %40 = vector.shape_cast %39 : vector<1x1x32xf32> to vector<1x32xf32>
    %41 = vector.shape_cast %40 : vector<1x32xf32> to vector<1x1x1x32xf32>
    %42 = vector.broadcast %41 : vector<1x1x1x32xf32> to vector<1x4x4x32xf32>
    %43 = arith.addf %38, %42 : vector<1x4x4x32xf32>
    %44 = arith.negf %43 : vector<1x4x4x32xf32>
    %45 = math.exp %44 : vector<1x4x4x32xf32>
    %cst_17 = arith.constant 1.000000e+00 : f32
    %46 = vector.broadcast %cst_17 : f32 to vector<1x4x4x32xf32>
    %47 = arith.addf %46, %45 : vector<1x4x4x32xf32>
    %48 = arith.divf %46, %47 : vector<1x4x4x32xf32>
    %49 = arith.mulf %43, %48 : vector<1x4x4x32xf32>
    %50 = vector.shape_cast %49 : vector<1x4x4x32xf32> to vector<16x32xf32>
    %c0_18 = arith.constant 0 : index
    %c0_19 = arith.constant 0 : index
    %c0_20 = arith.constant 0 : index
    %51 = vector.load %arg6[%c0_18, %c0_19, %c0_20] : memref<2x32x32xbf16, #tpu.memory_space<vmem>>, vector<1x32x32xbf16>
    %52 = vector.shape_cast %51 : vector<1x32x32xbf16> to vector<32x32xbf16>
    %53 = arith.truncf %50 : vector<16x32xf32> to vector<16x32xbf16>
    %cst_21 = arith.constant dense<0.000000e+00> : vector<16x32xf32>
    %54 = tpu.matmul %53, %52, %cst_21 {dimension_numbers = #tpu.dot_dimension_numbers<[1], [0], [0], [1], [0, 0, 1, 1], [], []>} : vector<16x32xbf16>, vector<32x32xbf16>, vector<16x32xf32> -> vector<16x32xf32>
    %c0_22 = arith.constant 0 : index
    %c0_23 = arith.constant 0 : index
    %c0_24 = arith.constant 0 : index
    %55 = vector.load %arg7[%c0_22, %c0_23, %c0_24] : memref<2x1x32xf32, #tpu.memory_space<vmem>>, vector<1x1x32xf32>
    %56 = vector.shape_cast %55 : vector<1x1x32xf32> to vector<1x32xf32>
    %57 = vector.broadcast %56 : vector<1x32xf32> to vector<16x32xf32>
    %58 = arith.addf %54, %57 : vector<16x32xf32>
    %59 = arith.negf %58 : vector<16x32xf32>
    %60 = math.exp %59 : vector<16x32xf32>
    %cst_25 = arith.constant 1.000000e+00 : f32
    %61 = vector.broadcast %cst_25 : f32 to vector<16x32xf32>
    %62 = arith.addf %61, %60 : vector<16x32xf32>
    %63 = arith.divf %61, %62 : vector<16x32xf32>
    %64 = arith.mulf %58, %63 : vector<16x32xf32>
    %65 = vector.shape_cast %64 : vector<16x32xf32> to vector<1x4x4x32xf32>
    %cst_26 = arith.constant dense<0.000000e+00> : vector<1x4x32xf32>
    %66 = vector.multi_reduction <add>, %65, %cst_26 [2] : vector<1x4x4x32xf32> to vector<1x4x32xf32>
    %67 = vector.shape_cast %66 : vector<1x4x32xf32> to vector<4x32xf32>
    %c0_27 = arith.constant 0 : index
    %c0_28 = arith.constant 0 : index
    %c0_29 = arith.constant 0 : index
    %68 = vector.load %arg12[%c0_27, %c0_28, %c0_29] : memref<2x96x32xbf16, #tpu.memory_space<vmem>>, vector<1x96x32xbf16>
    %69 = vector.shape_cast %68 : vector<1x96x32xbf16> to vector<96x32xbf16>
    %70 = vector.extract_strided_slice %69 {offsets = [0, 0], sizes = [32, 32], strides = [1, 1]} : vector<96x32xbf16> to vector<32x32xbf16>
    %71 = vector.extract_strided_slice %69 {offsets = [32, 0], sizes = [32, 32], strides = [1, 1]} : vector<96x32xbf16> to vector<32x32xbf16>
    %72 = vector.extract_strided_slice %69 {offsets = [64, 0], sizes = [32, 32], strides = [1, 1]} : vector<96x32xbf16> to vector<32x32xbf16>
    %73 = arith.truncf %1 : vector<4x32xf32> to vector<4x32xbf16>
    %cst_30 = arith.constant dense<0.000000e+00> : vector<4x32xf32>
    %74 = tpu.matmul %73, %70, %cst_30 {dimension_numbers = #tpu.dot_dimension_numbers<[1], [0], [0], [1], [0, 0, 1, 1], [], []>} : vector<4x32xbf16>, vector<32x32xbf16>, vector<4x32xf32> -> vector<4x32xf32>
    %75 = arith.truncf %67 : vector<4x32xf32> to vector<4x32xbf16>
    %cst_31 = arith.constant dense<0.000000e+00> : vector<4x32xf32>
    %76 = tpu.matmul %75, %71, %cst_31 {dimension_numbers = #tpu.dot_dimension_numbers<[1], [0], [0], [1], [0, 0, 1, 1], [], []>} : vector<4x32xbf16>, vector<32x32xbf16>, vector<4x32xf32> -> vector<4x32xf32>
    %77 = arith.addf %74, %76 : vector<4x32xf32>
    %78 = arith.truncf %1 : vector<4x32xf32> to vector<4x32xbf16>
    %cst_32 = arith.constant dense<0.000000e+00> : vector<4x32xf32>
    %79 = tpu.matmul %78, %72, %cst_32 {dimension_numbers = #tpu.dot_dimension_numbers<[1], [0], [0], [1], [0, 0, 1, 1], [], []>} : vector<4x32xbf16>, vector<32x32xbf16>, vector<4x32xf32> -> vector<4x32xf32>
    %80 = arith.addf %77, %79 : vector<4x32xf32>
    %c0_33 = arith.constant 0 : index
    %c0_34 = arith.constant 0 : index
    %c0_35 = arith.constant 0 : index
    %81 = vector.load %arg13[%c0_33, %c0_34, %c0_35] : memref<2x1x32xf32, #tpu.memory_space<vmem>>, vector<1x1x32xf32>
    %82 = vector.shape_cast %81 : vector<1x1x32xf32> to vector<1x32xf32>
    %83 = vector.broadcast %82 : vector<1x32xf32> to vector<4x32xf32>
    %84 = arith.addf %80, %83 : vector<4x32xf32>
    %85 = arith.negf %84 : vector<4x32xf32>
    %86 = math.exp %85 : vector<4x32xf32>
    %cst_36 = arith.constant 1.000000e+00 : f32
    %87 = vector.broadcast %cst_36 : f32 to vector<4x32xf32>
    %88 = arith.addf %87, %86 : vector<4x32xf32>
    %89 = arith.divf %87, %88 : vector<4x32xf32>
    %90 = arith.mulf %84, %89 : vector<4x32xf32>
    %c0_37 = arith.constant 0 : index
    %c0_38 = arith.constant 0 : index
    %c0_39 = arith.constant 0 : index
    %91 = vector.load %arg14[%c0_37, %c0_38, %c0_39] : memref<2x32x32xbf16, #tpu.memory_space<vmem>>, vector<1x32x32xbf16>
    %92 = vector.shape_cast %91 : vector<1x32x32xbf16> to vector<32x32xbf16>
    %93 = arith.truncf %90 : vector<4x32xf32> to vector<4x32xbf16>
    %cst_40 = arith.constant dense<0.000000e+00> : vector<4x32xf32>
    %94 = tpu.matmul %93, %92, %cst_40 {dimension_numbers = #tpu.dot_dimension_numbers<[1], [0], [0], [1], [0, 0, 1, 1], [], []>} : vector<4x32xbf16>, vector<32x32xbf16>, vector<4x32xf32> -> vector<4x32xf32>
    %c0_41 = arith.constant 0 : index
    %c0_42 = arith.constant 0 : index
    %c0_43 = arith.constant 0 : index
    %95 = vector.load %arg15[%c0_41, %c0_42, %c0_43] : memref<2x1x32xf32, #tpu.memory_space<vmem>>, vector<1x1x32xf32>
    %96 = vector.shape_cast %95 : vector<1x1x32xf32> to vector<1x32xf32>
    %97 = vector.broadcast %96 : vector<1x32xf32> to vector<4x32xf32>
    %98 = arith.addf %94, %97 : vector<4x32xf32>
    %c1 = arith.constant 1 : index
    %c0_44 = arith.constant 0 : index
    %c0_45 = arith.constant 0 : index
    %99 = vector.load %arg4[%c1, %c0_44, %c0_45] : memref<2x70x32xbf16, #tpu.memory_space<vmem>>, vector<1x70x32xbf16>
    %100 = vector.shape_cast %99 : vector<1x70x32xbf16> to vector<70x32xbf16>
    %101 = vector.extract_strided_slice %100 {offsets = [0, 0], sizes = [32, 32], strides = [1, 1]} : vector<70x32xbf16> to vector<32x32xbf16>
    %102 = vector.extract_strided_slice %100 {offsets = [32, 0], sizes = [32, 32], strides = [1, 1]} : vector<70x32xbf16> to vector<32x32xbf16>
    %103 = vector.extract_strided_slice %100 {offsets = [64, 0], sizes = [1, 32], strides = [1, 1]} : vector<70x32xbf16> to vector<1x32xbf16>
    %104 = arith.extf %103 : vector<1x32xbf16> to vector<1x32xf32>
    %105 = vector.extract_strided_slice %100 {offsets = [65, 0], sizes = [5, 32], strides = [1, 1]} : vector<70x32xbf16> to vector<5x32xbf16>
    %106 = arith.truncf %98 : vector<4x32xf32> to vector<4x32xbf16>
    %cst_46 = arith.constant dense<0.000000e+00> : vector<4x32xf32>
    %107 = tpu.matmul %106, %101, %cst_46 {dimension_numbers = #tpu.dot_dimension_numbers<[1], [0], [0], [1], [0, 0, 1, 1], [], []>} : vector<4x32xbf16>, vector<32x32xbf16>, vector<4x32xf32> -> vector<4x32xf32>
    %cst_47 = arith.constant dense<0.000000e+00> : vector<4x32xf32>
    %108 = tpu.matmul %106, %102, %cst_47 {dimension_numbers = #tpu.dot_dimension_numbers<[1], [0], [0], [1], [0, 0, 1, 1], [], []>} : vector<4x32xbf16>, vector<32x32xbf16>, vector<4x32xf32> -> vector<4x32xf32>
    %cst_48 = arith.constant dense<0.000000e+00> : vector<16x32xf32>
    %109 = tpu.matmul %5, %105, %cst_48 {dimension_numbers = #tpu.dot_dimension_numbers<[1], [0], [0], [1], [0, 0, 1, 1], [], []>} : vector<16x5xbf16>, vector<5x32xbf16>, vector<16x32xf32> -> vector<16x32xf32>
    %110 = vector.shape_cast %107 : vector<4x32xf32> to vector<1x4x1x32xf32>
    %111 = vector.shape_cast %108 : vector<4x32xf32> to vector<1x1x4x32xf32>
    %112 = vector.broadcast %110 : vector<1x4x1x32xf32> to vector<1x4x4x32xf32>
    %113 = vector.broadcast %111 : vector<1x1x4x32xf32> to vector<1x4x4x32xf32>
    %114 = arith.addf %112, %113 : vector<1x4x4x32xf32>
    %115 = vector.shape_cast %104 : vector<1x32xf32> to vector<1x1x1x32xf32>
    %116 = vector.broadcast %15 : vector<1x4x4x1xf32> to vector<1x4x4x32xf32>
    %117 = vector.broadcast %115 : vector<1x1x1x32xf32> to vector<1x4x4x32xf32>
    %118 = arith.mulf %116, %117 : vector<1x4x4x32xf32>
    %119 = arith.addf %114, %118 : vector<1x4x4x32xf32>
    %120 = vector.shape_cast %109 : vector<16x32xf32> to vector<1x4x4x32xf32>
    %121 = arith.addf %119, %120 : vector<1x4x4x32xf32>
    %c1_49 = arith.constant 1 : index
    %c0_50 = arith.constant 0 : index
    %c0_51 = arith.constant 0 : index
    %122 = vector.load %arg5[%c1_49, %c0_50, %c0_51] : memref<2x1x32xf32, #tpu.memory_space<vmem>>, vector<1x1x32xf32>
    %123 = vector.shape_cast %122 : vector<1x1x32xf32> to vector<1x32xf32>
    %124 = vector.shape_cast %123 : vector<1x32xf32> to vector<1x1x1x32xf32>
    %125 = vector.broadcast %124 : vector<1x1x1x32xf32> to vector<1x4x4x32xf32>
    %126 = arith.addf %121, %125 : vector<1x4x4x32xf32>
    %127 = arith.negf %126 : vector<1x4x4x32xf32>
    %128 = math.exp %127 : vector<1x4x4x32xf32>
    %cst_52 = arith.constant 1.000000e+00 : f32
    %129 = vector.broadcast %cst_52 : f32 to vector<1x4x4x32xf32>
    %130 = arith.addf %129, %128 : vector<1x4x4x32xf32>
    %131 = arith.divf %129, %130 : vector<1x4x4x32xf32>
    %132 = arith.mulf %126, %131 : vector<1x4x4x32xf32>
    %133 = vector.shape_cast %132 : vector<1x4x4x32xf32> to vector<16x32xf32>
    %c1_53 = arith.constant 1 : index
    %c0_54 = arith.constant 0 : index
    %c0_55 = arith.constant 0 : index
    %134 = vector.load %arg6[%c1_53, %c0_54, %c0_55] : memref<2x32x32xbf16, #tpu.memory_space<vmem>>, vector<1x32x32xbf16>
    %135 = vector.shape_cast %134 : vector<1x32x32xbf16> to vector<32x32xbf16>
    %136 = arith.truncf %133 : vector<16x32xf32> to vector<16x32xbf16>
    %cst_56 = arith.constant dense<0.000000e+00> : vector<16x32xf32>
    %137 = tpu.matmul %136, %135, %cst_56 {dimension_numbers = #tpu.dot_dimension_numbers<[1], [0], [0], [1], [0, 0, 1, 1], [], []>} : vector<16x32xbf16>, vector<32x32xbf16>, vector<16x32xf32> -> vector<16x32xf32>
    %c1_57 = arith.constant 1 : index
    %c0_58 = arith.constant 0 : index
    %c0_59 = arith.constant 0 : index
    %138 = vector.load %arg7[%c1_57, %c0_58, %c0_59] : memref<2x1x32xf32, #tpu.memory_space<vmem>>, vector<1x1x32xf32>
    %139 = vector.shape_cast %138 : vector<1x1x32xf32> to vector<1x32xf32>
    %140 = vector.broadcast %139 : vector<1x32xf32> to vector<16x32xf32>
    %141 = arith.addf %137, %140 : vector<16x32xf32>
    %142 = arith.negf %141 : vector<16x32xf32>
    %143 = math.exp %142 : vector<16x32xf32>
    %cst_60 = arith.constant 1.000000e+00 : f32
    %144 = vector.broadcast %cst_60 : f32 to vector<16x32xf32>
    %145 = arith.addf %144, %143 : vector<16x32xf32>
    %146 = arith.divf %144, %145 : vector<16x32xf32>
    %147 = arith.mulf %141, %146 : vector<16x32xf32>
    %c1_61 = arith.constant 1 : index
    %c0_62 = arith.constant 0 : index
    %c0_63 = arith.constant 0 : index
    %148 = vector.load %arg8[%c1_61, %c0_62, %c0_63] : memref<2x32x32xbf16, #tpu.memory_space<vmem>>, vector<1x32x32xbf16>
    %149 = vector.shape_cast %148 : vector<1x32x32xbf16> to vector<32x32xbf16>
    %150 = arith.truncf %147 : vector<16x32xf32> to vector<16x32xbf16>
    %cst_64 = arith.constant dense<0.000000e+00> : vector<16x32xf32>
    %151 = tpu.matmul %150, %149, %cst_64 {dimension_numbers = #tpu.dot_dimension_numbers<[1], [0], [0], [1], [0, 0, 1, 1], [], []>} : vector<16x32xbf16>, vector<32x32xbf16>, vector<16x32xf32> -> vector<16x32xf32>
    %c1_65 = arith.constant 1 : index
    %c0_66 = arith.constant 0 : index
    %c0_67 = arith.constant 0 : index
    %152 = vector.load %arg9[%c1_65, %c0_66, %c0_67] : memref<2x1x32xf32, #tpu.memory_space<vmem>>, vector<1x1x32xf32>
    %153 = vector.shape_cast %152 : vector<1x1x32xf32> to vector<1x32xf32>
    %154 = vector.broadcast %153 : vector<1x32xf32> to vector<16x32xf32>
    %155 = arith.addf %151, %154 : vector<16x32xf32>
    %156 = arith.negf %155 : vector<16x32xf32>
    %157 = math.exp %156 : vector<16x32xf32>
    %cst_68 = arith.constant 1.000000e+00 : f32
    %158 = vector.broadcast %cst_68 : f32 to vector<16x32xf32>
    %159 = arith.addf %158, %157 : vector<16x32xf32>
    %160 = arith.divf %158, %159 : vector<16x32xf32>
    %161 = arith.mulf %155, %160 : vector<16x32xf32>
    %c1_69 = arith.constant 1 : index
    %c0_70 = arith.constant 0 : index
    %c0_71 = arith.constant 0 : index
    %162 = vector.load %arg10[%c1_69, %c0_70, %c0_71] : memref<2x32x1xbf16, #tpu.memory_space<vmem>>, vector<1x32x1xbf16>
    %163 = vector.shape_cast %162 : vector<1x32x1xbf16> to vector<32x1xbf16>
    %164 = arith.truncf %161 : vector<16x32xf32> to vector<16x32xbf16>
    %cst_72 = arith.constant dense<0.000000e+00> : vector<16x1xf32>
    %165 = tpu.matmul %164, %163, %cst_72 {dimension_numbers = #tpu.dot_dimension_numbers<[1], [0], [0], [1], [0, 0, 1, 1], [], []>} : vector<16x32xbf16>, vector<32x1xbf16>, vector<16x1xf32> -> vector<16x1xf32>
    %c1_73 = arith.constant 1 : index
    %c0_74 = arith.constant 0 : index
    %c0_75 = arith.constant 0 : index
    %166 = vector.load %arg11[%c1_73, %c0_74, %c0_75] : memref<2x1x1xf32, #tpu.memory_space<vmem>>, vector<1x1x1xf32>
    %167 = vector.shape_cast %166 : vector<1x1x1xf32> to vector<1x1xf32>
    %168 = vector.broadcast %167 : vector<1x1xf32> to vector<16x1xf32>
    %169 = arith.addf %165, %168 : vector<16x1xf32>
    %170 = vector.shape_cast %10 : vector<1x4x4x3xf32> to vector<16x3xf32>
    %171 = vector.broadcast %169 : vector<16x1xf32> to vector<16x3xf32>
    %172 = arith.mulf %170, %171 : vector<16x3xf32>
    %173 = vector.shape_cast %172 : vector<16x3xf32> to vector<1x4x4x3xf32>
    %cst_76 = arith.constant dense<0.000000e+00> : vector<1x4x3xf32>
    %174 = vector.multi_reduction <add>, %173, %cst_76 [2] : vector<1x4x4x3xf32> to vector<1x4x3xf32>
    %cst_77 = arith.constant 1.000000e+00 : f32
    %175 = vector.broadcast %cst_77 : f32 to vector<1x4x3xf32>
    %176 = arith.mulf %174, %175 : vector<1x4x3xf32>
    %177 = arith.addf %2, %176 : vector<1x4x3xf32>
    %c0_78 = arith.constant 0 : index
    %c0_79 = arith.constant 0 : index
    %c0_80 = arith.constant 0 : index
    %178 = vector.load %arg21[%c0_78, %c0_79, %c0_80] : memref<1x4x3xf32, #tpu.memory_space<vmem>>, vector<1x4x3xf32>
    tpu.vector_store %arg21[%c0_78, %c0_79, %c0_80], %177 {strides = array<i32>} : memref<1x4x3xf32, #tpu.memory_space<vmem>>, vector<1x4x3xf32>,
    %179 = vector.shape_cast %147 : vector<16x32xf32> to vector<1x4x4x32xf32>
    %cst_81 = arith.constant dense<0.000000e+00> : vector<1x4x32xf32>
    %180 = vector.multi_reduction <add>, %179, %cst_81 [2] : vector<1x4x4x32xf32> to vector<1x4x32xf32>
    %181 = vector.shape_cast %180 : vector<1x4x32xf32> to vector<4x32xf32>
    %c1_82 = arith.constant 1 : index
    %c0_83 = arith.constant 0 : index
    %c0_84 = arith.constant 0 : index
    %182 = vector.load %arg12[%c1_82, %c0_83, %c0_84] : memref<2x96x32xbf16, #tpu.memory_space<vmem>>, vector<1x96x32xbf16>
    %183 = vector.shape_cast %182 : vector<1x96x32xbf16> to vector<96x32xbf16>
    %184 = vector.extract_strided_slice %183 {offsets = [0, 0], sizes = [32, 32], strides = [1, 1]} : vector<96x32xbf16> to vector<32x32xbf16>
    %185 = vector.extract_strided_slice %183 {offsets = [32, 0], sizes = [32, 32], strides = [1, 1]} : vector<96x32xbf16> to vector<32x32xbf16>
    %186 = vector.extract_strided_slice %183 {offsets = [64, 0], sizes = [32, 32], strides = [1, 1]} : vector<96x32xbf16> to vector<32x32xbf16>
    %187 = arith.truncf %98 : vector<4x32xf32> to vector<4x32xbf16>
    %cst_85 = arith.constant dense<0.000000e+00> : vector<4x32xf32>
    %188 = tpu.matmul %187, %184, %cst_85 {dimension_numbers = #tpu.dot_dimension_numbers<[1], [0], [0], [1], [0, 0, 1, 1], [], []>} : vector<4x32xbf16>, vector<32x32xbf16>, vector<4x32xf32> -> vector<4x32xf32>
    %189 = arith.truncf %181 : vector<4x32xf32> to vector<4x32xbf16>
    %cst_86 = arith.constant dense<0.000000e+00> : vector<4x32xf32>
    %190 = tpu.matmul %189, %185, %cst_86 {dimension_numbers = #tpu.dot_dimension_numbers<[1], [0], [0], [1], [0, 0, 1, 1], [], []>} : vector<4x32xbf16>, vector<32x32xbf16>, vector<4x32xf32> -> vector<4x32xf32>
    %191 = arith.addf %188, %190 : vector<4x32xf32>
    %192 = arith.truncf %98 : vector<4x32xf32> to vector<4x32xbf16>
    %cst_87 = arith.constant dense<0.000000e+00> : vector<4x32xf32>
    %193 = tpu.matmul %192, %186, %cst_87 {dimension_numbers = #tpu.dot_dimension_numbers<[1], [0], [0], [1], [0, 0, 1, 1], [], []>} : vector<4x32xbf16>, vector<32x32xbf16>, vector<4x32xf32> -> vector<4x32xf32>
    %194 = arith.addf %191, %193 : vector<4x32xf32>
    %c1_88 = arith.constant 1 : index
    %c0_89 = arith.constant 0 : index
    %c0_90 = arith.constant 0 : index
    %195 = vector.load %arg13[%c1_88, %c0_89, %c0_90] : memref<2x1x32xf32, #tpu.memory_space<vmem>>, vector<1x1x32xf32>
    %196 = vector.shape_cast %195 : vector<1x1x32xf32> to vector<1x32xf32>
    %197 = vector.broadcast %196 : vector<1x32xf32> to vector<4x32xf32>
    %198 = arith.addf %194, %197 : vector<4x32xf32>
    %199 = arith.negf %198 : vector<4x32xf32>
    %200 = math.exp %199 : vector<4x32xf32>
    %cst_91 = arith.constant 1.000000e+00 : f32
    %201 = vector.broadcast %cst_91 : f32 to vector<4x32xf32>
    %202 = arith.addf %201, %200 : vector<4x32xf32>
    %203 = arith.divf %201, %202 : vector<4x32xf32>
    %204 = arith.mulf %198, %203 : vector<4x32xf32>
    %c1_92 = arith.constant 1 : index
    %c0_93 = arith.constant 0 : index
    %c0_94 = arith.constant 0 : index
    %205 = vector.load %arg14[%c1_92, %c0_93, %c0_94] : memref<2x32x32xbf16, #tpu.memory_space<vmem>>, vector<1x32x32xbf16>
    %206 = vector.shape_cast %205 : vector<1x32x32xbf16> to vector<32x32xbf16>
    %207 = arith.truncf %204 : vector<4x32xf32> to vector<4x32xbf16>
    %cst_95 = arith.constant dense<0.000000e+00> : vector<4x32xf32>
    %208 = tpu.matmul %207, %206, %cst_95 {dimension_numbers = #tpu.dot_dimension_numbers<[1], [0], [0], [1], [0, 0, 1, 1], [], []>} : vector<4x32xbf16>, vector<32x32xbf16>, vector<4x32xf32> -> vector<4x32xf32>
    %c1_96 = arith.constant 1 : index
    %c0_97 = arith.constant 0 : index
    %c0_98 = arith.constant 0 : index
    %209 = vector.load %arg15[%c1_96, %c0_97, %c0_98] : memref<2x1x32xf32, #tpu.memory_space<vmem>>, vector<1x1x32xf32>
    %210 = vector.shape_cast %209 : vector<1x1x32xf32> to vector<1x32xf32>
    %211 = vector.broadcast %210 : vector<1x32xf32> to vector<4x32xf32>
    %212 = arith.addf %208, %211 : vector<4x32xf32>
    %c0_99 = arith.constant 0 : index
    %c0_100 = arith.constant 0 : index
    %213 = vector.load %arg16[%c0_99, %c0_100] : memref<32x16xbf16, #tpu.memory_space<vmem>>, vector<32x16xbf16>
    %214 = arith.truncf %212 : vector<4x32xf32> to vector<4x32xbf16>
    %cst_101 = arith.constant dense<0.000000e+00> : vector<4x16xf32>
    %215 = tpu.matmul %214, %213, %cst_101 {dimension_numbers = #tpu.dot_dimension_numbers<[1], [0], [0], [1], [0, 0, 1, 1], [], []>} : vector<4x32xbf16>, vector<32x16xbf16>, vector<4x16xf32> -> vector<4x16xf32>
    %c0_102 = arith.constant 0 : index
    %c0_103 = arith.constant 0 : index
    %216 = vector.load %arg17[%c0_102, %c0_103] : memref<1x16xf32, #tpu.memory_space<vmem>>, vector<1x16xf32>
    %217 = vector.broadcast %216 : vector<1x16xf32> to vector<4x16xf32>
    %218 = arith.addf %215, %217 : vector<4x16xf32>
    %219 = arith.negf %218 : vector<4x16xf32>
    %220 = math.exp %219 : vector<4x16xf32>
    %cst_104 = arith.constant 1.000000e+00 : f32
    %221 = vector.broadcast %cst_104 : f32 to vector<4x16xf32>
    %222 = arith.addf %221, %220 : vector<4x16xf32>
    %223 = arith.divf %221, %222 : vector<4x16xf32>
    %224 = arith.mulf %218, %223 : vector<4x16xf32>
    %c0_105 = arith.constant 0 : index
    %c0_106 = arith.constant 0 : index
    %225 = vector.load %arg18[%c0_105, %c0_106] : memref<16x5xbf16, #tpu.memory_space<vmem>>, vector<16x5xbf16>
    %226 = arith.truncf %224 : vector<4x16xf32> to vector<4x16xbf16>
    %cst_107 = arith.constant dense<0.000000e+00> : vector<4x5xf32>
    %227 = tpu.matmul %226, %225, %cst_107 {dimension_numbers = #tpu.dot_dimension_numbers<[1], [0], [0], [1], [0, 0, 1, 1], [], []>} : vector<4x16xbf16>, vector<16x5xbf16>, vector<4x5xf32> -> vector<4x5xf32>
    %c0_108 = arith.constant 0 : index
    %c0_109 = arith.constant 0 : index
    %228 = vector.load %arg19[%c0_108, %c0_109] : memref<1x5xf32, #tpu.memory_space<vmem>>, vector<1x5xf32>
    %229 = vector.broadcast %228 : vector<1x5xf32> to vector<4x5xf32>
    %230 = arith.addf %227, %229 : vector<4x5xf32>
    %231 = vector.shape_cast %230 : vector<4x5xf32> to vector<1x4x5xf32>
    %c0_110 = arith.constant 0 : index
    %c0_111 = arith.constant 0 : index
    %c0_112 = arith.constant 0 : index
    %232 = vector.load %arg20[%c0_110, %c0_111, %c0_112] : memref<1x4x5xf32, #tpu.memory_space<vmem>>, vector<1x4x5xf32>
    tpu.vector_store %arg20[%c0_110, %c0_111, %c0_112], %231 {strides = array<i32>} : memref<1x4x5xf32, #tpu.memory_space<vmem>>, vector<1x4x5xf32>,
    return
  }
  func.func @transform_0(%arg0: i32) -> (i32, i32, i32) {
    %c0_i32 = arith.constant 0 : i32
    %c0_i32_0 = arith.constant 0 : i32
    %c0_i32_1 = arith.constant 0 : i32
    return %arg0, %c0_i32, %c0_i32_0 : i32, i32, i32
  }
  func.func @transform_1(%arg0: i32) -> (i32, i32, i32) {
    %c0_i32 = arith.constant 0 : i32
    %c0_i32_0 = arith.constant 0 : i32
    %c0_i32_1 = arith.constant 0 : i32
    return %arg0, %c0_i32, %c0_i32_0 : i32, i32, i32
  }
  func.func @transform_2(%arg0: i32) -> (i32, i32, i32) {
    %c0_i32 = arith.constant 0 : i32
    %c0_i32_0 = arith.constant 0 : i32
    %c0_i32_1 = arith.constant 0 : i32
    return %arg0, %c0_i32, %c0_i32_0 : i32, i32, i32
  }
  func.func @transform_3(%arg0: i32) -> (i32, i32, i32) {
    %c0_i32 = arith.constant 0 : i32
    %c0_i32_0 = arith.constant 0 : i32
    %c0_i32_1 = arith.constant 0 : i32
    %c0_i32_2 = arith.constant 0 : i32
    return %c0_i32, %c0_i32_0, %c0_i32_1 : i32, i32, i32
  }
  func.func @transform_4(%arg0: i32) -> (i32, i32, i32) {
    %c0_i32 = arith.constant 0 : i32
    %c0_i32_0 = arith.constant 0 : i32
    %c0_i32_1 = arith.constant 0 : i32
    %c0_i32_2 = arith.constant 0 : i32
    return %c0_i32, %c0_i32_0, %c0_i32_1 : i32, i32, i32
  }
  func.func @transform_5(%arg0: i32) -> (i32, i32, i32) {
    %c0_i32 = arith.constant 0 : i32
    %c0_i32_0 = arith.constant 0 : i32
    %c0_i32_1 = arith.constant 0 : i32
    %c0_i32_2 = arith.constant 0 : i32
    return %c0_i32, %c0_i32_0, %c0_i32_1 : i32, i32, i32
  }
  func.func @transform_6(%arg0: i32) -> (i32, i32, i32) {
    %c0_i32 = arith.constant 0 : i32
    %c0_i32_0 = arith.constant 0 : i32
    %c0_i32_1 = arith.constant 0 : i32
    %c0_i32_2 = arith.constant 0 : i32
    return %c0_i32, %c0_i32_0, %c0_i32_1 : i32, i32, i32
  }
  func.func @transform_7(%arg0: i32) -> (i32, i32, i32) {
    %c0_i32 = arith.constant 0 : i32
    %c0_i32_0 = arith.constant 0 : i32
    %c0_i32_1 = arith.constant 0 : i32
    %c0_i32_2 = arith.constant 0 : i32
    return %c0_i32, %c0_i32_0, %c0_i32_1 : i32, i32, i32
  }
  func.func @transform_8(%arg0: i32) -> (i32, i32, i32) {
    %c0_i32 = arith.constant 0 : i32
    %c0_i32_0 = arith.constant 0 : i32
    %c0_i32_1 = arith.constant 0 : i32
    %c0_i32_2 = arith.constant 0 : i32
    return %c0_i32, %c0_i32_0, %c0_i32_1 : i32, i32, i32
  }
  func.func @transform_9(%arg0: i32) -> (i32, i32, i32) {
    %c0_i32 = arith.constant 0 : i32
    %c0_i32_0 = arith.constant 0 : i32
    %c0_i32_1 = arith.constant 0 : i32
    %c0_i32_2 = arith.constant 0 : i32
    return %c0_i32, %c0_i32_0, %c0_i32_1 : i32, i32, i32
  }
  func.func @transform_10(%arg0: i32) -> (i32, i32, i32) {
    %c0_i32 = arith.constant 0 : i32
    %c0_i32_0 = arith.constant 0 : i32
    %c0_i32_1 = arith.constant 0 : i32
    %c0_i32_2 = arith.constant 0 : i32
    return %c0_i32, %c0_i32_0, %c0_i32_1 : i32, i32, i32
  }
  func.func @transform_11(%arg0: i32) -> (i32, i32, i32) {
    %c0_i32 = arith.constant 0 : i32
    %c0_i32_0 = arith.constant 0 : i32
    %c0_i32_1 = arith.constant 0 : i32
    %c0_i32_2 = arith.constant 0 : i32
    return %c0_i32, %c0_i32_0, %c0_i32_1 : i32, i32, i32
  }
  func.func @transform_12(%arg0: i32) -> (i32, i32, i32) {
    %c0_i32 = arith.constant 0 : i32
    %c0_i32_0 = arith.constant 0 : i32
    %c0_i32_1 = arith.constant 0 : i32
    %c0_i32_2 = arith.constant 0 : i32
    return %c0_i32, %c0_i32_0, %c0_i32_1 : i32, i32, i32
  }
  func.func @transform_13(%arg0: i32) -> (i32, i32, i32) {
    %c0_i32 = arith.constant 0 : i32
    %c0_i32_0 = arith.constant 0 : i32
    %c0_i32_1 = arith.constant 0 : i32
    %c0_i32_2 = arith.constant 0 : i32
    return %c0_i32, %c0_i32_0, %c0_i32_1 : i32, i32, i32
  }
  func.func @transform_14(%arg0: i32) -> (i32, i32, i32) {
    %c0_i32 = arith.constant 0 : i32
    %c0_i32_0 = arith.constant 0 : i32
    %c0_i32_1 = arith.constant 0 : i32
    %c0_i32_2 = arith.constant 0 : i32
    return %c0_i32, %c0_i32_0, %c0_i32_1 : i32, i32, i32
  }
  func.func @transform_15(%arg0: i32) -> (i32, i32) {
    %c0_i32 = arith.constant 0 : i32
    %c0_i32_0 = arith.constant 0 : i32
    %c0_i32_1 = arith.constant 0 : i32
    return %c0_i32, %c0_i32_0 : i32, i32
  }
  func.func @transform_16(%arg0: i32) -> (i32, i32) {
    %c0_i32 = arith.constant 0 : i32
    %c0_i32_0 = arith.constant 0 : i32
    %c0_i32_1 = arith.constant 0 : i32
    return %c0_i32, %c0_i32_0 : i32, i32
  }
  func.func @transform_17(%arg0: i32) -> (i32, i32) {
    %c0_i32 = arith.constant 0 : i32
    %c0_i32_0 = arith.constant 0 : i32
    %c0_i32_1 = arith.constant 0 : i32
    return %c0_i32, %c0_i32_0 : i32, i32
  }
  func.func @transform_18(%arg0: i32) -> (i32, i32) {
    %c0_i32 = arith.constant 0 : i32
    %c0_i32_0 = arith.constant 0 : i32
    %c0_i32_1 = arith.constant 0 : i32
    return %c0_i32, %c0_i32_0 : i32, i32
  }
  func.func @transform_19(%arg0: i32) -> (i32, i32, i32) {
    %c0_i32 = arith.constant 0 : i32
    %c0_i32_0 = arith.constant 0 : i32
    %c0_i32_1 = arith.constant 0 : i32
    return %arg0, %c0_i32, %c0_i32_0 : i32, i32, i32
  }
  func.func @transform_20(%arg0: i32) -> (i32, i32, i32) {
    %c0_i32 = arith.constant 0 : i32
    %c0_i32_0 = arith.constant 0 : i32
    %c0_i32_1 = arith.constant 0 : i32
    return %arg0, %c0_i32, %c0_i32_0 : i32, i32, i32
  }
}

</mosaic_0001>

<llo_original>
// kernel: decoder_forward.2
$region0: #{decoder_forward.2}
  #allocation0 [shape = 'u32[]', space=smem, size = 0x4, offset = 0x4, fixed_abs, tag = 'smem constant byte address 0x4 - core index']
  #allocation1 [shape = 'u32[144,128]{1,0:T(1,128)}', space=vmem, size = 0x12000, scoped, tag = 'internal scratch']
  %s0 = inlined_call_operand.vmem [shape: f32[2,4,15], index: 0, kind: input, shape index: {}]
  %s1 = inlined_call_operand.vmem [shape: f32[2,60], index: 1, kind: input, shape index: {}]
  %s2 = inlined_call_operand.vmem [shape: bf16[15,32], index: 2, kind: input, shape index: {}]
  %s3 = inlined_call_operand.vmem [shape: f32[1,32], index: 3, kind: input, shape index: {}]
  %s4 = inlined_call_operand.vmem [shape: bf16[15,2], index: 4, kind: input, shape index: {}]
  %s5 = inlined_call_operand.vmem [shape: f32[1,2], index: 5, kind: input, shape index: {}]
  %s6 = inlined_call_operand.vmem [shape: bf16[2,3], index: 6, kind: input, shape index: {}]
  %s7 = inlined_call_operand.vmem [shape: f32[1,3], index: 7, kind: input, shape index: {}]
  %s8 = inlined_call_operand.vmem [shape: bf16[60,8], index: 8, kind: input, shape index: {}]
  %s9 = inlined_call_operand.vmem [shape: f32[1,8], index: 9, kind: input, shape index: {}]
  %s10 = inlined_call_operand.vmem [shape: bf16[8,80], index: 10, kind: input, shape index: {}]
  %s11 = inlined_call_operand.vmem [shape: f32[1,80], index: 11, kind: input, shape index: {}]
  %s12 = inlined_call_operand.vmem [shape: bf16[60,8], index: 12, kind: input, shape index: {}]
  %s13 = inlined_call_operand.vmem [shape: f32[1,8], index: 13, kind: input, shape index: {}]
  %s14 = inlined_call_operand.vmem [shape: bf16[8,4], index: 14, kind: input, shape index: {}]
  %s15 = inlined_call_operand.vmem [shape: f32[1,4], index: 15, kind: input, shape index: {}]
  %s16 = inlined_call_operand.vmem [shape: f32[2,4,32], index: 16, kind: output, shape index: {0}]
  %s17 = inlined_call_operand.vmem [shape: f32[2,4,3], index: 17, kind: output, shape index: {1}]
  %s18 = inlined_call_operand.vmem [shape: f32[2,80], index: 18, kind: output, shape index: {2}]
  %s19 = inlined_call_operand.hbm [shape: f32[2,4], index: 19, kind: output, shape index: {3}]
  %20 = xla_tuple %s16, %s17, %s18, %s19
  %s21 = sld [smem:[#allocation0]]
  $region98: #{decoder_forward.2} parent=0
    _
  %s23 = ssub.s32 1, %s21
  %s24 = scalar_select 0, %s23, %s21
  $region1: #{decoder_forward.2} parent=0
    #allocation2 [shape = 'u8[1024]{0}', space=vmem, size = 0x400, scoped, tag = 'output window, operand 3, single buffered']
    #allocation3 [shape = 's32[1]{0}', space=sflag, size = 0x4, scoped, tag = 'scoped memory for decoder_forward.2']
    %25 = vsyncpa [#allocation3], 0
    // Predicated region
    $region2: #{decoder_forward.2} parent=1 // pred_check
      _
    $region3: #{decoder_forward.2} parent=1 // pred_check_branch
      %27 = sbr.rel (0) target = $region5
    $region4: #{decoder_forward.2} parent=1 // pred_region
      _
    $region5: #{decoder_forward.2} parent=1 // pred_fallthru
      _
    // Predicated region
    $region6: #{decoder_forward.2} parent=1 // pred_check
      _
    $region7: #{decoder_forward.2} parent=1 // pred_check_branch
      %29 = sbr.rel (0) target = $region9
    $region8: #{decoder_forward.2} parent=1 // pred_region
      _
    $region9: #{decoder_forward.2} parent=1 // pred_fallthru
      _
    // Predicated region
    $region10: #{decoder_forward.2} parent=1 // pred_check
      _
    $region11: #{decoder_forward.2} parent=1 // pred_check_branch
      %31 = sbr.rel (0) target = $region13
    $region12: #{decoder_forward.2} parent=1 // pred_region
      _
    $region13: #{decoder_forward.2} parent=1 // pred_fallthru
      _
    // Predicated region
    $region14: #{decoder_forward.2} parent=1 // pred_check
      _
    $region15: #{decoder_forward.2} parent=1 // pred_check_branch
      %33 = sbr.rel (0) target = $region17
    $region16: #{decoder_forward.2} parent=1 // pred_region
      _
    $region17: #{decoder_forward.2} parent=1 // pred_fallthru
      _
    // Predicated region
    $region18: #{decoder_forward.2} parent=1 // pred_check
      _
    $region19: #{decoder_forward.2} parent=1 // pred_check_branch
      %35 = sbr.rel (0) target = $region21
    $region20: #{decoder_forward.2} parent=1 // pred_region
      _
    $region21: #{decoder_forward.2} parent=1 // pred_fallthru
      _
    // Predicated region
    $region22: #{decoder_forward.2} parent=1 // pred_check
      _
    $region23: #{decoder_forward.2} parent=1 // pred_check_branch
      %37 = sbr.rel (0) target = $region25
    $region24: #{decoder_forward.2} parent=1 // pred_region
      _
    $region25: #{decoder_forward.2} parent=1 // pred_fallthru
      _
    // Predicated region
    $region26: #{decoder_forward.2} parent=1 // pred_check
      _
    $region27: #{decoder_forward.2} parent=1 // pred_check_branch
      %39 = sbr.rel (0) target = $region29
    $region28: #{decoder_forward.2} parent=1 // pred_region
      _
    $region29: #{decoder_forward.2} parent=1 // pred_fallthru
      _
    // Predicated region
    $region30: #{decoder_forward.2} parent=1 // pred_check
      _
    $region31: #{decoder_forward.2} parent=1 // pred_check_branch
      %41 = sbr.rel (0) target = $region33
    $region32: #{decoder_forward.2} parent=1 // pred_region
      _
    $region33: #{decoder_forward.2} parent=1 // pred_fallthru
      _
    // Predicated region
    $region34: #{decoder_forward.2} parent=1 // pred_check
      _
    $region35: #{decoder_forward.2} parent=1 // pred_check_branch
      %43 = sbr.rel (0) target = $region37
    $region36: #{decoder_forward.2} parent=1 // pred_region
      _
    $region37: #{decoder_forward.2} parent=1 // pred_fallthru
      _
    // Predicated region
    $region38: #{decoder_forward.2} parent=1 // pred_check
      _
    $region39: #{decoder_forward.2} parent=1 // pred_check_branch
      %45 = sbr.rel (0) target = $region41
    $region40: #{decoder_forward.2} parent=1 // pred_region
      _
    $region41: #{decoder_forward.2} parent=1 // pred_fallthru
      _
    // Predicated region
    $region42: #{decoder_forward.2} parent=1 // pred_check
      _
    $region43: #{decoder_forward.2} parent=1 // pred_check_branch
      %47 = sbr.rel (0) target = $region45
    $region44: #{decoder_forward.2} parent=1 // pred_region
      _
    $region45: #{decoder_forward.2} parent=1 // pred_fallthru
      _
    // Predicated region
    $region46: #{decoder_forward.2} parent=1 // pred_check
      _
    $region47: #{decoder_forward.2} parent=1 // pred_check_branch
      %49 = sbr.rel (0) target = $region49
    $region48: #{decoder_forward.2} parent=1 // pred_region
      _
    $region49: #{decoder_forward.2} parent=1 // pred_fallthru
      _
    // Predicated region
    $region50: #{decoder_forward.2} parent=1 // pred_check
      _
    $region51: #{decoder_forward.2} parent=1 // pred_check_branch
      %51 = sbr.rel (0) target = $region53
    $region52: #{decoder_forward.2} parent=1 // pred_region
      _
    $region53: #{decoder_forward.2} parent=1 // pred_fallthru
      _
    // Predicated region
    $region54: #{decoder_forward.2} parent=1 // pred_check
      _
    $region55: #{decoder_forward.2} parent=1 // pred_check_branch
      %53 = sbr.rel (0) target = $region57
    $region56: #{decoder_forward.2} parent=1 // pred_region
      _
    $region57: #{decoder_forward.2} parent=1 // pred_fallthru
      _
    // Predicated region
    $region58: #{decoder_forward.2} parent=1 // pred_check
      _
    $region59: #{decoder_forward.2} parent=1 // pred_check_branch
      %55 = sbr.rel (0) target = $region61
    $region60: #{decoder_forward.2} parent=1 // pred_region
      _
    $region61: #{decoder_forward.2} parent=1 // pred_fallthru
      _
    // Predicated region
    $region62: #{decoder_forward.2} parent=1 // pred_check
      _
    $region63: #{decoder_forward.2} parent=1 // pred_check_branch
      %57 = sbr.rel (0) target = $region65
    $region64: #{decoder_forward.2} parent=1 // pred_region
      _
    $region65: #{decoder_forward.2} parent=1 // pred_fallthru
      _
    %v59 = vld [vmem:[%s0] sm:$0xf]
    %v60 = vld [vmem:[%s0 + $0x4] sm:$0xf]
    %v61 = vld [vmem:[%s1] sm:$0x3]
    %v62 = vld [vmem:[%s2] sm:$0xf]
    %v63 = vld [vmem:[%s2 + $0x4] sm:$0xf]
    %v66 = vcombine.low %v59, %v60
    %v68 = vpack.c.bf16 %v66, %v66
    %v69 = vld [vmem:[%s3] sm:$0x1]
    %v71 = vlaneseq
    %v72 = vshrl.u32 %v71, 7
    %v73 = vsub.s32 0, %v72
    %v74 = vrot.slane %v69, %v73
    %v78 = vunpack.c.l.b16 %v62
    %v79 = vunpack.c.l.b16 %v63
    %v80 = vpack.c.b16 %v79, %v78
    %vm81 = vcmask 121856
    %v83 = vsel %vm81, %v68, 0
    %vm85 = vcmask 1046528
    %vm86 = vcmask 1047552
    %v87 = vsel %vm85, 4294967295, 65535
    %v88 = vsel %vm86, %v87, 0
    %v90 = vand.u32 %v80, %v88
    %92 = vmatprep.subr.bf16.mxu0 0
    %93 = vmatpush1.bf16.msra.mxu0 %v90
    %94 = vmatprep.subr.bf16.mxu0 0
    %95 = vmatpush1.bf16.msra.mxu0 0
    %96 = vmatprep.subr.bf16.mxu0 0
    %97 = vmatpush1.bf16.msra.mxu0 0
    %98 = vmatprep.subr.bf16.mxu0 0
    %99 = vmatpush1.bf16.msra.mxu0 0
    %100 = vmatprep.subr.bf16.mxu0 0
    %101 = vmatpush1.bf16.msra.mxu0 0
    %102 = vmatprep.subr.bf16.mxu0 0
    %103 = vmatpush1.bf16.msra.mxu0 0
    %104 = vmatprep.subr.bf16.mxu0 0
    %105 = vmatpush1.bf16.msra.mxu0 0
    %106 = vmatprep.subr.bf16.mxu0 0
    %107 = vmatpush1.bf16.msra.mxu0 0
    %108 = vmatprep.subr.bf16.mxu0 0
    %109 = vmatpush1.bf16.msra.mxu0 0
    %110 = vmatprep.subr.bf16.mxu0 0
    %111 = vmatpush1.bf16.msra.mxu0 0
    %112 = vmatprep.subr.bf16.mxu0 0
    %113 = vmatpush1.bf16.msra.mxu0 0
    %114 = vmatprep.subr.bf16.mxu0 0
    %115 = vmatpush1.bf16.msra.mxu0 0
    %116 = vmatprep.subr.bf16.mxu0 0
    %117 = vmatpush1.bf16.msra.mxu0 0
    %118 = vmatprep.subr.bf16.mxu0 0
    %119 = vmatpush1.bf16.msra.mxu0 0
    %120 = vmatprep.subr.bf16.mxu0 0
    %121 = vmatpush1.bf16.msra.mxu0 0
    %122 = vmatprep.subr.bf16.mxu0 0
    %123 = vmatpush1.bf16.msra.mxu0 0
    %124 = vmatprep.mubr.bf16.mxu0 0
    %125 = vmatmul.mubr.bf16.gmra.mrb[0].mxu0 %v83
    %v126 = vpop.f32.mrb[0].mxu0
    %v127 = vadd.f32 %v74, %v126
    %v128 = vpop.f32.mrb[0].mxu0
    %v129 = vpop.f32.mrb[0].mxu0
    %v130 = vpop.f32.mrb[0].mxu0
    %131 = vdwg.mxu0
    %v133 = vcombine.high %v127, %v127
    %vm135 = vcmask 257024
    %136 = vst.msk [vmem:[%s16] sm:$0xf] %vm135, %v127
    %137 = vst.msk [vmem:[%s16 + $0x4] sm:$0xf] %vm135, %v133
    %v138 = vld [vmem:[%s4] sm:$0xf]
    %v139 = vld [vmem:[%s4 + $0x4] sm:$0xf]
    %v140 = vld [vmem:[%s5] sm:$0x1]
    %v142 = vlaneseq
    %v143 = vshrl.u32 %v142, 7
    %v144 = vsub.s32 0, %v143
    %v145 = vrot.slane %v140, %v144
    %v149 = vunpack.c.l.b16 %v138
    %v150 = vunpack.c.l.b16 %v139
    %v151 = vpack.c.b16 %v150, %v149
    %v153 = vand.u32 %v151, %v88
    %155 = vmatprep.subr.bf16.mxu0 0
    %156 = vmatpush1.bf16.msra.mxu0 %v153
    %157 = vmatprep.subr.bf16.mxu0 0
    %158 = vmatpush1.bf16.msra.mxu0 0
    %159 = vmatprep.subr.bf16.mxu0 0
    %160 = vmatpush1.bf16.msra.mxu0 0
    %161 = vmatprep.subr.bf16.mxu0 0
    %162 = vmatpush1.bf16.msra.mxu0 0
    %163 = vmatprep.subr.bf16.mxu0 0
    %164 = vmatpush1.bf16.msra.mxu0 0
    %165 = vmatprep.subr.bf16.mxu0 0
    %166 = vmatpush1.bf16.msra.mxu0 0
    %167 = vmatprep.subr.bf16.mxu0 0
    %168 = vmatpush1.bf16.msra.mxu0 0
    %169 = vmatprep.subr.bf16.mxu0 0
    %170 = vmatpush1.bf16.msra.mxu0 0
    %171 = vmatprep.subr.bf16.mxu0 0
    %172 = vmatpush1.bf16.msra.mxu0 0
    %173 = vmatprep.subr.bf16.mxu0 0
    %174 = vmatpush1.bf16.msra.mxu0 0
    %175 = vmatprep.subr.bf16.mxu0 0
    %176 = vmatpush1.bf16.msra.mxu0 0
    %177 = vmatprep.subr.bf16.mxu0 0
    %178 = vmatpush1.bf16.msra.mxu0 0
    %179 = vmatprep.subr.bf16.mxu0 0
    %180 = vmatpush1.bf16.msra.mxu0 0
    %181 = vmatprep.subr.bf16.mxu0 0
    %182 = vmatpush1.bf16.msra.mxu0 0
    %183 = vmatprep.subr.bf16.mxu0 0
    %184 = vmatpush1.bf16.msra.mxu0 0
    %185 = vmatprep.subr.bf16.mxu0 0
    %186 = vmatpush1.bf16.msra.mxu0 0
    %187 = vmatprep.mubr.bf16.mxu0 0
    %188 = vmatmul.mubr.bf16.gmra.mrb[0].mxu0 %v83
    %v189 = vpop.f32.mrb[0].mxu0
    %v190 = vadd.f32 %v145, %v189
    %v191 = vpop.f32.mrb[0].mxu0
    %v192 = vpop.f32.mrb[0].mxu0
    %v193 = vpop.f32.mrb[0].mxu0
    %194 = vdwg.mxu0
    %v195 = vxor.u32 %v190, 2147483648
    %v196 = vmul.f32 %v195, 1.442695
    %v197 = vpow.pop %v196
    %v198 = vadd.f32 %v197, 1.0
    %v199 = vrcp.pop %v198
    %v200 = vmul.f32 1.0, %v199
    %v201 = vmul.f32 %v190, %v200
    %v202 = vld [vmem:[%s6] sm:$0x1]
    %v203 = vpack.c.bf16 %v201, %v201
    %v204 = vld [vmem:[%s7] sm:$0x1]
    %v206 = vlaneseq
    %v207 = vshrl.u32 %v206, 7
    %v208 = vsub.s32 0, %v207
    %v209 = vrot.slane %v204, %v208
    %vm211 = vcmask 15360
    %v213 = vsel %vm211, %v203, 0
    %vm215 = vcmask 1040384
    %v217 = vsel %vm215, %v202, 0
    %219 = vmatprep.subr.bf16.mxu0 0
    %220 = vmatpush1.bf16.msra.mxu0 %v217
    %221 = vmatprep.subr.bf16.mxu0 0
    %222 = vmatpush1.bf16.msra.mxu0 0
    %223 = vmatprep.subr.bf16.mxu0 0
    %224 = vmatpush1.bf16.msra.mxu0 0
    %225 = vmatprep.subr.bf16.mxu0 0
    %226 = vmatpush1.bf16.msra.mxu0 0
    %227 = vmatprep.subr.bf16.mxu0 0
    %228 = vmatpush1.bf16.msra.mxu0 0
    %229 = vmatprep.subr.bf16.mxu0 0
    %230 = vmatpush1.bf16.msra.mxu0 0
    %231 = vmatprep.subr.bf16.mxu0 0
    %232 = vmatpush1.bf16.msra.mxu0 0
    %233 = vmatprep.subr.bf16.mxu0 0
    %234 = vmatpush1.bf16.msra.mxu0 0
    %235 = vmatprep.subr.bf16.mxu0 0
    %236 = vmatpush1.bf16.msra.mxu0 0
    %237 = vmatprep.subr.bf16.mxu0 0
    %238 = vmatpush1.bf16.msra.mxu0 0
    %239 = vmatprep.subr.bf16.mxu0 0
    %240 = vmatpush1.bf16.msra.mxu0 0
    %241 = vmatprep.subr.bf16.mxu0 0
    %242 = vmatpush1.bf16.msra.mxu0 0
    %243 = vmatprep.subr.bf16.mxu0 0
    %244 = vmatpush1.bf16.msra.mxu0 0
    %245 = vmatprep.subr.bf16.mxu0 0
    %246 = vmatpush1.bf16.msra.mxu0 0
    %247 = vmatprep.subr.bf16.mxu0 0
    %248 = vmatpush1.bf16.msra.mxu0 0
    %249 = vmatprep.subr.bf16.mxu0 0
    %250 = vmatpush1.bf16.msra.mxu0 0
    %251 = vmatprep.mubr.bf16.mxu0 0
    %252 = vmatmul.mubr.bf16.gmra.mrb[0].mxu0 %v213
    %v253 = vpop.f32.mrb[0].mxu0
    %v254 = vadd.f32 %v209, %v253
    %v255 = vpop.f32.mrb[0].mxu0
    %v256 = vpop.f32.mrb[0].mxu0
    %v257 = vpop.f32.mrb[0].mxu0
    %258 = vdwg.mxu0
    %v260 = vcombine.high %v254, %v254
    %vm262 = vcmask 19456
    %263 = vst.msk [vmem:[%s17] sm:$0xf] %vm262, %v254
    %264 = vst.msk [vmem:[%s17 + $0x4] sm:$0xf] %vm262, %v260
    %v265 = vld [vmem:[%s8] sm:$0xf]
    %v266 = vld [vmem:[%s8 + $0x4] sm:$0xf]
    %v267 = vld [vmem:[%s8 + $0x8] sm:$0xf]
    %v268 = vld [vmem:[%s8 + $0xc] sm:$0xf]
    %v269 = vld [vmem:[%s8 + $0x10] sm:$0xf]
    %v270 = vld [vmem:[%s8 + $0x14] sm:$0xf]
    %v271 = vld [vmem:[%s8 + $0x18] sm:$0xf]
    %v272 = vld [vmem:[%s8 + $0x1c] sm:$0x3]
    %v273 = vpack.c.bf16 %v61, %v61
    %v274 = vld [vmem:[%s9] sm:$0x1]
    %v276 = vlaneseq
    %v277 = vshrl.u32 %v276, 7
    %v278 = vsub.s32 0, %v277
    %v279 = vrot.slane %v274, %v278
    %v289 = vunpack.c.l.b16 %v265
    %v290 = vunpack.c.l.b16 %v266
    %v291 = vunpack.c.l.b16 %v267
    %v292 = vunpack.c.l.b16 %v268
    %v293 = vunpack.c.l.b16 %v269
    %v294 = vunpack.c.l.b16 %v270
    %v295 = vunpack.c.l.b16 %v271
    %v296 = vunpack.c.l.b16 %v272
    %v297 = vpack.c.b16 %v290, %v289
    %v298 = vpack.c.b16 %v292, %v291
    %v299 = vpack.c.b16 %v294, %v293
    %v300 = vpack.c.b16 %v296, %v295
    %vm304 = vcmask 490496
    %v306 = vsel %vm304, %v273, 0
    %vm308 = vcmask 1045504
    %v310 = vsel %vm308, %v300, 0
    %312 = vmatprep.subr.bf16.mxu0 0
    %313 = vmatpush1.bf16.msra.mxu0 %v297
    %314 = vmatprep.subr.bf16.mxu0 0
    %315 = vmatpush1.bf16.msra.mxu0 %v298
    %316 = vmatprep.subr.bf16.mxu0 0
    %317 = vmatpush1.bf16.msra.mxu0 %v299
    %318 = vmatprep.subr.bf16.mxu0 0
    %319 = vmatpush1.bf16.msra.mxu0 %v310
    %320 = vmatprep.subr.bf16.mxu0 0
    %321 = vmatpush1.bf16.msra.mxu0 0
    %322 = vmatprep.subr.bf16.mxu0 0
    %323 = vmatpush1.bf16.msra.mxu0 0
    %324 = vmatprep.subr.bf16.mxu0 0
    %325 = vmatpush1.bf16.msra.mxu0 0
    %326 = vmatprep.subr.bf16.mxu0 0
    %327 = vmatpush1.bf16.msra.mxu0 0
    %328 = vmatprep.subr.bf16.mxu0 0
    %329 = vmatpush1.bf16.msra.mxu0 0
    %330 = vmatprep.subr.bf16.mxu0 0
    %331 = vmatpush1.bf16.msra.mxu0 0
    %332 = vmatprep.subr.bf16.mxu0 0
    %333 = vmatpush1.bf16.msra.mxu0 0
    %334 = vmatprep.subr.bf16.mxu0 0
    %335 = vmatpush1.bf16.msra.mxu0 0
    %336 = vmatprep.subr.bf16.mxu0 0
    %337 = vmatpush1.bf16.msra.mxu0 0
    %338 = vmatprep.subr.bf16.mxu0 0
    %339 = vmatpush1.bf16.msra.mxu0 0
    %340 = vmatprep.subr.bf16.mxu0 0
    %341 = vmatpush1.bf16.msra.mxu0 0
    %342 = vmatprep.subr.bf16.mxu0 0
    %343 = vmatpush1.bf16.msra.mxu0 0
    %344 = vmatprep.mubr.bf16.mxu0 0
    %345 = vmatmul.mubr.bf16.gmra.mrb[0].mxu0 %v306
    %v346 = vpop.f32.mrb[0].mxu0
    %v347 = vadd.f32 %v279, %v346
    %v348 = vpop.f32.mrb[0].mxu0
    %v349 = vpop.f32.mrb[0].mxu0
    %v350 = vpop.f32.mrb[0].mxu0
    %351 = vdwg.mxu0
    %v352 = vxor.u32 %v347, 2147483648
    %v353 = vmul.f32 %v352, 1.442695
    %v354 = vpow.pop %v353
    %v355 = vadd.f32 %v354, 1.0
    %v356 = vrcp.pop %v355
    %v357 = vmul.f32 1.0, %v356
    %v358 = vmul.f32 %v347, %v357
    %v359 = vld [vmem:[%s10] sm:$0xf]
    %v360 = vpack.c.bf16 %v358, %v358
    %v361 = vld [vmem:[%s11] sm:$0x1]
    %v363 = vlaneseq
    %v364 = vshrl.u32 %v363, 7
    %v365 = vsub.s32 0, %v364
    %v366 = vrot.slane %v361, %v365
    %vm368 = vcmask 64512
    %v370 = vsel %vm368, %v360, 0
    %vm372 = vcmask 1043456
    %v374 = vsel %vm372, %v359, 0
    %376 = vmatprep.subr.bf16.mxu0 0
    %377 = vmatpush1.bf16.msra.mxu0 %v374
    %378 = vmatprep.subr.bf16.mxu0 0
    %379 = vmatpush1.bf16.msra.mxu0 0
    %380 = vmatprep.subr.bf16.mxu0 0
    %381 = vmatpush1.bf16.msra.mxu0 0
    %382 = vmatprep.subr.bf16.mxu0 0
    %383 = vmatpush1.bf16.msra.mxu0 0
    %384 = vmatprep.subr.bf16.mxu0 0
    %385 = vmatpush1.bf16.msra.mxu0 0
    %386 = vmatprep.subr.bf16.mxu0 0
    %387 = vmatpush1.bf16.msra.mxu0 0
    %388 = vmatprep.subr.bf16.mxu0 0
    %389 = vmatpush1.bf16.msra.mxu0 0
    %390 = vmatprep.subr.bf16.mxu0 0
    %391 = vmatpush1.bf16.msra.mxu0 0
    %392 = vmatprep.subr.bf16.mxu0 0
    %393 = vmatpush1.bf16.msra.mxu0 0
    %394 = vmatprep.subr.bf16.mxu0 0
    %395 = vmatpush1.bf16.msra.mxu0 0
    %396 = vmatprep.subr.bf16.mxu0 0
    %397 = vmatpush1.bf16.msra.mxu0 0
    %398 = vmatprep.subr.bf16.mxu0 0
    %399 = vmatpush1.bf16.msra.mxu0 0
    %400 = vmatprep.subr.bf16.mxu0 0
    %401 = vmatpush1.bf16.msra.mxu0 0
    %402 = vmatprep.subr.bf16.mxu0 0
    %403 = vmatpush1.bf16.msra.mxu0 0
    %404 = vmatprep.subr.bf16.mxu0 0
    %405 = vmatpush1.bf16.msra.mxu0 0
    %406 = vmatprep.subr.bf16.mxu0 0
    %407 = vmatpush1.bf16.msra.mxu0 0
    %408 = vmatprep.mubr.bf16.mxu0 0
    %409 = vmatmul.mubr.bf16.gmra.mrb[0].mxu0 %v370
    %v410 = vpop.f32.mrb[0].mxu0
    %v411 = vadd.f32 %v366, %v410
    %v412 = vpop.f32.mrb[0].mxu0
    %v413 = vpop.f32.mrb[0].mxu0
    %v414 = vpop.f32.mrb[0].mxu0
    %415 = vdwg.mxu0
    %vm416 = vcmask 648192
    %417 = vst.msk [vmem:[%s18] sm:$0x3] %vm416, %v411
    %v418 = vld [vmem:[%s12] sm:$0xf]
    %v419 = vld [vmem:[%s12 + $0x4] sm:$0xf]
    %v420 = vld [vmem:[%s12 + $0x8] sm:$0xf]
    %v421 = vld [vmem:[%s12 + $0xc] sm:$0xf]
    %v422 = vld [vmem:[%s12 + $0x10] sm:$0xf]
    %v423 = vld [vmem:[%s12 + $0x14] sm:$0xf]
    %v424 = vld [vmem:[%s12 + $0x18] sm:$0xf]
    %v425 = vld [vmem:[%s12 + $0x1c] sm:$0x3]
    %v426 = vld [vmem:[%s13] sm:$0x1]
    %v428 = vlaneseq
    %v429 = vshrl.u32 %v428, 7
    %v430 = vsub.s32 0, %v429
    %v431 = vrot.slane %v426, %v430
    %v441 = vunpack.c.l.b16 %v418
    %v442 = vunpack.c.l.b16 %v419
    %v443 = vunpack.c.l.b16 %v420
    %v444 = vunpack.c.l.b16 %v421
    %v445 = vunpack.c.l.b16 %v422
    %v446 = vunpack.c.l.b16 %v423
    %v447 = vunpack.c.l.b16 %v424
    %v448 = vunpack.c.l.b16 %v425
    %v449 = vpack.c.b16 %v442, %v441
    %v450 = vpack.c.b16 %v444, %v443
    %v451 = vpack.c.b16 %v446, %v445
    %v452 = vpack.c.b16 %v448, %v447
    %v457 = vsel %vm308, %v452, 0
    %459 = vmatprep.subr.bf16.mxu0 0
    %460 = vmatpush1.bf16.msra.mxu0 %v449
    %461 = vmatprep.subr.bf16.mxu0 0
    %462 = vmatpush1.bf16.msra.mxu0 %v450
    %463 = vmatprep.subr.bf16.mxu0 0
    %464 = vmatpush1.bf16.msra.mxu0 %v451
    %465 = vmatprep.subr.bf16.mxu0 0
    %466 = vmatpush1.bf16.msra.mxu0 %v457
    %467 = vmatprep.subr.bf16.mxu0 0
    %468 = vmatpush1.bf16.msra.mxu0 0
    %469 = vmatprep.subr.bf16.mxu0 0
    %470 = vmatpush1.bf16.msra.mxu0 0
    %471 = vmatprep.subr.bf16.mxu0 0
    %472 = vmatpush1.bf16.msra.mxu0 0
    %473 = vmatprep.subr.bf16.mxu0 0
    %474 = vmatpush1.bf16.msra.mxu0 0
    %475 = vmatprep.subr.bf16.mxu0 0
    %476 = vmatpush1.bf16.msra.mxu0 0
    %477 = vmatprep.subr.bf16.mxu0 0
    %478 = vmatpush1.bf16.msra.mxu0 0
    %479 = vmatprep.subr.bf16.mxu0 0
    %480 = vmatpush1.bf16.msra.mxu0 0
    %481 = vmatprep.subr.bf16.mxu0 0
    %482 = vmatpush1.bf16.msra.mxu0 0
    %483 = vmatprep.subr.bf16.mxu0 0
    %484 = vmatpush1.bf16.msra.mxu0 0
    %485 = vmatprep.subr.bf16.mxu0 0
    %486 = vmatpush1.bf16.msra.mxu0 0
    %487 = vmatprep.subr.bf16.mxu0 0
    %488 = vmatpush1.bf16.msra.mxu0 0
    %489 = vmatprep.subr.bf16.mxu0 0
    %490 = vmatpush1.bf16.msra.mxu0 0
    %491 = vmatprep.mubr.bf16.mxu0 0
    %492 = vmatmul.mubr.bf16.gmra.mrb[0].mxu0 %v306
    %v493 = vpop.f32.mrb[0].mxu0
    %v494 = vadd.f32 %v431, %v493
    %v495 = vpop.f32.mrb[0].mxu0
    %v496 = vpop.f32.mrb[0].mxu0
    %v497 = vpop.f32.mrb[0].mxu0
    %498 = vdwg.mxu0
    %v499 = vxor.u32 %v494, 2147483648
    %v500 = vmul.f32 %v499, 1.442695
    %v501 = vpow.pop %v500
    %v502 = vadd.f32 %v501, 1.0
    %v503 = vrcp.pop %v502
    %v504 = vmul.f32 1.0, %v503
    %v505 = vmul.f32 %v494, %v504
    %v506 = vld [vmem:[%s14] sm:$0xf]
    %v507 = vpack.c.bf16 %v505, %v505
    %v508 = vld [vmem:[%s15] sm:$0x1]
    %v510 = vlaneseq
    %v511 = vshrl.u32 %v510, 7
    %v512 = vsub.s32 0, %v511
    %v513 = vrot.slane %v508, %v512
    %v516 = vsel %vm368, %v507, 0
    %v519 = vsel %vm372, %v506, 0
    %521 = vmatprep.subr.bf16.mxu0 0
    %522 = vmatpush1.bf16.msra.mxu0 %v519
    %523 = vmatprep.subr.bf16.mxu0 0
    %524 = vmatpush1.bf16.msra.mxu0 0
    %525 = vmatprep.subr.bf16.mxu0 0
    %526 = vmatpush1.bf16.msra.mxu0 0
    %527 = vmatprep.subr.bf16.mxu0 0
    %528 = vmatpush1.bf16.msra.mxu0 0
    %529 = vmatprep.subr.bf16.mxu0 0
    %530 = vmatpush1.bf16.msra.mxu0 0
    %531 = vmatprep.subr.bf16.mxu0 0
    %532 = vmatpush1.bf16.msra.mxu0 0
    %533 = vmatprep.subr.bf16.mxu0 0
    %534 = vmatpush1.bf16.msra.mxu0 0
    %535 = vmatprep.subr.bf16.mxu0 0
    %536 = vmatpush1.bf16.msra.mxu0 0
    %537 = vmatprep.subr.bf16.mxu0 0
    %538 = vmatpush1.bf16.msra.mxu0 0
    %539 = vmatprep.subr.bf16.mxu0 0
    %540 = vmatpush1.bf16.msra.mxu0 0
    %541 = vmatprep.subr.bf16.mxu0 0
    %542 = vmatpush1.bf16.msra.mxu0 0
    %543 = vmatprep.subr.bf16.mxu0 0
    %544 = vmatpush1.bf16.msra.mxu0 0
    %545 = vmatprep.subr.bf16.mxu0 0
    %546 = vmatpush1.bf16.msra.mxu0 0
    %547 = vmatprep.subr.bf16.mxu0 0
    %548 = vmatpush1.bf16.msra.mxu0 0
    %549 = vmatprep.subr.bf16.mxu0 0
    %550 = vmatpush1.bf16.msra.mxu0 0
    %551 = vmatprep.subr.bf16.mxu0 0
    %552 = vmatpush1.bf16.msra.mxu0 0
    %553 = vmatprep.mubr.bf16.mxu0 0
    %554 = vmatmul.mubr.bf16.gmra.mrb[0].mxu0 %v516
    %v555 = vpop.f32.mrb[0].mxu0
    %v556 = vadd.f32 %v513, %v555
    %v557 = vpop.f32.mrb[0].mxu0
    %v558 = vpop.f32.mrb[0].mxu0
    %v559 = vpop.f32.mrb[0].mxu0
    %560 = vdwg.mxu0
    %vm561 = vcmask 25600
    %562 = vst.msk [vmem:[#allocation2] sm:$0x3] %vm561, %v556
    // Predicated region
    $region66: #{decoder_forward.2} parent=1 // pred_check
      _
    $region67: #{decoder_forward.2} parent=1 // pred_check_branch
      %564 = sbr.rel (0) target = $region69
    $region68: #{decoder_forward.2} parent=1 // pred_region
      _
    $region69: #{decoder_forward.2} parent=1 // pred_fallthru
      _
    // Predicated region
    $region70: #{decoder_forward.2} parent=1 // pred_check
      _
    $region71: #{decoder_forward.2} parent=1 // pred_check_branch
      %566 = sbr.rel (0) target = $region73
    $region72: #{decoder_forward.2} parent=1 // pred_region
      _
    $region73: #{decoder_forward.2} parent=1 // pred_fallthru
      _
    // Predicated region
    $region74: #{decoder_forward.2} parent=1 // pred_check
      _
    $region75: #{decoder_forward.2} parent=1 // pred_check_branch
      %568 = sbr.rel (0) target = $region77
    $region76: #{decoder_forward.2} parent=1 // pred_region
      _
    $region77: #{decoder_forward.2} parent=1 // pred_fallthru
      _
    // Predicated region
    $region78: #{decoder_forward.2} parent=1 // pred_check
      _
    $region79: #{decoder_forward.2} parent=1 // pred_check_branch
      %570 = sbr.rel (0) target = $region81
    $region80: #{decoder_forward.2} parent=1 // pred_region
      %s572 = ssub.s32 32, 32
      %573 = vsyncadd [#allocation3], %s572
      %s575 = sshll.u32 [#allocation2], 4
      %s576 = int_to_ptr.vmem [resolvable:$true] %s575
      %578 = dma.vmem_to_hbm [thread:$0]  %s576, 32, %s19, [#allocation3]
    $region81: #{decoder_forward.2} parent=1 // pred_fallthru
      _
    // Predicated region
    $region82: #{decoder_forward.2} parent=1 // pred_check
      _
    $region83: #{decoder_forward.2} parent=1 // pred_check_branch
      %580 = sbr.rel (0) target = $region85
    $region84: #{decoder_forward.2} parent=1 // pred_region
      _
    $region85: #{decoder_forward.2} parent=1 // pred_fallthru
      _
    // Predicated region
    $region86: #{decoder_forward.2} parent=1 // pred_check
      _
    $region87: #{decoder_forward.2} parent=1 // pred_check_branch
      %582 = sbr.rel (0) target = $region89
    $region88: #{decoder_forward.2} parent=1 // pred_region
      _
    $region89: #{decoder_forward.2} parent=1 // pred_fallthru
      _
    // Predicated region
    $region90: #{decoder_forward.2} parent=1 // pred_check
      _
    $region91: #{decoder_forward.2} parent=1 // pred_check_branch
      %584 = sbr.rel (0) target = $region93
    $region92: #{decoder_forward.2} parent=1 // pred_region
      _
    $region93: #{decoder_forward.2} parent=1 // pred_fallthru
      _
    // Predicated region
    $region94: #{decoder_forward.2} parent=1 // pred_check
      _
    $region95: #{decoder_forward.2} parent=1 // pred_check_branch
      %586 = sbr.rel (0) target = $region97
    $region96: #{decoder_forward.2} parent=1 // pred_region
      %587 = dma.done [#allocation3], 32
    $region97: #{decoder_forward.2} parent=1 // pred_fallthru
      _
    %588 = vsyncpa [#allocation3], 1

// kernel: decoder_forward.3
$region0: #{decoder_forward.3}
  #allocation0 [shape = 'u32[]', space=smem, size = 0x4, offset = 0x4, fixed_abs, tag = 'smem constant byte address 0x4 - core index']
  #allocation1 [shape = 'u32[144,128]{1,0:T(1,128)}', space=vmem, size = 0x12000, scoped, tag = 'internal scratch']
  %s0 = inlined_call_operand.vmem [shape: f32[2,4,32], index: 0, kind: input, shape index: {}]
  %s1 = inlined_call_operand.vmem [shape: f32[2,4,3], index: 1, kind: input, shape index: {}]
  %s2 = inlined_call_operand.vmem [shape: f32[2,16,5], index: 2, kind: input, shape index: {}]
  %s3 = inlined_call_operand.vmem [shape: bf16[2,70,32], index: 3, kind: input, shape index: {}]
  %s4 = inlined_call_operand.vmem [shape: f32[2,1,32], index: 4, kind: input, shape index: {}]
  %s5 = inlined_call_operand.vmem [shape: bf16[2,32,32], index: 5, kind: input, shape index: {}]
  %s6 = inlined_call_operand.vmem [shape: f32[2,1,32], index: 6, kind: input, shape index: {}]
  %s7 = inlined_call_operand.vmem [shape: bf16[2,32,32], index: 7, kind: input, shape index: {}]
  %s8 = inlined_call_operand.vmem [shape: f32[2,1,32], index: 8, kind: input, shape index: {}]
  %s9 = inlined_call_operand.vmem [shape: bf16[2,32,1], index: 9, kind: input, shape index: {}]
  %s10 = inlined_call_operand.vmem [shape: f32[2,1,1], index: 10, kind: input, shape index: {}]
  %s11 = inlined_call_operand.vmem [shape: bf16[2,96,32], index: 11, kind: input, shape index: {}]
  %s12 = inlined_call_operand.vmem [shape: f32[2,1,32], index: 12, kind: input, shape index: {}]
  %s13 = inlined_call_operand.vmem [shape: bf16[2,32,32], index: 13, kind: input, shape index: {}]
  %s14 = inlined_call_operand.vmem [shape: f32[2,1,32], index: 14, kind: input, shape index: {}]
  %s15 = inlined_call_operand.vmem [shape: bf16[32,16], index: 15, kind: input, shape index: {}]
  %s16 = inlined_call_operand.vmem [shape: f32[1,16], index: 16, kind: input, shape index: {}]
  %s17 = inlined_call_operand.vmem [shape: bf16[16,5], index: 17, kind: input, shape index: {}]
  %s18 = inlined_call_operand.vmem [shape: f32[1,5], index: 18, kind: input, shape index: {}]
  %s19 = inlined_call_operand.hbm [shape: f32[2,4,5], index: 19, kind: output, shape index: {0}]
  %s20 = inlined_call_operand.vmem [shape: f32[2,4,3], index: 20, kind: output, shape index: {1}]
  %21 = xla_tuple %s19, %s20
  %s22 = sld [smem:[#allocation0]]
  $region117: #{decoder_forward.3} parent=0
    _
  %s24 = ssub.s32 1, %s22
  %s25 = scalar_select 0, %s24, %s22
  $region1: #{decoder_forward.3} parent=0
    #allocation2 [shape = 'u8[4096]{0}', space=vmem, size = 0x1000, scoped, tag = 'output window, operand 0']
    #allocation3 [shape = 's32[2]{0}', space=sflag, size = 0x8, scoped, tag = 'scoped memory for decoder_forward.3']
    %26 = vsyncpa [#allocation3], 0
    %s27 = scalar_lea.sflag [#allocation3], 1
    %28 = vsyncpa %s27, 0
    loop: start=0, step=1, limit=4
    $region2: #{decoder_forward.3} parent=1 // loop_pre_header
      _
    $region3: #{decoder_forward.3} parent=1 // loop_header
      %s30 = sphi 0, %s34
      %p31 = scmp.ge.s32.totalorder %s30, 4
      %s40 = sphi 0, %s42
      %s43 = sphi 0, %s40
      %s44 = sphi 0, %s43
      %s60 = sphi 0, %s44
      %s66 = sphi 0, %s68
      %s69 = sphi 0, %s66
      %s70 = sphi 0, %s69
      %s86 = sphi 0, %s70
      %s92 = sphi 0, %s94
      %s95 = sphi 0, %s92
      %s96 = sphi 0, %s95
      %s112 = sphi 0, %s96
      %s116 = sphi 0, %s116
      %s118 = sphi 0, %s116
      %s119 = sphi 0, %s118
      %s133 = sphi 0, %s119
      %s137 = sphi 0, %s137
      %s139 = sphi 0, %s137
      %s140 = sphi 0, %s139
      %s154 = sphi 0, %s140
      %s158 = sphi 0, %s158
      %s160 = sphi 0, %s158
      %s161 = sphi 0, %s160
      %s175 = sphi 0, %s161
      %s179 = sphi 0, %s179
      %s181 = sphi 0, %s179
      %s182 = sphi 0, %s181
      %s196 = sphi 0, %s182
      %s200 = sphi 0, %s200
      %s202 = sphi 0, %s200
      %s203 = sphi 0, %s202
      %s217 = sphi 0, %s203
      %s221 = sphi 0, %s221
      %s223 = sphi 0, %s221
      %s224 = sphi 0, %s223
      %s238 = sphi 0, %s224
      %s242 = sphi 0, %s242
      %s244 = sphi 0, %s242
      %s245 = sphi 0, %s244
      %s259 = sphi 0, %s245
      %s263 = sphi 0, %s263
      %s265 = sphi 0, %s263
      %s266 = sphi 0, %s265
      %s280 = sphi 0, %s266
      %s284 = sphi 0, %s284
      %s286 = sphi 0, %s284
      %s287 = sphi 0, %s286
      %s301 = sphi 0, %s287
      %s305 = sphi 0, %s305
      %s307 = sphi 0, %s305
      %s308 = sphi 0, %s307
      %s322 = sphi 0, %s308
      %s326 = sphi 0, %s326
      %s328 = sphi 0, %s326
      %s329 = sphi 0, %s328
      %s343 = sphi 0, %s329
      %s347 = sphi 0, %s347
      %s349 = sphi 0, %s347
      %s350 = sphi 0, %s349
      %s364 = sphi 0, %s350
      %s368 = sphi 0, %s368
      %s370 = sphi 0, %s368
      %s371 = sphi 0, %s370
      %s385 = sphi 0, %s371
      %s389 = sphi 0, %s389
      %s391 = sphi 0, %s389
      %s392 = sphi 0, %s391
      %s406 = sphi 0, %s392
      %s410 = sphi 0, %s410
      %s412 = sphi 0, %s410
      %s413 = sphi 0, %s412
      %s427 = sphi 0, %s413
      %s431 = sphi 0, %s431
      %s433 = sphi 0, %s431
      %s434 = sphi 0, %s433
      %s448 = sphi 0, %s434
      %s454 = sphi 0, %s456
      %s457 = sphi 0, %s454
      %s458 = sphi 0, %s457
      %s474 = sphi 0, %s458
      %s480 = sphi 0, %s482
      %s483 = sphi 0, %s480
      %s484 = sphi 0, %s483
      %s500 = sphi 0, %s484
    $region4: #{decoder_forward.3} parent=1 // loop_header_branch
      %33 = sbr.rel (%p31) target = $region8
    $region5: #{decoder_forward.3} parent=1 // loop_body
      %s35 = ssub.s32 %s30, 1
      %s36 = ssub.s32 %s30, 2
      %s37 = sadd.s32 %s30, 1
      %s38 = ssub.s32 %s30, %s37
      %p39 = scmp.eq.s32.totalorder %s38, 0
      %s41 = sadd.s32 %s40, 1
      %s42 = scalar_select %p39, %s40, %s41
      %p45 = pneg %p39
      %p46 = scmp.eq.s32.totalorder %s30, 1
      %p47 = por %p45, %p46
      %p48 = scmp.ne.s32.totalorder %s40, %s43
      %p49 = scmp.eq.s32.totalorder %s30, 0
      %p50 = por %p48, %p49
      %p51 = scmp.ne.s32.totalorder %s40, %s43
      %p52 = scmp.eq.s32.totalorder %s35, 1
      %p53 = por %p51, %p52
      %p54 = scmp.ne.s32.totalorder %s43, %s44
      %p55 = scmp.eq.s32.totalorder %s35, 0
      %p56 = por %p54, %p55
      %p57 = scmp.ne.s32.totalorder %s43, %s44
      %p58 = scmp.eq.s32.totalorder %s36, 1
      %p59 = por %p57, %p58
      %p61 = scmp.ne.s32.totalorder %s44, %s60
      %p62 = scmp.eq.s32.totalorder %s36, 0
      %p63 = por %p61, %p62
      %s64 = ssub.s32 %s30, %s37
      %p65 = scmp.eq.s32.totalorder %s64, 0
      %s67 = sadd.s32 %s66, 1
      %s68 = scalar_select %p65, %s66, %s67
      %p71 = pneg %p65
      %p72 = scmp.eq.s32.totalorder %s30, 1
      %p73 = por %p71, %p72
      %p74 = scmp.ne.s32.totalorder %s66, %s69
      %p75 = scmp.eq.s32.totalorder %s30, 0
      %p76 = por %p74, %p75
      %p77 = scmp.ne.s32.totalorder %s66, %s69
      %p78 = scmp.eq.s32.totalorder %s35, 1
      %p79 = por %p77, %p78
      %p80 = scmp.ne.s32.totalorder %s69, %s70
      %p81 = scmp.eq.s32.totalorder %s35, 0
      %p82 = por %p80, %p81
      %p83 = scmp.ne.s32.totalorder %s69, %s70
      %p84 = scmp.eq.s32.totalorder %s36, 1
      %p85 = por %p83, %p84
      %p87 = scmp.ne.s32.totalorder %s70, %s86
      %p88 = scmp.eq.s32.totalorder %s36, 0
      %p89 = por %p87, %p88
      %s90 = ssub.s32 %s30, %s37
      %p91 = scmp.eq.s32.totalorder %s90, 0
      %s93 = sadd.s32 %s92, 1
      %s94 = scalar_select %p91, %s92, %s93
      %p97 = pneg %p91
      %p98 = scmp.eq.s32.totalorder %s30, 1
      %p99 = por %p97, %p98
      %p100 = scmp.ne.s32.totalorder %s92, %s95
      %p101 = scmp.eq.s32.totalorder %s30, 0
      %p102 = por %p100, %p101
      %p103 = scmp.ne.s32.totalorder %s92, %s95
      %p104 = scmp.eq.s32.totalorder %s35, 1
      %p105 = por %p103, %p104
      %p106 = scmp.ne.s32.totalorder %s95, %s96
      %p107 = scmp.eq.s32.totalorder %s35, 0
      %p108 = por %p106, %p107
      %p109 = scmp.ne.s32.totalorder %s95, %s96
      %p110 = scmp.eq.s32.totalorder %s36, 1
      %p111 = por %p109, %p110
      %p113 = scmp.ne.s32.totalorder %s96, %s112
      %p114 = scmp.eq.s32.totalorder %s36, 0
      %p115 = por %p113, %p114
      %s117 = sadd.s32 %s116, 1
      %p120 = scmp.eq.s32.totalorder %s30, 1
      %p121 = scmp.ne.s32.totalorder %s116, %s118
      %p122 = scmp.eq.s32.totalorder %s30, 0
      %p123 = por %p121, %p122
      %p124 = scmp.ne.s32.totalorder %s116, %s118
      %p125 = scmp.eq.s32.totalorder %s35, 1
      %p126 = por %p124, %p125
      %p127 = scmp.ne.s32.totalorder %s118, %s119
      %p128 = scmp.eq.s32.totalorder %s35, 0
      %p129 = por %p127, %p128
      %p130 = scmp.ne.s32.totalorder %s118, %s119
      %p131 = scmp.eq.s32.totalorder %s36, 1
      %p132 = por %p130, %p131
      %p134 = scmp.ne.s32.totalorder %s119, %s133
      %p135 = scmp.eq.s32.totalorder %s36, 0
      %p136 = por %p134, %p135
      %s138 = sadd.s32 %s137, 1
      %p141 = scmp.eq.s32.totalorder %s30, 1
      %p142 = scmp.ne.s32.totalorder %s137, %s139
      %p143 = scmp.eq.s32.totalorder %s30, 0
      %p144 = por %p142, %p143
      %p145 = scmp.ne.s32.totalorder %s137, %s139
      %p146 = scmp.eq.s32.totalorder %s35, 1
      %p147 = por %p145, %p146
      %p148 = scmp.ne.s32.totalorder %s139, %s140
      %p149 = scmp.eq.s32.totalorder %s35, 0
      %p150 = por %p148, %p149
      %p151 = scmp.ne.s32.totalorder %s139, %s140
      %p152 = scmp.eq.s32.totalorder %s36, 1
      %p153 = por %p151, %p152
      %p155 = scmp.ne.s32.totalorder %s140, %s154
      %p156 = scmp.eq.s32.totalorder %s36, 0
      %p157 = por %p155, %p156
      %s159 = sadd.s32 %s158, 1
      %p162 = scmp.eq.s32.totalorder %s30, 1
      %p163 = scmp.ne.s32.totalorder %s158, %s160
      %p164 = scmp.eq.s32.totalorder %s30, 0
      %p165 = por %p163, %p164
      %p166 = scmp.ne.s32.totalorder %s158, %s160
      %p167 = scmp.eq.s32.totalorder %s35, 1
      %p168 = por %p166, %p167
      %p169 = scmp.ne.s32.totalorder %s160, %s161
      %p170 = scmp.eq.s32.totalorder %s35, 0
      %p171 = por %p169, %p170
      %p172 = scmp.ne.s32.totalorder %s160, %s161
      %p173 = scmp.eq.s32.totalorder %s36, 1
      %p174 = por %p172, %p173
      %p176 = scmp.ne.s32.totalorder %s161, %s175
      %p177 = scmp.eq.s32.totalorder %s36, 0
      %p178 = por %p176, %p177
      %s180 = sadd.s32 %s179, 1
      %p183 = scmp.eq.s32.totalorder %s30, 1
      %p184 = scmp.ne.s32.totalorder %s179, %s181
      %p185 = scmp.eq.s32.totalorder %s30, 0
      %p186 = por %p184, %p185
      %p187 = scmp.ne.s32.totalorder %s179, %s181
      %p188 = scmp.eq.s32.totalorder %s35, 1
      %p189 = por %p187, %p188
      %p190 = scmp.ne.s32.totalorder %s181, %s182
      %p191 = scmp.eq.s32.totalorder %s35, 0
      %p192 = por %p190, %p191
      %p193 = scmp.ne.s32.totalorder %s181, %s182
      %p194 = scmp.eq.s32.totalorder %s36, 1
      %p195 = por %p193, %p194
      %p197 = scmp.ne.s32.totalorder %s182, %s196
      %p198 = scmp.eq.s32.totalorder %s36, 0
      %p199 = por %p197, %p198
      %s201 = sadd.s32 %s200, 1
      %p204 = scmp.eq.s32.totalorder %s30, 1
      %p205 = scmp.ne.s32.totalorder %s200, %s202
      %p206 = scmp.eq.s32.totalorder %s30, 0
      %p207 = por %p205, %p206
      %p208 = scmp.ne.s32.totalorder %s200, %s202
      %p209 = scmp.eq.s32.totalorder %s35, 1
      %p210 = por %p208, %p209
      %p211 = scmp.ne.s32.totalorder %s202, %s203
      %p212 = scmp.eq.s32.totalorder %s35, 0
      %p213 = por %p211, %p212
      %p214 = scmp.ne.s32.totalorder %s202, %s203
      %p215 = scmp.eq.s32.totalorder %s36, 1
      %p216 = por %p214, %p215
      %p218 = scmp.ne.s32.totalorder %s203, %s217
      %p219 = scmp.eq.s32.totalorder %s36, 0
      %p220 = por %p218, %p219
      %s222 = sadd.s32 %s221, 1
      %p225 = scmp.eq.s32.totalorder %s30, 1
      %p226 = scmp.ne.s32.totalorder %s221, %s223
      %p227 = scmp.eq.s32.totalorder %s30, 0
      %p228 = por %p226, %p227
      %p229 = scmp.ne.s32.totalorder %s221, %s223
      %p230 = scmp.eq.s32.totalorder %s35, 1
      %p231 = por %p229, %p230
      %p232 = scmp.ne.s32.totalorder %s223, %s224
      %p233 = scmp.eq.s32.totalorder %s35, 0
      %p234 = por %p232, %p233
      %p235 = scmp.ne.s32.totalorder %s223, %s224
      %p236 = scmp.eq.s32.totalorder %s36, 1
      %p237 = por %p235, %p236
      %p239 = scmp.ne.s32.totalorder %s224, %s238
      %p240 = scmp.eq.s32.totalorder %s36, 0
      %p241 = por %p239, %p240
      %s243 = sadd.s32 %s242, 1
      %p246 = scmp.eq.s32.totalorder %s30, 1
      %p247 = scmp.ne.s32.totalorder %s242, %s244
      %p248 = scmp.eq.s32.totalorder %s30, 0
      %p249 = por %p247, %p248
      %p250 = scmp.ne.s32.totalorder %s242, %s244
      %p251 = scmp.eq.s32.totalorder %s35, 1
      %p252 = por %p250, %p251
      %p253 = scmp.ne.s32.totalorder %s244, %s245
      %p254 = scmp.eq.s32.totalorder %s35, 0
      %p255 = por %p253, %p254
      %p256 = scmp.ne.s32.totalorder %s244, %s245
      %p257 = scmp.eq.s32.totalorder %s36, 1
      %p258 = por %p256, %p257
      %p260 = scmp.ne.s32.totalorder %s245, %s259
      %p261 = scmp.eq.s32.totalorder %s36, 0
      %p262 = por %p260, %p261
      %s264 = sadd.s32 %s263, 1
      %p267 = scmp.eq.s32.totalorder %s30, 1
      %p268 = scmp.ne.s32.totalorder %s263, %s265
      %p269 = scmp.eq.s32.totalorder %s30, 0
      %p270 = por %p268, %p269
      %p271 = scmp.ne.s32.totalorder %s263, %s265
      %p272 = scmp.eq.s32.totalorder %s35, 1
      %p273 = por %p271, %p272
      %p274 = scmp.ne.s32.totalorder %s265, %s266
      %p275 = scmp.eq.s32.totalorder %s35, 0
      %p276 = por %p274, %p275
      %p277 = scmp.ne.s32.totalorder %s265, %s266
      %p278 = scmp.eq.s32.totalorder %s36, 1
      %p279 = por %p277, %p278
      %p281 = scmp.ne.s32.totalorder %s266, %s280
      %p282 = scmp.eq.s32.totalorder %s36, 0
      %p283 = por %p281, %p282
      %s285 = sadd.s32 %s284, 1
      %p288 = scmp.eq.s32.totalorder %s30, 1
      %p289 = scmp.ne.s32.totalorder %s284, %s286
      %p290 = scmp.eq.s32.totalorder %s30, 0
      %p291 = por %p289, %p290
      %p292 = scmp.ne.s32.totalorder %s284, %s286
      %p293 = scmp.eq.s32.totalorder %s35, 1
      %p294 = por %p292, %p293
      %p295 = scmp.ne.s32.totalorder %s286, %s287
      %p296 = scmp.eq.s32.totalorder %s35, 0
      %p297 = por %p295, %p296
      %p298 = scmp.ne.s32.totalorder %s286, %s287
      %p299 = scmp.eq.s32.totalorder %s36, 1
      %p300 = por %p298, %p299
      %p302 = scmp.ne.s32.totalorder %s287, %s301
      %p303 = scmp.eq.s32.totalorder %s36, 0
      %p304 = por %p302, %p303
      %s306 = sadd.s32 %s305, 1
      %p309 = scmp.eq.s32.totalorder %s30, 1
      %p310 = scmp.ne.s32.totalorder %s305, %s307
      %p311 = scmp.eq.s32.totalorder %s30, 0
      %p312 = por %p310, %p311
      %p313 = scmp.ne.s32.totalorder %s305, %s307
      %p314 = scmp.eq.s32.totalorder %s35, 1
      %p315 = por %p313, %p314
      %p316 = scmp.ne.s32.totalorder %s307, %s308
      %p317 = scmp.eq.s32.totalorder %s35, 0
      %p318 = por %p316, %p317
      %p319 = scmp.ne.s32.totalorder %s307, %s308
      %p320 = scmp.eq.s32.totalorder %s36, 1
      %p321 = por %p319, %p320
      %p323 = scmp.ne.s32.totalorder %s308, %s322
      %p324 = scmp.eq.s32.totalorder %s36, 0
      %p325 = por %p323, %p324
      %s327 = sadd.s32 %s326, 1
      %p330 = scmp.eq.s32.totalorder %s30, 1
      %p331 = scmp.ne.s32.totalorder %s326, %s328
      %p332 = scmp.eq.s32.totalorder %s30, 0
      %p333 = por %p331, %p332
      %p334 = scmp.ne.s32.totalorder %s326, %s328
      %p335 = scmp.eq.s32.totalorder %s35, 1
      %p336 = por %p334, %p335
      %p337 = scmp.ne.s32.totalorder %s328, %s329
      %p338 = scmp.eq.s32.totalorder %s35, 0
      %p339 = por %p337, %p338
      %p340 = scmp.ne.s32.totalorder %s328, %s329
      %p341 = scmp.eq.s32.totalorder %s36, 1
      %p342 = por %p340, %p341
      %p344 = scmp.ne.s32.totalorder %s329, %s343
      %p345 = scmp.eq.s32.totalorder %s36, 0
      %p346 = por %p344, %p345
      %s348 = sadd.s32 %s347, 1
      %p351 = scmp.eq.s32.totalorder %s30, 1
      %p352 = scmp.ne.s32.totalorder %s347, %s349
      %p353 = scmp.eq.s32.totalorder %s30, 0
      %p354 = por %p352, %p353
      %p355 = scmp.ne.s32.totalorder %s347, %s349
      %p356 = scmp.eq.s32.totalorder %s35, 1
      %p357 = por %p355, %p356
      %p358 = scmp.ne.s32.totalorder %s349, %s350
      %p359 = scmp.eq.s32.totalorder %s35, 0
      %p360 = por %p358, %p359
      %p361 = scmp.ne.s32.totalorder %s349, %s350
      %p362 = scmp.eq.s32.totalorder %s36, 1
      %p363 = por %p361, %p362
      %p365 = scmp.ne.s32.totalorder %s350, %s364
      %p366 = scmp.eq.s32.totalorder %s36, 0
      %p367 = por %p365, %p366
      %s369 = sadd.s32 %s368, 1
      %p372 = scmp.eq.s32.totalorder %s30, 1
      %p373 = scmp.ne.s32.totalorder %s368, %s370
      %p374 = scmp.eq.s32.totalorder %s30, 0
      %p375 = por %p373, %p374
      %p376 = scmp.ne.s32.totalorder %s368, %s370
      %p377 = scmp.eq.s32.totalorder %s35, 1
      %p378 = por %p376, %p377
      %p379 = scmp.ne.s32.totalorder %s370, %s371
      %p380 = scmp.eq.s32.totalorder %s35, 0
      %p381 = por %p379, %p380
      %p382 = scmp.ne.s32.totalorder %s370, %s371
      %p383 = scmp.eq.s32.totalorder %s36, 1
      %p384 = por %p382, %p383
      %p386 = scmp.ne.s32.totalorder %s371, %s385
      %p387 = scmp.eq.s32.totalorder %s36, 0
      %p388 = por %p386, %p387
      %s390 = sadd.s32 %s389, 1
      %p393 = scmp.eq.s32.totalorder %s30, 1
      %p394 = scmp.ne.s32.totalorder %s389, %s391
      %p395 = scmp.eq.s32.totalorder %s30, 0
      %p396 = por %p394, %p395
      %p397 = scmp.ne.s32.totalorder %s389, %s391
      %p398 = scmp.eq.s32.totalorder %s35, 1
      %p399 = por %p397, %p398
      %p400 = scmp.ne.s32.totalorder %s391, %s392
      %p401 = scmp.eq.s32.totalorder %s35, 0
      %p402 = por %p400, %p401
      %p403 = scmp.ne.s32.totalorder %s391, %s392
      %p404 = scmp.eq.s32.totalorder %s36, 1
      %p405 = por %p403, %p404
      %p407 = scmp.ne.s32.totalorder %s392, %s406
      %p408 = scmp.eq.s32.totalorder %s36, 0
      %p409 = por %p407, %p408
      %s411 = sadd.s32 %s410, 1
      %p414 = scmp.eq.s32.totalorder %s30, 1
      %p415 = scmp.ne.s32.totalorder %s410, %s412
      %p416 = scmp.eq.s32.totalorder %s30, 0
      %p417 = por %p415, %p416
      %p418 = scmp.ne.s32.totalorder %s410, %s412
      %p419 = scmp.eq.s32.totalorder %s35, 1
      %p420 = por %p418, %p419
      %p421 = scmp.ne.s32.totalorder %s412, %s413
      %p422 = scmp.eq.s32.totalorder %s35, 0
      %p423 = por %p421, %p422
      %p424 = scmp.ne.s32.totalorder %s412, %s413
      %p425 = scmp.eq.s32.totalorder %s36, 1
      %p426 = por %p424, %p425
      %p428 = scmp.ne.s32.totalorder %s413, %s427
      %p429 = scmp.eq.s32.totalorder %s36, 0
      %p430 = por %p428, %p429
      %s432 = sadd.s32 %s431, 1
      %p435 = scmp.eq.s32.totalorder %s30, 1
      %p436 = scmp.ne.s32.totalorder %s431, %s433
      %p437 = scmp.eq.s32.totalorder %s30, 0
      %p438 = por %p436, %p437
      %p439 = scmp.ne.s32.totalorder %s431, %s433
      %p440 = scmp.eq.s32.totalorder %s35, 1
      %p441 = por %p439, %p440
      %p442 = scmp.ne.s32.totalorder %s433, %s434
      %p443 = scmp.eq.s32.totalorder %s35, 0
      %p444 = por %p442, %p443
      %p445 = scmp.ne.s32.totalorder %s433, %s434
      %p446 = scmp.eq.s32.totalorder %s36, 1
      %p447 = por %p445, %p446
      %p449 = scmp.ne.s32.totalorder %s434, %s448
      %p450 = scmp.eq.s32.totalorder %s36, 0
      %p451 = por %p449, %p450
      %s452 = ssub.s32 %s30, %s37
      %p453 = scmp.eq.s32.totalorder %s452, 0
      %s455 = sadd.s32 %s454, 1
      %s456 = scalar_select %p453, %s454, %s455
      %p459 = pneg %p453
      %p460 = scmp.eq.s32.totalorder %s30, 1
      %p461 = por %p459, %p460
      %p462 = scmp.ne.s32.totalorder %s454, %s457
      %p463 = scmp.eq.s32.totalorder %s30, 0
      %p464 = por %p462, %p463
      %p465 = scmp.ne.s32.totalorder %s454, %s457
      %p466 = scmp.eq.s32.totalorder %s35, 1
      %p467 = por %p465, %p466
      %p468 = scmp.ne.s32.totalorder %s457, %s458
      %p469 = scmp.eq.s32.totalorder %s35, 0
      %p470 = por %p468, %p469
      %p471 = scmp.ne.s32.totalorder %s457, %s458
      %p472 = scmp.eq.s32.totalorder %s36, 1
      %p473 = por %p471, %p472
      %p475 = scmp.ne.s32.totalorder %s458, %s474
      %p476 = scmp.eq.s32.totalorder %s36, 0
      %p477 = por %p475, %p476
      %s478 = ssub.s32 %s30, %s37
      %p479 = scmp.eq.s32.totalorder %s478, 0
      %s481 = sadd.s32 %s480, 1
      %s482 = scalar_select %p479, %s480, %s481
      %p485 = pneg %p479
      %p486 = scmp.eq.s32.totalorder %s30, 1
      %p487 = por %p485, %p486
      %p488 = scmp.ne.s32.totalorder %s480, %s483
      %p489 = scmp.eq.s32.totalorder %s30, 0
      %p490 = por %p488, %p489
      %p491 = scmp.ne.s32.totalorder %s480, %s483
      %p492 = scmp.eq.s32.totalorder %s35, 1
      %p493 = por %p491, %p492
      %p494 = scmp.ne.s32.totalorder %s483, %s484
      %p495 = scmp.eq.s32.totalorder %s35, 0
      %p496 = por %p494, %p495
      %p497 = scmp.ne.s32.totalorder %s483, %s484
      %p498 = scmp.eq.s32.totalorder %s36, 1
      %p499 = por %p497, %p498
      %p501 = scmp.ne.s32.totalorder %s484, %s500
      %p502 = scmp.eq.s32.totalorder %s36, 0
      %p503 = por %p501, %p502
      %p504 = scmp.le.s32.totalorder 1, %s30
      %p505 = scmp.lt.s32.totalorder %s30, 3
      %p506 = pnand %p504, %p505
      %p507 = pneg %p506
      // Predicated region
      $region9: #{decoder_forward.3} parent=5 // pred_check
        _
      $region10: #{decoder_forward.3} parent=5 // pred_check_branch
        %509 = sbr.rel (%p506) target = $region12
      $region11: #{decoder_forward.3} parent=5 // pred_region
        %s510 = ssub.s32 %s30, 1
        // Predicated region
        $region13: #{decoder_forward.3} parent=11 // pred_check
          %p511 = pneg %p129
        $region14: #{decoder_forward.3} parent=11 // pred_check_branch
          %513 = sbr.rel (%p511) target = $region16
        $region15: #{decoder_forward.3} parent=11 // pred_region
          _
        $region16: #{decoder_forward.3} parent=11 // pred_fallthru
          _
        // Predicated region
        $region17: #{decoder_forward.3} parent=11 // pred_check
          %p514 = pneg %p150
        $region18: #{decoder_forward.3} parent=11 // pred_check_branch
          %516 = sbr.rel (%p514) target = $region20
        $region19: #{decoder_forward.3} parent=11 // pred_region
          _
        $region20: #{decoder_forward.3} parent=11 // pred_fallthru
          _
        // Predicated region
        $region21: #{decoder_forward.3} parent=11 // pred_check
          %p517 = pneg %p171
        $region22: #{decoder_forward.3} parent=11 // pred_check_branch
          %519 = sbr.rel (%p517) target = $region24
        $region23: #{decoder_forward.3} parent=11 // pred_region
          _
        $region24: #{decoder_forward.3} parent=11 // pred_fallthru
          _
        // Predicated region
        $region25: #{decoder_forward.3} parent=11 // pred_check
          %p520 = pneg %p192
        $region26: #{decoder_forward.3} parent=11 // pred_check_branch
          %522 = sbr.rel (%p520) target = $region28
        $region27: #{decoder_forward.3} parent=11 // pred_region
          _
        $region28: #{decoder_forward.3} parent=11 // pred_fallthru
          _
        // Predicated region
        $region29: #{decoder_forward.3} parent=11 // pred_check
          %p523 = pneg %p213
        $region30: #{decoder_forward.3} parent=11 // pred_check_branch
          %525 = sbr.rel (%p523) target = $region32
        $region31: #{decoder_forward.3} parent=11 // pred_region
          _
        $region32: #{decoder_forward.3} parent=11 // pred_fallthru
          _
        // Predicated region
        $region33: #{decoder_forward.3} parent=11 // pred_check
          %p526 = pneg %p234
        $region34: #{decoder_forward.3} parent=11 // pred_check_branch
          %528 = sbr.rel (%p526) target = $region36
        $region35: #{decoder_forward.3} parent=11 // pred_region
          _
        $region36: #{decoder_forward.3} parent=11 // pred_fallthru
          _
        // Predicated region
        $region37: #{decoder_forward.3} parent=11 // pred_check
          %p529 = pneg %p255
        $region38: #{decoder_forward.3} parent=11 // pred_check_branch
          %531 = sbr.rel (%p529) target = $region40
        $region39: #{decoder_forward.3} parent=11 // pred_region
          _
        $region40: #{decoder_forward.3} parent=11 // pred_fallthru
          _
        // Predicated region
        $region41: #{decoder_forward.3} parent=11 // pred_check
          %p532 = pneg %p276
        $region42: #{decoder_forward.3} parent=11 // pred_check_branch
          %534 = sbr.rel (%p532) target = $region44
        $region43: #{decoder_forward.3} parent=11 // pred_region
          _
        $region44: #{decoder_forward.3} parent=11 // pred_fallthru
          _
        // Predicated region
        $region45: #{decoder_forward.3} parent=11 // pred_check
          %p535 = pneg %p297
        $region46: #{decoder_forward.3} parent=11 // pred_check_branch
          %537 = sbr.rel (%p535) target = $region48
        $region47: #{decoder_forward.3} parent=11 // pred_region
          _
        $region48: #{decoder_forward.3} parent=11 // pred_fallthru
          _
        // Predicated region
        $region49: #{decoder_forward.3} parent=11 // pred_check
          %p538 = pneg %p318
        $region50: #{decoder_forward.3} parent=11 // pred_check_branch
          %540 = sbr.rel (%p538) target = $region52
        $region51: #{decoder_forward.3} parent=11 // pred_region
          _
        $region52: #{decoder_forward.3} parent=11 // pred_fallthru
          _
        // Predicated region
        $region53: #{decoder_forward.3} parent=11 // pred_check
          %p541 = pneg %p339
        $region54: #{decoder_forward.3} parent=11 // pred_check_branch
          %543 = sbr.rel (%p541) target = $region56
        $region55: #{decoder_forward.3} parent=11 // pred_region
          _
        $region56: #{decoder_forward.3} parent=11 // pred_fallthru
          _
        // Predicated region
        $region57: #{decoder_forward.3} parent=11 // pred_check
          %p544 = pneg %p360
        $region58: #{decoder_forward.3} parent=11 // pred_check_branch
          %546 = sbr.rel (%p544) target = $region60
        $region59: #{decoder_forward.3} parent=11 // pred_region
          _
        $region60: #{decoder_forward.3} parent=11 // pred_fallthru
          _
        // Predicated region
        $region61: #{decoder_forward.3} parent=11 // pred_check
          %p547 = pneg %p381
        $region62: #{decoder_forward.3} parent=11 // pred_check_branch
          %549 = sbr.rel (%p547) target = $region64
        $region63: #{decoder_forward.3} parent=11 // pred_region
          _
        $region64: #{decoder_forward.3} parent=11 // pred_fallthru
          _
        // Predicated region
        $region65: #{decoder_forward.3} parent=11 // pred_check
          %p550 = pneg %p402
        $region66: #{decoder_forward.3} parent=11 // pred_check_branch
          %552 = sbr.rel (%p550) target = $region68
        $region67: #{decoder_forward.3} parent=11 // pred_region
          _
        $region68: #{decoder_forward.3} parent=11 // pred_fallthru
          _
        // Predicated region
        $region69: #{decoder_forward.3} parent=11 // pred_check
          %p553 = pneg %p423
        $region70: #{decoder_forward.3} parent=11 // pred_check_branch
          %555 = sbr.rel (%p553) target = $region72
        $region71: #{decoder_forward.3} parent=11 // pred_region
          _
        $region72: #{decoder_forward.3} parent=11 // pred_fallthru
          _
        // Predicated region
        $region73: #{decoder_forward.3} parent=11 // pred_check
          %p556 = pneg %p444
        $region74: #{decoder_forward.3} parent=11 // pred_check_branch
          %558 = sbr.rel (%p556) target = $region76
        $region75: #{decoder_forward.3} parent=11 // pred_region
          _
        $region76: #{decoder_forward.3} parent=11 // pred_fallthru
          _
      $region12: #{decoder_forward.3} parent=5 // pred_fallthru
        _
      %p559 = scmp.lt.s32.totalorder %s30, 2
      // Predicated region
      $region77: #{decoder_forward.3} parent=5 // pred_check
        %p560 = pneg %p559
      $region78: #{decoder_forward.3} parent=5 // pred_check_branch
        %562 = sbr.rel (%p560) target = $region80
      $region79: #{decoder_forward.3} parent=5 // pred_region
        // Predicated region
        $region81: #{decoder_forward.3} parent=79 // pred_check
          %p563 = pneg %p50
        $region82: #{decoder_forward.3} parent=79 // pred_check_branch
          %565 = sbr.rel (%p563) target = $region84
        $region83: #{decoder_forward.3} parent=79 // pred_region
          %p566 = scmp.lt.s32.totalorder %s30, 1
          %s567 = scalar_select %p566, %s30, 1
          %s568 = smul.addr %s567, 4
          %s569 = scalar_lea.vmem %s0, %s568
        $region84: #{decoder_forward.3} parent=79 // pred_fallthru
          _
        // Predicated region
        $region85: #{decoder_forward.3} parent=79 // pred_check
          %p570 = pneg %p76
        $region86: #{decoder_forward.3} parent=79 // pred_check_branch
          %572 = sbr.rel (%p570) target = $region88
        $region87: #{decoder_forward.3} parent=79 // pred_region
          %p573 = scmp.lt.s32.totalorder %s30, 1
          %s574 = scalar_select %p573, %s30, 1
          %s575 = smul.addr %s574, 4
          %s576 = scalar_lea.vmem %s1, %s575
        $region88: #{decoder_forward.3} parent=79 // pred_fallthru
          _
        // Predicated region
        $region89: #{decoder_forward.3} parent=79 // pred_check
          %p577 = pneg %p102
        $region90: #{decoder_forward.3} parent=79 // pred_check_branch
          %579 = sbr.rel (%p577) target = $region92
        $region91: #{decoder_forward.3} parent=79 // pred_region
          %p580 = scmp.lt.s32.totalorder %s30, 1
          %s581 = scalar_select %p580, %s30, 1
          %s582 = smul.addr %s581, 2
          %s583 = smul.addr %s582, 8
          %s584 = scalar_lea.vmem %s2, %s583
        $region92: #{decoder_forward.3} parent=79 // pred_fallthru
          _
      $region80: #{decoder_forward.3} parent=5 // pred_fallthru
        _
      %p585 = scmp.le.s32.totalorder 1, %s30
      %p586 = scmp.lt.s32.totalorder %s30, 3
      %p587 = pnand %p585, %p586
      %p588 = pneg %p587
      // Predicated region
      $region93: #{decoder_forward.3} parent=5 // pred_check
        _
      $region94: #{decoder_forward.3} parent=5 // pred_check_branch
        %590 = sbr.rel (%p587) target = $region96
      $region95: #{decoder_forward.3} parent=5 // pred_region
        %s591 = ssub.s32 %s30, 1
        %p592 = scmp.lt.s32.totalorder %s35, 1
        %s593 = scalar_select %p592, %s35, 1
        %s594 = smul.addr %s593, 4
        %s595 = scalar_lea.vmem %s0, %s594
        %p596 = pneg %p56
        %p597 = pneg %p53
        %p598 = scmp.lt.s32.totalorder %s35, 1
        %s599 = scalar_select %p598, %s35, 1
        %s600 = smul.addr %s599, 4
        %s601 = scalar_lea.vmem %s1, %s600
        %p602 = pneg %p82
        %p603 = pneg %p79
        %p604 = scmp.lt.s32.totalorder %s35, 1
        %s605 = scalar_select %p604, %s35, 1
        %s606 = smul.addr %s605, 2
        %s607 = smul.addr %s606, 8
        %s608 = scalar_lea.vmem %s2, %s607
        %p609 = pneg %p108
        %p610 = pneg %p105
        %p611 = pneg %p129
        %p612 = pneg %p126
        %p613 = pneg %p150
        %p614 = pneg %p147
        %p615 = pneg %p171
        %p616 = pneg %p168
        %p617 = pneg %p192
        %p618 = pneg %p189
        %p619 = pneg %p213
        %p620 = pneg %p210
        %p621 = pneg %p234
        %p622 = pneg %p231
        %p623 = pneg %p255
        %p624 = pneg %p252
        %p625 = pneg %p276
        %p626 = pneg %p273
        %p627 = pneg %p297
        %p628 = pneg %p294
        %p629 = pneg %p318
        %p630 = pneg %p315
        %p631 = pneg %p339
        %p632 = pneg %p336
        %p633 = pneg %p360
        %p634 = pneg %p357
        %p635 = pneg %p381
        %p636 = pneg %p378
        %p637 = pneg %p402
        %p638 = pneg %p399
        %p639 = pneg %p423
        %p640 = pneg %p420
        %p641 = pneg %p444
        %p642 = pneg %p441
        %p643 = pneg %p470
        %p644 = pneg %p467
        %s645 = sand.u32 %s457, 1
        %s646 = scalar_lea.sflag [#allocation3], %s645
        %s647 = sand.u32 %s457, 1
        %s648 = smul.addr %s647, 4
        %s649 = scalar_lea.vmem [#allocation2], %s648
        %p650 = pneg %p496
        %p651 = pneg %p493
        %p652 = scmp.lt.s32.totalorder %s35, 1
        %s653 = scalar_select %p652, %s35, 1
        %s654 = smul.addr %s653, 4
        %s655 = scalar_lea.vmem %s20, %s654
        %p656 = scmp.lt.s32.totalorder %s35, 1
        %s657 = scalar_select %p656, %s35, 1
        %s658 = smul.addr %s657, 4
        %s659 = scalar_lea.vmem %s0, %s658
        %p660 = scmp.lt.s32.totalorder %s35, 1
        %s661 = scalar_select %p660, %s35, 1
        %s662 = smul.addr %s661, 4
        %s663 = scalar_lea.vmem %s1, %s662
        %p664 = scmp.lt.s32.totalorder %s35, 1
        %s665 = scalar_select %p664, %s35, 1
        %s666 = smul.addr %s665, 2
        %s667 = smul.addr %s666, 8
        %s668 = scalar_lea.vmem %s2, %s667
        %p669 = scmp.lt.s32.totalorder %s35, 1
        %s670 = scalar_select %p669, %s35, 1
        %s671 = smul.addr %s670, 4
        %s672 = scalar_lea.vmem %s20, %s671
        %v674 = vld [vmem:[%s659] sm:$0xf]
        %v675 = vld [vmem:[%s663] sm:$0xf]
        %v676 = vld [vmem:[%s668] sm:$0xff]
        %v677 = vld [vmem:[%s668 + $0x8] sm:$0xff]
        %v678 = vpack.c.bf16 %v677, %v676
        %v681 = vunpack.c.l.s4 1966171168
        %v682 = vunpack.c.0.s8 %v681
        %v683 = vlaneseq
        %v684 = vshrl.u32 %v683, 7
        %v685 = vsub.s32 %v682, %v684
        %v686 = vrot.slane %v675, %v685
        %v687 = vcombine.high %v686, %v686
        %v689 = vunpack.c.l.s4 1966171168
        %v690 = vunpack.c.0.s8 %v689
        %v691 = vlaneseq
        %v692 = vshrl.u32 %v691, 7
        %v693 = vsub.s32 %v690, %v692
        %v694 = vrot.slane %v686, %v693
        %v696 = vunpack.c.l.s4 1966171168
        %v697 = vunpack.c.0.s8 %v696
        %v698 = vlaneseq
        %v699 = vshrl.u32 %v698, 7
        %v700 = vsub.s32 %v697, %v699
        %v701 = vrot.slane %v687, %v700
        %v702 = vcombine.high %v694, %v694
        %v703 = vcombine.high %v701, %v701
        %v704 = vlaneseq
        %v705 = vshrl.u32 %v704, 7
        %v706 = vsub.s32 0, %v705
        %v707 = vrot.slane %v694, %v706
        %v708 = vlaneseq
        %v709 = vshrl.u32 %v708, 7
        %v710 = vsub.s32 0, %v709
        %v711 = vrot.slane %v701, %v710
        %v712 = vlaneseq
        %v713 = vshrl.u32 %v712, 7
        %v714 = vsub.s32 0, %v713
        %v715 = vrot.slane %v702, %v714
        %v716 = vlaneseq
        %v717 = vshrl.u32 %v716, 7
        %v718 = vsub.s32 0, %v717
        %v719 = vrot.slane %v703, %v718
        %v724 = vsub.f32 %v707, %v675
        %v725 = vsub.f32 %v711, %v675
        %v726 = vsub.f32 %v715, %v675
        %v727 = vsub.f32 %v719, %v675
        %v728 = vmul.f32 %v724, %v724
        %v729 = vmul.f32 %v725, %v725
        %v730 = vmul.f32 %v726, %v726
        %v731 = vmul.f32 %v727, %v727
        %vm732 = vcmask 19456
        %v733 = vsel %vm732, %v728, 0.0
        %734 = vadd.xlane.f32.xlu0 %v733
        %v735 = vpop.xlane.xlu0 %734
        %v736 = vsel %vm732, %v729, 0.0
        %737 = vadd.xlane.f32.xlu0 %v736
        %v738 = vpop.xlane.xlu0 %737
        %v739 = vsel %vm732, %v730, 0.0
        %740 = vadd.xlane.f32.xlu0 %v739
        %v741 = vpop.xlane.xlu0 %740
        %v742 = vsel %vm732, %v731, 0.0
        %743 = vadd.xlane.f32.xlu0 %v742
        %v744 = vpop.xlane.xlu0 %743
        %v745 = vpack.c.bf16 %v735, %v735
        %v746 = vpack.c.bf16 %v738, %v738
        %v747 = vpack.c.bf16 %v741, %v741
        %v748 = vpack.c.bf16 %v744, %v744
        %v749 = vunpack.c.l.bf16 %v745
        %v750 = vunpack.c.l.bf16 %v746
        %v751 = vunpack.c.l.bf16 %v747
        %v752 = vunpack.c.l.bf16 %v748
        %v753 = vld [vmem:[%s3] sm:$0xf]
        %v754 = vld [vmem:[%s3 + $0x4] sm:$0xf]
        %v755 = vld [vmem:[%s3 + $0x8] sm:$0xf]
        %v756 = vld [vmem:[%s3 + $0xc] sm:$0xf]
        %v757 = vld [vmem:[%s3 + $0x10] sm:$0xf]
        %v758 = vld [vmem:[%s3 + $0x14] sm:$0xf]
        %v759 = vld [vmem:[%s3 + $0x18] sm:$0xf]
        %v760 = vld [vmem:[%s3 + $0x1c] sm:$0xf]
        %v761 = vld [vmem:[%s3 + $0x20] sm:$0x7]
        %v762 = vunpack.c.l.bf16 %v761
        %v763 = vpack.c.bf16 %v674, %v674
        %v768 = vunpack.c.l.b16 %v753
        %v769 = vunpack.c.l.b16 %v754
        %v770 = vunpack.c.l.b16 %v755
        %v771 = vunpack.c.l.b16 %v756
        %v772 = vpack.c.b16 %v769, %v768
        %v773 = vpack.c.b16 %v771, %v770
        %vm776 = vcmask 261120
        %v778 = vsel %vm776, %v763, 0
        %780 = vmatprep.subr.bf16.mxu0 0
        %781 = vmatpush1.bf16.msra.mxu0 %v772
        %782 = vmatprep.subr.bf16.mxu0 0
        %783 = vmatpush1.bf16.msra.mxu0 %v773
        %784 = vmatprep.subr.bf16.mxu0 0
        %785 = vmatpush1.bf16.msra.mxu0 0
        %786 = vmatprep.subr.bf16.mxu0 0
        %787 = vmatpush1.bf16.msra.mxu0 0
        %788 = vmatprep.subr.bf16.mxu0 0
        %789 = vmatpush1.bf16.msra.mxu0 0
        %790 = vmatprep.subr.bf16.mxu0 0
        %791 = vmatpush1.bf16.msra.mxu0 0
        %792 = vmatprep.subr.bf16.mxu0 0
        %793 = vmatpush1.bf16.msra.mxu0 0
        %794 = vmatprep.subr.bf16.mxu0 0
        %795 = vmatpush1.bf16.msra.mxu0 0
        %796 = vmatprep.subr.bf16.mxu0 0
        %797 = vmatpush1.bf16.msra.mxu0 0
        %798 = vmatprep.subr.bf16.mxu0 0
        %799 = vmatpush1.bf16.msra.mxu0 0
        %800 = vmatprep.subr.bf16.mxu0 0
        %801 = vmatpush1.bf16.msra.mxu0 0
        %802 = vmatprep.subr.bf16.mxu0 0
        %803 = vmatpush1.bf16.msra.mxu0 0
        %804 = vmatprep.subr.bf16.mxu0 0
        %805 = vmatpush1.bf16.msra.mxu0 0
        %806 = vmatprep.subr.bf16.mxu0 0
        %807 = vmatpush1.bf16.msra.mxu0 0
        %808 = vmatprep.subr.bf16.mxu0 0
        %809 = vmatpush1.bf16.msra.mxu0 0
        %810 = vmatprep.subr.bf16.mxu0 0
        %811 = vmatpush1.bf16.msra.mxu0 0
        %812 = vmatprep.mubr.bf16.mxu0 0
        %813 = vmatmul.mubr.bf16.gmra.mrb[0].mxu0 %v778
        %v814 = vpop.f32.mrb[0].mxu0
        %v815 = vadd.f32 0.0, %v814
        %v816 = vpop.f32.mrb[0].mxu0
        %v817 = vpop.f32.mrb[0].mxu0
        %v818 = vpop.f32.mrb[0].mxu0
        %819 = vdwg.mxu0
        %v824 = vunpack.c.l.b16 %v757
        %v825 = vunpack.c.l.b16 %v758
        %v826 = vunpack.c.l.b16 %v759
        %v827 = vunpack.c.l.b16 %v760
        %v828 = vpack.c.b16 %v825, %v824
        %v829 = vpack.c.b16 %v827, %v826
        %832 = vmatprep.subr.bf16.mxu0 0
        %833 = vmatpush1.bf16.msra.mxu0 %v828
        %834 = vmatprep.subr.bf16.mxu0 0
        %835 = vmatpush1.bf16.msra.mxu0 %v829
        %836 = vmatprep.subr.bf16.mxu0 0
        %837 = vmatpush1.bf16.msra.mxu0 0
        %838 = vmatprep.subr.bf16.mxu0 0
        %839 = vmatpush1.bf16.msra.mxu0 0
        %840 = vmatprep.subr.bf16.mxu0 0
        %841 = vmatpush1.bf16.msra.mxu0 0
        %842 = vmatprep.subr.bf16.mxu0 0
        %843 = vmatpush1.bf16.msra.mxu0 0
        %844 = vmatprep.subr.bf16.mxu0 0
        %845 = vmatpush1.bf16.msra.mxu0 0
        %846 = vmatprep.subr.bf16.mxu0 0
        %847 = vmatpush1.bf16.msra.mxu0 0
        %848 = vmatprep.subr.bf16.mxu0 0
        %849 = vmatpush1.bf16.msra.mxu0 0
        %850 = vmatprep.subr.bf16.mxu0 0
        %851 = vmatpush1.bf16.msra.mxu0 0
        %852 = vmatprep.subr.bf16.mxu0 0
        %853 = vmatpush1.bf16.msra.mxu0 0
        %854 = vmatprep.subr.bf16.mxu0 0
        %855 = vmatpush1.bf16.msra.mxu0 0
        %856 = vmatprep.subr.bf16.mxu0 0
        %857 = vmatpush1.bf16.msra.mxu0 0
        %858 = vmatprep.subr.bf16.mxu0 0
        %859 = vmatpush1.bf16.msra.mxu0 0
        %860 = vmatprep.subr.bf16.mxu0 0
        %861 = vmatpush1.bf16.msra.mxu0 0
        %862 = vmatprep.subr.bf16.mxu0 0
        %863 = vmatpush1.bf16.msra.mxu0 0
        %864 = vmatprep.mubr.bf16.mxu0 0
        %865 = vmatmul.mubr.bf16.gmra.mrb[0].mxu0 %v778
        %v866 = vpop.f32.mrb[0].mxu0
        %v867 = vadd.f32 0.0, %v866
        %v868 = vpop.f32.mrb[0].mxu0
        %v869 = vpop.f32.mrb[0].mxu0
        %v870 = vpop.f32.mrb[0].mxu0
        %871 = vdwg.mxu0
        %v873 = vunpack.c.l.b16 %v761
        %v874 = vpack.c.b16 %v873, %v873
        %v876 = vshrl.u32 %v874, 16
        %v878 = vshll.u32 %v874, 16
        %v880 = vrot.slane %v878, 1
        %v881 = vor.u32 %v876, %v880
        %vm882 = vcmask 39936
        %v884 = vsel %vm882, %v678, 0
        %vm886 = vcmask 1041408
        %vm887 = vcmask 1042432
        %v888 = vsel %vm886, 4294967295, 65535
        %v889 = vsel %vm887, %v888, 0
        %v891 = vand.u32 %v881, %v889
        %893 = vmatprep.subr.bf16.mxu0 0
        %894 = vmatpush1.bf16.msra.mxu0 %v891
        %895 = vmatprep.subr.bf16.mxu0 0
        %896 = vmatpush1.bf16.msra.mxu0 0
        %897 = vmatprep.subr.bf16.mxu0 0
        %898 = vmatpush1.bf16.msra.mxu0 0
        %899 = vmatprep.subr.bf16.mxu0 0
        %900 = vmatpush1.bf16.msra.mxu0 0
        %901 = vmatprep.subr.bf16.mxu0 0
        %902 = vmatpush1.bf16.msra.mxu0 0
        %903 = vmatprep.subr.bf16.mxu0 0
        %904 = vmatpush1.bf16.msra.mxu0 0
        %905 = vmatprep.subr.bf16.mxu0 0
        %906 = vmatpush1.bf16.msra.mxu0 0
        %907 = vmatprep.subr.bf16.mxu0 0
        %908 = vmatpush1.bf16.msra.mxu0 0
        %909 = vmatprep.subr.bf16.mxu0 0
        %910 = vmatpush1.bf16.msra.mxu0 0
        %911 = vmatprep.subr.bf16.mxu0 0
        %912 = vmatpush1.bf16.msra.mxu0 0
        %913 = vmatprep.subr.bf16.mxu0 0
        %914 = vmatpush1.bf16.msra.mxu0 0
        %915 = vmatprep.subr.bf16.mxu0 0
        %916 = vmatpush1.bf16.msra.mxu0 0
        %917 = vmatprep.subr.bf16.mxu0 0
        %918 = vmatpush1.bf16.msra.mxu0 0
        %919 = vmatprep.subr.bf16.mxu0 0
        %920 = vmatpush1.bf16.msra.mxu0 0
        %921 = vmatprep.subr.bf16.mxu0 0
        %922 = vmatpush1.bf16.msra.mxu0 0
        %923 = vmatprep.subr.bf16.mxu0 0
        %924 = vmatpush1.bf16.msra.mxu0 0
        %925 = vmatprep.mubr.bf16.mxu0 0
        %926 = vmatmul.mubr.bf16.gmra.mrb[0].mxu0 %v884
        %v927 = vpop.f32.mrb[0].mxu0
        %v928 = vadd.f32 0.0, %v927
        %v929 = vpop.f32.mrb[0].mxu0
        %v930 = vpop.f32.mrb[0].mxu0
        %v931 = vadd.f32 0.0, %v930
        %v932 = vpop.f32.mrb[0].mxu0
        %933 = vdwg.mxu0
        %v936 = vunpack.c.l.s4 1966171168
        %v937 = vunpack.c.0.s8 %v936
        %v938 = vlaneseq
        %v939 = vshrl.u32 %v938, 7
        %v940 = vsub.s32 %v937, %v939
        %v941 = vrot.slane %v815, %v940
        %v942 = vcombine.high %v941, %v941
        %v944 = vunpack.c.l.s4 1966171168
        %v945 = vunpack.c.0.s8 %v944
        %v946 = vlaneseq
        %v947 = vshrl.u32 %v946, 7
        %v948 = vsub.s32 %v945, %v947
        %v949 = vrot.slane %v941, %v948
        %v951 = vunpack.c.l.s4 1966171168
        %v952 = vunpack.c.0.s8 %v951
        %v953 = vlaneseq
        %v954 = vshrl.u32 %v953, 7
        %v955 = vsub.s32 %v952, %v954
        %v956 = vrot.slane %v942, %v955
        %v957 = vcombine.high %v949, %v949
        %v958 = vcombine.high %v956, %v956
        %v959 = vlaneseq
        %v960 = vshrl.u32 %v959, 7
        %v961 = vsub.s32 0, %v960
        %v962 = vrot.slane %v949, %v961
        %v963 = vlaneseq
        %v964 = vshrl.u32 %v963, 7
        %v965 = vsub.s32 0, %v964
        %v966 = vrot.slane %v956, %v965
        %v967 = vlaneseq
        %v968 = vshrl.u32 %v967, 7
        %v969 = vsub.s32 0, %v968
        %v970 = vrot.slane %v957, %v969
        %v971 = vlaneseq
        %v972 = vshrl.u32 %v971, 7
        %v973 = vsub.s32 0, %v972
        %v974 = vrot.slane %v958, %v973
        %v979 = vadd.f32 %v962, %v867
        %v980 = vadd.f32 %v966, %v867
        %v981 = vadd.f32 %v970, %v867
        %v982 = vadd.f32 %v974, %v867
        %v983 = vlaneseq
        %v984 = vshrl.u32 %v983, 7
        %v985 = vsub.s32 0, %v984
        %v986 = vrot.slane %v762, %v985
        %v987 = vmul.f32 %v749, %v986
        %v988 = vmul.f32 %v750, %v986
        %v989 = vmul.f32 %v751, %v986
        %v990 = vmul.f32 %v752, %v986
        %v991 = vadd.f32 %v979, %v987
        %v992 = vadd.f32 %v980, %v988
        %v993 = vadd.f32 %v981, %v989
        %v994 = vadd.f32 %v982, %v990
        %v997 = vcombine.high %v928, %v928
        %v998 = vcombine.high %v931, %v931
        %v1001 = vadd.f32 %v991, %v928
        %v1002 = vadd.f32 %v992, %v997
        %v1003 = vadd.f32 %v993, %v931
        %v1004 = vadd.f32 %v994, %v998
        %v1005 = vld [vmem:[%s4] sm:$0x1]
        %v1007 = vlaneseq
        %v1008 = vshrl.u32 %v1007, 7
        %v1009 = vsub.s32 0, %v1008
        %v1010 = vrot.slane %v1005, %v1009
        %v1012 = vadd.f32 %v1001, %v1010
        %v1013 = vadd.f32 %v1002, %v1010
        %v1014 = vadd.f32 %v1003, %v1010
        %v1015 = vadd.f32 %v1004, %v1010
        %v1016 = vxor.u32 %v1012, 2147483648
        %v1017 = vxor.u32 %v1013, 2147483648
        %v1018 = vxor.u32 %v1014, 2147483648
        %v1019 = vxor.u32 %v1015, 2147483648
        %v1020 = vmul.f32 %v1016, 1.442695
        %v1021 = vpow.pop %v1020
        %v1022 = vmul.f32 %v1017, 1.442695
        %v1023 = vpow.pop %v1022
        %v1024 = vmul.f32 %v1018, 1.442695
        %v1025 = vpow.pop %v1024
        %v1026 = vmul.f32 %v1019, 1.442695
        %v1027 = vpow.pop %v1026
        %v1028 = vadd.f32 %v1021, 1.0
        %v1029 = vadd.f32 %v1023, 1.0
        %v1030 = vadd.f32 %v1025, 1.0
        %v1031 = vadd.f32 %v1027, 1.0
        %v1032 = vrcp.pop %v1028
        %v1033 = vmul.f32 1.0, %v1032
        %v1034 = vrcp.pop %v1029
        %v1035 = vmul.f32 1.0, %v1034
        %v1036 = vrcp.pop %v1030
        %v1037 = vmul.f32 1.0, %v1036
        %v1038 = vrcp.pop %v1031
        %v1039 = vmul.f32 1.0, %v1038
        %v1040 = vmul.f32 %v1012, %v1033
        %v1041 = vmul.f32 %v1013, %v1035
        %v1042 = vmul.f32 %v1014, %v1037
        %v1043 = vmul.f32 %v1015, %v1039
        %v1044 = vld [vmem:[%s5] sm:$0xf]
        %v1045 = vld [vmem:[%s5 + $0x4] sm:$0xf]
        %v1046 = vld [vmem:[%s5 + $0x8] sm:$0xf]
        %v1047 = vld [vmem:[%s5 + $0xc] sm:$0xf]
        %v1052 = vcombine.low %v1040, %v1041
        %v1053 = vcombine.low %v1042, %v1043
        %v1056 = vpack.c.bf16 %v1053, %v1052
        %v1057 = vld [vmem:[%s6] sm:$0x1]
        %v1059 = vlaneseq
        %v1060 = vshrl.u32 %v1059, 7
        %v1061 = vsub.s32 0, %v1060
        %v1062 = vrot.slane %v1057, %v1061
        %v1068 = vunpack.c.l.b16 %v1044
        %v1069 = vunpack.c.l.b16 %v1045
        %v1070 = vunpack.c.l.b16 %v1046
        %v1071 = vunpack.c.l.b16 %v1047
        %v1072 = vpack.c.b16 %v1069, %v1068
        %v1073 = vpack.c.b16 %v1071, %v1070
        %v1077 = vsel %vm776, %v1056, 0
        %1079 = vmatprep.subr.bf16.mxu0 0
        %1080 = vmatpush1.bf16.msra.mxu0 %v1072
        %1081 = vmatprep.subr.bf16.mxu0 0
        %1082 = vmatpush1.bf16.msra.mxu0 %v1073
        %1083 = vmatprep.subr.bf16.mxu0 0
        %1084 = vmatpush1.bf16.msra.mxu0 0
        %1085 = vmatprep.subr.bf16.mxu0 0
        %1086 = vmatpush1.bf16.msra.mxu0 0
        %1087 = vmatprep.subr.bf16.mxu0 0
        %1088 = vmatpush1.bf16.msra.mxu0 0
        %1089 = vmatprep.subr.bf16.mxu0 0
        %1090 = vmatpush1.bf16.msra.mxu0 0
        %1091 = vmatprep.subr.bf16.mxu0 0
        %1092 = vmatpush1.bf16.msra.mxu0 0
        %1093 = vmatprep.subr.bf16.mxu0 0
        %1094 = vmatpush1.bf16.msra.mxu0 0
        %1095 = vmatprep.subr.bf16.mxu0 0
        %1096 = vmatpush1.bf16.msra.mxu0 0
        %1097 = vmatprep.subr.bf16.mxu0 0
        %1098 = vmatpush1.bf16.msra.mxu0 0
        %1099 = vmatprep.subr.bf16.mxu0 0
        %1100 = vmatpush1.bf16.msra.mxu0 0
        %1101 = vmatprep.subr.bf16.mxu0 0
        %1102 = vmatpush1.bf16.msra.mxu0 0
        %1103 = vmatprep.subr.bf16.mxu0 0
        %1104 = vmatpush1.bf16.msra.mxu0 0
        %1105 = vmatprep.subr.bf16.mxu0 0
        %1106 = vmatpush1.bf16.msra.mxu0 0
        %1107 = vmatprep.subr.bf16.mxu0 0
        %1108 = vmatpush1.bf16.msra.mxu0 0
        %1109 = vmatprep.subr.bf16.mxu0 0
        %1110 = vmatpush1.bf16.msra.mxu0 0
        %1111 = vmatprep.mubr.bf16.mxu0 0
        %1112 = vmatmul.mubr.bf16.gmra.mrb[0].mxu0 %v1077
        %v1113 = vpop.f32.mrb[0].mxu0
        %v1114 = vadd.f32 %v1062, %v1113
        %v1115 = vpop.f32.mrb[0].mxu0
        %v1116 = vpop.f32.mrb[0].mxu0
        %v1117 = vadd.f32 %v1062, %v1116
        %v1118 = vpop.f32.mrb[0].mxu0
        %1119 = vdwg.mxu0
        %v1120 = vxor.u32 %v1114, 2147483648
        %v1121 = vxor.u32 %v1117, 2147483648
        %v1122 = vmul.f32 %v1120, 1.442695
        %v1123 = vpow.pop %v1122
        %v1124 = vmul.f32 %v1121, 1.442695
        %v1125 = vpow.pop %v1124
        %v1126 = vadd.f32 %v1123, 1.0
        %v1127 = vadd.f32 %v1125, 1.0
        %v1128 = vrcp.pop %v1126
        %v1129 = vmul.f32 1.0, %v1128
        %v1130 = vrcp.pop %v1127
        %v1131 = vmul.f32 1.0, %v1130
        %v1132 = vmul.f32 %v1114, %v1129
        %v1133 = vmul.f32 %v1117, %v1131
        %v1136 = vcombine.high %v1132, %v1132
        %v1137 = vcombine.high %v1133, %v1133
        %vm1140 = vcmask 257024
        %v1141 = vsel %vm1140, %v1132, 0.0
        %v1142 = vrot.slane %v1141, 4
        %v1143 = vadd.f32 %v1141, %v1142
        %v1144 = vrot.slane %v1143, 2
        %v1145 = vadd.f32 %v1143, %v1144
        %v1146 = vrot.slane %v1145, 1
        %v1147 = vadd.f32 %v1145, %v1146
        %v1148 = vsel %vm1140, %v1136, 0.0
        %v1149 = vrot.slane %v1148, 4
        %v1150 = vadd.f32 %v1148, %v1149
        %v1151 = vrot.slane %v1150, 2
        %v1152 = vadd.f32 %v1150, %v1151
        %v1153 = vrot.slane %v1152, 1
        %v1154 = vadd.f32 %v1152, %v1153
        %v1155 = vsel %vm1140, %v1133, 0.0
        %v1156 = vrot.slane %v1155, 4
        %v1157 = vadd.f32 %v1155, %v1156
        %v1158 = vrot.slane %v1157, 2
        %v1159 = vadd.f32 %v1157, %v1158
        %v1160 = vrot.slane %v1159, 1
        %v1161 = vadd.f32 %v1159, %v1160
        %v1162 = vsel %vm1140, %v1137, 0.0
        %v1163 = vrot.slane %v1162, 4
        %v1164 = vadd.f32 %v1162, %v1163
        %v1165 = vrot.slane %v1164, 2
        %v1166 = vadd.f32 %v1164, %v1165
        %v1167 = vrot.slane %v1166, 1
        %v1168 = vadd.f32 %v1166, %v1167
        %v1169 = vld [vmem:[%s11] sm:$0xf]
        %v1170 = vld [vmem:[%s11 + $0x4] sm:$0xf]
        %v1171 = vld [vmem:[%s11 + $0x8] sm:$0xf]
        %v1172 = vld [vmem:[%s11 + $0xc] sm:$0xf]
        %v1173 = vld [vmem:[%s11 + $0x10] sm:$0xf]
        %v1174 = vld [vmem:[%s11 + $0x14] sm:$0xf]
        %v1175 = vld [vmem:[%s11 + $0x18] sm:$0xf]
        %v1176 = vld [vmem:[%s11 + $0x1c] sm:$0xf]
        %v1177 = vld [vmem:[%s11 + $0x20] sm:$0xf]
        %v1178 = vld [vmem:[%s11 + $0x24] sm:$0xf]
        %v1179 = vld [vmem:[%s11 + $0x28] sm:$0xf]
        %v1180 = vld [vmem:[%s11 + $0x2c] sm:$0xf]
        %v1181 = vpack.c.bf16 %v1147, %v1147
        %v1182 = vpack.c.bf16 %v1154, %v1154
        %v1183 = vpack.c.bf16 %v1161, %v1161
        %v1184 = vpack.c.bf16 %v1168, %v1168
        %v1189 = vunpack.c.l.b16 %v1181
        %v1190 = vunpack.c.l.b16 %v1182
        %v1191 = vunpack.c.l.b16 %v1183
        %v1192 = vunpack.c.l.b16 %v1184
        %vm1193 = vcmask 1041409
        %v1194 = vsel %vm1193, %v1190, %v1189
        %vm1195 = vcmask 1042434
        %v1196 = vsel %vm1195, %v1191, %v1194
        %vm1197 = vcmask 1043459
        %v1198 = vsel %vm1197, %v1192, %v1196
        %v1199 = vpack.c.b16 %v1198, %v1198
        %v1204 = vunpack.c.l.b16 %v1173
        %v1205 = vunpack.c.l.b16 %v1174
        %v1206 = vunpack.c.l.b16 %v1175
        %v1207 = vunpack.c.l.b16 %v1176
        %v1208 = vpack.c.b16 %v1205, %v1204
        %v1209 = vpack.c.b16 %v1207, %v1206
        %v1213 = vsel %vm776, %v1199, 0
        %1215 = vmatprep.subr.bf16.mxu0 0
        %1216 = vmatpush1.bf16.msra.mxu0 %v1208
        %1217 = vmatprep.subr.bf16.mxu0 0
        %1218 = vmatpush1.bf16.msra.mxu0 %v1209
        %1219 = vmatprep.subr.bf16.mxu0 0
        %1220 = vmatpush1.bf16.msra.mxu0 0
        %1221 = vmatprep.subr.bf16.mxu0 0
        %1222 = vmatpush1.bf16.msra.mxu0 0
        %1223 = vmatprep.subr.bf16.mxu0 0
        %1224 = vmatpush1.bf16.msra.mxu0 0
        %1225 = vmatprep.subr.bf16.mxu0 0
        %1226 = vmatpush1.bf16.msra.mxu0 0
        %1227 = vmatprep.subr.bf16.mxu0 0
        %1228 = vmatpush1.bf16.msra.mxu0 0
        %1229 = vmatprep.subr.bf16.mxu0 0
        %1230 = vmatpush1.bf16.msra.mxu0 0
        %1231 = vmatprep.subr.bf16.mxu0 0
        %1232 = vmatpush1.bf16.msra.mxu0 0
        %1233 = vmatprep.subr.bf16.mxu0 0
        %1234 = vmatpush1.bf16.msra.mxu0 0
        %1235 = vmatprep.subr.bf16.mxu0 0
        %1236 = vmatpush1.bf16.msra.mxu0 0
        %1237 = vmatprep.subr.bf16.mxu0 0
        %1238 = vmatpush1.bf16.msra.mxu0 0
        %1239 = vmatprep.subr.bf16.mxu0 0
        %1240 = vmatpush1.bf16.msra.mxu0 0
        %1241 = vmatprep.subr.bf16.mxu0 0
        %1242 = vmatpush1.bf16.msra.mxu0 0
        %1243 = vmatprep.subr.bf16.mxu0 0
        %1244 = vmatpush1.bf16.msra.mxu0 0
        %1245 = vmatprep.subr.bf16.mxu0 0
        %1246 = vmatpush1.bf16.msra.mxu0 0
        %1247 = vmatprep.mubr.bf16.mxu0 0
        %1248 = vmatmul.mubr.bf16.gmra.mrb[0].mxu0 %v1213
        %v1249 = vpop.f32.mrb[0].mxu0
        %v1250 = vadd.f32 0.0, %v1249
        %v1251 = vpop.f32.mrb[0].mxu0
        %v1252 = vpop.f32.mrb[0].mxu0
        %v1253 = vpop.f32.mrb[0].mxu0
        %1254 = vdwg.mxu0
        %v1259 = vunpack.c.l.b16 %v1169
        %v1260 = vunpack.c.l.b16 %v1170
        %v1261 = vunpack.c.l.b16 %v1171
        %v1262 = vunpack.c.l.b16 %v1172
        %v1263 = vpack.c.b16 %v1260, %v1259
        %v1264 = vpack.c.b16 %v1262, %v1261
        %1267 = vmatprep.subr.bf16.mxu0 0
        %1268 = vmatpush1.bf16.msra.mxu0 %v1263
        %1269 = vmatprep.subr.bf16.mxu0 0
        %1270 = vmatpush1.bf16.msra.mxu0 %v1264
        %1271 = vmatprep.subr.bf16.mxu0 0
        %1272 = vmatpush1.bf16.msra.mxu0 0
        %1273 = vmatprep.subr.bf16.mxu0 0
        %1274 = vmatpush1.bf16.msra.mxu0 0
        %1275 = vmatprep.subr.bf16.mxu0 0
        %1276 = vmatpush1.bf16.msra.mxu0 0
        %1277 = vmatprep.subr.bf16.mxu0 0
        %1278 = vmatpush1.bf16.msra.mxu0 0
        %1279 = vmatprep.subr.bf16.mxu0 0
        %1280 = vmatpush1.bf16.msra.mxu0 0
        %1281 = vmatprep.subr.bf16.mxu0 0
        %1282 = vmatpush1.bf16.msra.mxu0 0
        %1283 = vmatprep.subr.bf16.mxu0 0
        %1284 = vmatpush1.bf16.msra.mxu0 0
        %1285 = vmatprep.subr.bf16.mxu0 0
        %1286 = vmatpush1.bf16.msra.mxu0 0
        %1287 = vmatprep.subr.bf16.mxu0 0
        %1288 = vmatpush1.bf16.msra.mxu0 0
        %1289 = vmatprep.subr.bf16.mxu0 0
        %1290 = vmatpush1.bf16.msra.mxu0 0
        %1291 = vmatprep.subr.bf16.mxu0 0
        %1292 = vmatpush1.bf16.msra.mxu0 0
        %1293 = vmatprep.subr.bf16.mxu0 0
        %1294 = vmatpush1.bf16.msra.mxu0 0
        %1295 = vmatprep.subr.bf16.mxu0 0
        %1296 = vmatpush1.bf16.msra.mxu0 0
        %1297 = vmatprep.subr.bf16.mxu0 0
        %1298 = vmatpush1.bf16.msra.mxu0 0
        %1299 = vmatprep.mubr.bf16.mxu0 0
        %1300 = vmatmul.mubr.bf16.gmra.mrb[0].mxu0 %v778
        %v1301 = vpop.f32.mrb[0].mxu0
        %v1302 = vadd.f32 %v1250, %v1301
        %v1303 = vpop.f32.mrb[0].mxu0
        %v1304 = vpop.f32.mrb[0].mxu0
        %v1305 = vpop.f32.mrb[0].mxu0
        %1306 = vdwg.mxu0
        %v1311 = vunpack.c.l.b16 %v1177
        %v1312 = vunpack.c.l.b16 %v1178
        %v1313 = vunpack.c.l.b16 %v1179
        %v1314 = vunpack.c.l.b16 %v1180
        %v1315 = vpack.c.b16 %v1312, %v1311
        %v1316 = vpack.c.b16 %v1314, %v1313
        %1319 = vmatprep.subr.bf16.mxu0 0
        %1320 = vmatpush1.bf16.msra.mxu0 %v1315
        %1321 = vmatprep.subr.bf16.mxu0 0
        %1322 = vmatpush1.bf16.msra.mxu0 %v1316
        %1323 = vmatprep.subr.bf16.mxu0 0
        %1324 = vmatpush1.bf16.msra.mxu0 0
        %1325 = vmatprep.subr.bf16.mxu0 0
        %1326 = vmatpush1.bf16.msra.mxu0 0
        %1327 = vmatprep.subr.bf16.mxu0 0
        %1328 = vmatpush1.bf16.msra.mxu0 0
        %1329 = vmatprep.subr.bf16.mxu0 0
        %1330 = vmatpush1.bf16.msra.mxu0 0
        %1331 = vmatprep.subr.bf16.mxu0 0
        %1332 = vmatpush1.bf16.msra.mxu0 0
        %1333 = vmatprep.subr.bf16.mxu0 0
        %1334 = vmatpush1.bf16.msra.mxu0 0
        %1335 = vmatprep.subr.bf16.mxu0 0
        %1336 = vmatpush1.bf16.msra.mxu0 0
        %1337 = vmatprep.subr.bf16.mxu0 0
        %1338 = vmatpush1.bf16.msra.mxu0 0
        %1339 = vmatprep.subr.bf16.mxu0 0
        %1340 = vmatpush1.bf16.msra.mxu0 0
        %1341 = vmatprep.subr.bf16.mxu0 0
        %1342 = vmatpush1.bf16.msra.mxu0 0
        %1343 = vmatprep.subr.bf16.mxu0 0
        %1344 = vmatpush1.bf16.msra.mxu0 0
        %1345 = vmatprep.subr.bf16.mxu0 0
        %1346 = vmatpush1.bf16.msra.mxu0 0
        %1347 = vmatprep.subr.bf16.mxu0 0
        %1348 = vmatpush1.bf16.msra.mxu0 0
        %1349 = vmatprep.subr.bf16.mxu0 0
        %1350 = vmatpush1.bf16.msra.mxu0 0
        %1351 = vmatprep.mubr.bf16.mxu0 0
        %1352 = vmatmul.mubr.bf16.gmra.mrb[0].mxu0 %v778
        %v1353 = vpop.f32.mrb[0].mxu0
        %v1354 = vadd.f32 0.0, %v1353
        %v1355 = vpop.f32.mrb[0].mxu0
        %v1356 = vpop.f32.mrb[0].mxu0
        %v1357 = vpop.f32.mrb[0].mxu0
        %1358 = vdwg.mxu0
        %v1359 = vadd.f32 %v1302, %v1354
        %v1360 = vld [vmem:[%s12] sm:$0x1]
        %v1362 = vlaneseq
        %v1363 = vshrl.u32 %v1362, 7
        %v1364 = vsub.s32 0, %v1363
        %v1365 = vrot.slane %v1360, %v1364
        %v1367 = vadd.f32 %v1359, %v1365
        %v1368 = vxor.u32 %v1367, 2147483648
        %v1369 = vmul.f32 %v1368, 1.442695
        %v1370 = vpow.pop %v1369
        %v1371 = vadd.f32 %v1370, 1.0
        %v1372 = vrcp.pop %v1371
        %v1373 = vmul.f32 1.0, %v1372
        %v1374 = vmul.f32 %v1367, %v1373
        %v1375 = vld [vmem:[%s13] sm:$0xf]
        %v1376 = vld [vmem:[%s13 + $0x4] sm:$0xf]
        %v1377 = vld [vmem:[%s13 + $0x8] sm:$0xf]
        %v1378 = vld [vmem:[%s13 + $0xc] sm:$0xf]
        %v1379 = vpack.c.bf16 %v1374, %v1374
        %v1380 = vld [vmem:[%s14] sm:$0x1]
        %v1382 = vlaneseq
        %v1383 = vshrl.u32 %v1382, 7
        %v1384 = vsub.s32 0, %v1383
        %v1385 = vrot.slane %v1380, %v1384
        %v1391 = vunpack.c.l.b16 %v1375
        %v1392 = vunpack.c.l.b16 %v1376
        %v1393 = vunpack.c.l.b16 %v1377
        %v1394 = vunpack.c.l.b16 %v1378
        %v1395 = vpack.c.b16 %v1392, %v1391
        %v1396 = vpack.c.b16 %v1394, %v1393
        %v1400 = vsel %vm776, %v1379, 0
        %1402 = vmatprep.subr.bf16.mxu0 0
        %1403 = vmatpush1.bf16.msra.mxu0 %v1395
        %1404 = vmatprep.subr.bf16.mxu0 0
        %1405 = vmatpush1.bf16.msra.mxu0 %v1396
        %1406 = vmatprep.subr.bf16.mxu0 0
        %1407 = vmatpush1.bf16.msra.mxu0 0
        %1408 = vmatprep.subr.bf16.mxu0 0
        %1409 = vmatpush1.bf16.msra.mxu0 0
        %1410 = vmatprep.subr.bf16.mxu0 0
        %1411 = vmatpush1.bf16.msra.mxu0 0
        %1412 = vmatprep.subr.bf16.mxu0 0
        %1413 = vmatpush1.bf16.msra.mxu0 0
        %1414 = vmatprep.subr.bf16.mxu0 0
        %1415 = vmatpush1.bf16.msra.mxu0 0
        %1416 = vmatprep.subr.bf16.mxu0 0
        %1417 = vmatpush1.bf16.msra.mxu0 0
        %1418 = vmatprep.subr.bf16.mxu0 0
        %1419 = vmatpush1.bf16.msra.mxu0 0
        %1420 = vmatprep.subr.bf16.mxu0 0
        %1421 = vmatpush1.bf16.msra.mxu0 0
        %1422 = vmatprep.subr.bf16.mxu0 0
        %1423 = vmatpush1.bf16.msra.mxu0 0
        %1424 = vmatprep.subr.bf16.mxu0 0
        %1425 = vmatpush1.bf16.msra.mxu0 0
        %1426 = vmatprep.subr.bf16.mxu0 0
        %1427 = vmatpush1.bf16.msra.mxu0 0
        %1428 = vmatprep.subr.bf16.mxu0 0
        %1429 = vmatpush1.bf16.msra.mxu0 0
        %1430 = vmatprep.subr.bf16.mxu0 0
        %1431 = vmatpush1.bf16.msra.mxu0 0
        %1432 = vmatprep.subr.bf16.mxu0 0
        %1433 = vmatpush1.bf16.msra.mxu0 0
        %1434 = vmatprep.mubr.bf16.mxu0 0
        %1435 = vmatmul.mubr.bf16.gmra.mrb[0].mxu0 %v1400
        %v1436 = vpop.f32.mrb[0].mxu0
        %v1437 = vadd.f32 %v1385, %v1436
        %v1438 = vpop.f32.mrb[0].mxu0
        %v1439 = vpop.f32.mrb[0].mxu0
        %v1440 = vpop.f32.mrb[0].mxu0
        %1441 = vdwg.mxu0
        %s1442 = scalar_lea.vmem %s3, 36
        %v1443 = vld [vmem:[%s1442] sm:$0xf]
        %v1444 = vld [vmem:[%s1442 + $0x4] sm:$0xf]
        %v1445 = vld [vmem:[%s1442 + $0x8] sm:$0xf]
        %v1446 = vld [vmem:[%s1442 + $0xc] sm:$0xf]
        %v1447 = vld [vmem:[%s1442 + $0x10] sm:$0xf]
        %v1448 = vld [vmem:[%s1442 + $0x14] sm:$0xf]
        %v1449 = vld [vmem:[%s1442 + $0x18] sm:$0xf]
        %v1450 = vld [vmem:[%s1442 + $0x1c] sm:$0xf]
        %v1451 = vld [vmem:[%s1442 + $0x20] sm:$0x7]
        %v1452 = vunpack.c.l.bf16 %v1451
        %v1453 = vpack.c.bf16 %v1437, %v1437
        %v1458 = vunpack.c.l.b16 %v1443
        %v1459 = vunpack.c.l.b16 %v1444
        %v1460 = vunpack.c.l.b16 %v1445
        %v1461 = vunpack.c.l.b16 %v1446
        %v1462 = vpack.c.b16 %v1459, %v1458
        %v1463 = vpack.c.b16 %v1461, %v1460
        %v1467 = vsel %vm776, %v1453, 0
        %1469 = vmatprep.subr.bf16.mxu0 0
        %1470 = vmatpush1.bf16.msra.mxu0 %v1462
        %1471 = vmatprep.subr.bf16.mxu0 0
        %1472 = vmatpush1.bf16.msra.mxu0 %v1463
        %1473 = vmatprep.subr.bf16.mxu0 0
        %1474 = vmatpush1.bf16.msra.mxu0 0
        %1475 = vmatprep.subr.bf16.mxu0 0
        %1476 = vmatpush1.bf16.msra.mxu0 0
        %1477 = vmatprep.subr.bf16.mxu0 0
        %1478 = vmatpush1.bf16.msra.mxu0 0
        %1479 = vmatprep.subr.bf16.mxu0 0
        %1480 = vmatpush1.bf16.msra.mxu0 0
        %1481 = vmatprep.subr.bf16.mxu0 0
        %1482 = vmatpush1.bf16.msra.mxu0 0
        %1483 = vmatprep.subr.bf16.mxu0 0
        %1484 = vmatpush1.bf16.msra.mxu0 0
        %1485 = vmatprep.subr.bf16.mxu0 0
        %1486 = vmatpush1.bf16.msra.mxu0 0
        %1487 = vmatprep.subr.bf16.mxu0 0
        %1488 = vmatpush1.bf16.msra.mxu0 0
        %1489 = vmatprep.subr.bf16.mxu0 0
        %1490 = vmatpush1.bf16.msra.mxu0 0
        %1491 = vmatprep.subr.bf16.mxu0 0
        %1492 = vmatpush1.bf16.msra.mxu0 0
        %1493 = vmatprep.subr.bf16.mxu0 0
        %1494 = vmatpush1.bf16.msra.mxu0 0
        %1495 = vmatprep.subr.bf16.mxu0 0
        %1496 = vmatpush1.bf16.msra.mxu0 0
        %1497 = vmatprep.subr.bf16.mxu0 0
        %1498 = vmatpush1.bf16.msra.mxu0 0
        %1499 = vmatprep.subr.bf16.mxu0 0
        %1500 = vmatpush1.bf16.msra.mxu0 0
        %1501 = vmatprep.mubr.bf16.mxu0 0
        %1502 = vmatmul.mubr.bf16.gmra.mrb[0].mxu0 %v1467
        %v1503 = vpop.f32.mrb[0].mxu0
        %v1504 = vadd.f32 0.0, %v1503
        %v1505 = vpop.f32.mrb[0].mxu0
        %v1506 = vpop.f32.mrb[0].mxu0
        %v1507 = vpop.f32.mrb[0].mxu0
        %1508 = vdwg.mxu0
        %v1513 = vunpack.c.l.b16 %v1447
        %v1514 = vunpack.c.l.b16 %v1448
        %v1515 = vunpack.c.l.b16 %v1449
        %v1516 = vunpack.c.l.b16 %v1450
        %v1517 = vpack.c.b16 %v1514, %v1513
        %v1518 = vpack.c.b16 %v1516, %v1515
        %1521 = vmatprep.subr.bf16.mxu0 0
        %1522 = vmatpush1.bf16.msra.mxu0 %v1517
        %1523 = vmatprep.subr.bf16.mxu0 0
        %1524 = vmatpush1.bf16.msra.mxu0 %v1518
        %1525 = vmatprep.subr.bf16.mxu0 0
        %1526 = vmatpush1.bf16.msra.mxu0 0
        %1527 = vmatprep.subr.bf16.mxu0 0
        %1528 = vmatpush1.bf16.msra.mxu0 0
        %1529 = vmatprep.subr.bf16.mxu0 0
        %1530 = vmatpush1.bf16.msra.mxu0 0
        %1531 = vmatprep.subr.bf16.mxu0 0
        %1532 = vmatpush1.bf16.msra.mxu0 0
        %1533 = vmatprep.subr.bf16.mxu0 0
        %1534 = vmatpush1.bf16.msra.mxu0 0
        %1535 = vmatprep.subr.bf16.mxu0 0
        %1536 = vmatpush1.bf16.msra.mxu0 0
        %1537 = vmatprep.subr.bf16.mxu0 0
        %1538 = vmatpush1.bf16.msra.mxu0 0
        %1539 = vmatprep.subr.bf16.mxu0 0
        %1540 = vmatpush1.bf16.msra.mxu0 0
        %1541 = vmatprep.subr.bf16.mxu0 0
        %1542 = vmatpush1.bf16.msra.mxu0 0
        %1543 = vmatprep.subr.bf16.mxu0 0
        %1544 = vmatpush1.bf16.msra.mxu0 0
        %1545 = vmatprep.subr.bf16.mxu0 0
        %1546 = vmatpush1.bf16.msra.mxu0 0
        %1547 = vmatprep.subr.bf16.mxu0 0
        %1548 = vmatpush1.bf16.msra.mxu0 0
        %1549 = vmatprep.subr.bf16.mxu0 0
        %1550 = vmatpush1.bf16.msra.mxu0 0
        %1551 = vmatprep.subr.bf16.mxu0 0
        %1552 = vmatpush1.bf16.msra.mxu0 0
        %1553 = vmatprep.mubr.bf16.mxu0 0
        %1554 = vmatmul.mubr.bf16.gmra.mrb[0].mxu0 %v1467
        %v1555 = vpop.f32.mrb[0].mxu0
        %v1556 = vadd.f32 0.0, %v1555
        %v1557 = vpop.f32.mrb[0].mxu0
        %v1558 = vpop.f32.mrb[0].mxu0
        %v1559 = vpop.f32.mrb[0].mxu0
        %1560 = vdwg.mxu0
        %v1562 = vunpack.c.l.b16 %v1451
        %v1563 = vpack.c.b16 %v1562, %v1562
        %v1565 = vshrl.u32 %v1563, 16
        %v1567 = vshll.u32 %v1563, 16
        %v1569 = vrot.slane %v1567, 1
        %v1570 = vor.u32 %v1565, %v1569
        %v1572 = vand.u32 %v1570, %v889
        %1574 = vmatprep.subr.bf16.mxu0 0
        %1575 = vmatpush1.bf16.msra.mxu0 %v1572
        %1576 = vmatprep.subr.bf16.mxu0 0
        %1577 = vmatpush1.bf16.msra.mxu0 0
        %1578 = vmatprep.subr.bf16.mxu0 0
        %1579 = vmatpush1.bf16.msra.mxu0 0
        %1580 = vmatprep.subr.bf16.mxu0 0
        %1581 = vmatpush1.bf16.msra.mxu0 0
        %1582 = vmatprep.subr.bf16.mxu0 0
        %1583 = vmatpush1.bf16.msra.mxu0 0
        %1584 = vmatprep.subr.bf16.mxu0 0
        %1585 = vmatpush1.bf16.msra.mxu0 0
        %1586 = vmatprep.subr.bf16.mxu0 0
        %1587 = vmatpush1.bf16.msra.mxu0 0
        %1588 = vmatprep.subr.bf16.mxu0 0
        %1589 = vmatpush1.bf16.msra.mxu0 0
        %1590 = vmatprep.subr.bf16.mxu0 0
        %1591 = vmatpush1.bf16.msra.mxu0 0
        %1592 = vmatprep.subr.bf16.mxu0 0
        %1593 = vmatpush1.bf16.msra.mxu0 0
        %1594 = vmatprep.subr.bf16.mxu0 0
        %1595 = vmatpush1.bf16.msra.mxu0 0
        %1596 = vmatprep.subr.bf16.mxu0 0
        %1597 = vmatpush1.bf16.msra.mxu0 0
        %1598 = vmatprep.subr.bf16.mxu0 0
        %1599 = vmatpush1.bf16.msra.mxu0 0
        %1600 = vmatprep.subr.bf16.mxu0 0
        %1601 = vmatpush1.bf16.msra.mxu0 0
        %1602 = vmatprep.subr.bf16.mxu0 0
        %1603 = vmatpush1.bf16.msra.mxu0 0
        %1604 = vmatprep.subr.bf16.mxu0 0
        %1605 = vmatpush1.bf16.msra.mxu0 0
        %1606 = vmatprep.mubr.bf16.mxu0 0
        %1607 = vmatmul.mubr.bf16.gmra.mrb[0].mxu0 %v884
        %v1608 = vpop.f32.mrb[0].mxu0
        %v1609 = vadd.f32 0.0, %v1608
        %v1610 = vpop.f32.mrb[0].mxu0
        %v1611 = vpop.f32.mrb[0].mxu0
        %v1612 = vadd.f32 0.0, %v1611
        %v1613 = vpop.f32.mrb[0].mxu0
        %1614 = vdwg.mxu0
        %v1617 = vunpack.c.l.s4 1966171168
        %v1618 = vunpack.c.0.s8 %v1617
        %v1619 = vlaneseq
        %v1620 = vshrl.u32 %v1619, 7
        %v1621 = vsub.s32 %v1618, %v1620
        %v1622 = vrot.slane %v1504, %v1621
        %v1623 = vcombine.high %v1622, %v1622
        %v1625 = vunpack.c.l.s4 1966171168
        %v1626 = vunpack.c.0.s8 %v1625
        %v1627 = vlaneseq
        %v1628 = vshrl.u32 %v1627, 7
        %v1629 = vsub.s32 %v1626, %v1628
        %v1630 = vrot.slane %v1622, %v1629
        %v1632 = vunpack.c.l.s4 1966171168
        %v1633 = vunpack.c.0.s8 %v1632
        %v1634 = vlaneseq
        %v1635 = vshrl.u32 %v1634, 7
        %v1636 = vsub.s32 %v1633, %v1635
        %v1637 = vrot.slane %v1623, %v1636
        %v1638 = vcombine.high %v1630, %v1630
        %v1639 = vcombine.high %v1637, %v1637
        %v1640 = vlaneseq
        %v1641 = vshrl.u32 %v1640, 7
        %v1642 = vsub.s32 0, %v1641
        %v1643 = vrot.slane %v1630, %v1642
        %v1644 = vlaneseq
        %v1645 = vshrl.u32 %v1644, 7
        %v1646 = vsub.s32 0, %v1645
        %v1647 = vrot.slane %v1637, %v1646
        %v1648 = vlaneseq
        %v1649 = vshrl.u32 %v1648, 7
        %v1650 = vsub.s32 0, %v1649
        %v1651 = vrot.slane %v1638, %v1650
        %v1652 = vlaneseq
        %v1653 = vshrl.u32 %v1652, 7
        %v1654 = vsub.s32 0, %v1653
        %v1655 = vrot.slane %v1639, %v1654
        %v1660 = vadd.f32 %v1643, %v1556
        %v1661 = vadd.f32 %v1647, %v1556
        %v1662 = vadd.f32 %v1651, %v1556
        %v1663 = vadd.f32 %v1655, %v1556
        %v1664 = vlaneseq
        %v1665 = vshrl.u32 %v1664, 7
        %v1666 = vsub.s32 0, %v1665
        %v1667 = vrot.slane %v1452, %v1666
        %v1668 = vmul.f32 %v749, %v1667
        %v1669 = vmul.f32 %v750, %v1667
        %v1670 = vmul.f32 %v751, %v1667
        %v1671 = vmul.f32 %v752, %v1667
        %v1672 = vadd.f32 %v1660, %v1668
        %v1673 = vadd.f32 %v1661, %v1669
        %v1674 = vadd.f32 %v1662, %v1670
        %v1675 = vadd.f32 %v1663, %v1671
        %v1678 = vcombine.high %v1609, %v1609
        %v1679 = vcombine.high %v1612, %v1612
        %v1682 = vadd.f32 %v1672, %v1609
        %v1683 = vadd.f32 %v1673, %v1678
        %v1684 = vadd.f32 %v1674, %v1612
        %v1685 = vadd.f32 %v1675, %v1679
        %s1686 = scalar_lea.vmem %s4, 1
        %v1687 = vld [vmem:[%s1686] sm:$0x1]
        %v1689 = vlaneseq
        %v1690 = vshrl.u32 %v1689, 7
        %v1691 = vsub.s32 0, %v1690
        %v1692 = vrot.slane %v1687, %v1691
        %v1694 = vadd.f32 %v1682, %v1692
        %v1695 = vadd.f32 %v1683, %v1692
        %v1696 = vadd.f32 %v1684, %v1692
        %v1697 = vadd.f32 %v1685, %v1692
        %v1698 = vxor.u32 %v1694, 2147483648
        %v1699 = vxor.u32 %v1695, 2147483648
        %v1700 = vxor.u32 %v1696, 2147483648
        %v1701 = vxor.u32 %v1697, 2147483648
        %v1702 = vmul.f32 %v1698, 1.442695
        %v1703 = vpow.pop %v1702
        %v1704 = vmul.f32 %v1699, 1.442695
        %v1705 = vpow.pop %v1704
        %v1706 = vmul.f32 %v1700, 1.442695
        %v1707 = vpow.pop %v1706
        %v1708 = vmul.f32 %v1701, 1.442695
        %v1709 = vpow.pop %v1708
        %v1710 = vadd.f32 %v1703, 1.0
        %v1711 = vadd.f32 %v1705, 1.0
        %v1712 = vadd.f32 %v1707, 1.0
        %v1713 = vadd.f32 %v1709, 1.0
        %v1714 = vrcp.pop %v1710
        %v1715 = vmul.f32 1.0, %v1714
        %v1716 = vrcp.pop %v1711
        %v1717 = vmul.f32 1.0, %v1716
        %v1718 = vrcp.pop %v1712
        %v1719 = vmul.f32 1.0, %v1718
        %v1720 = vrcp.pop %v1713
        %v1721 = vmul.f32 1.0, %v1720
        %v1722 = vmul.f32 %v1694, %v1715
        %v1723 = vmul.f32 %v1695, %v1717
        %v1724 = vmul.f32 %v1696, %v1719
        %v1725 = vmul.f32 %v1697, %v1721
        %s1726 = scalar_lea.vmem %s5, 16
        %v1727 = vld [vmem:[%s1726] sm:$0xf]
        %v1728 = vld [vmem:[%s1726 + $0x4] sm:$0xf]
        %v1729 = vld [vmem:[%s1726 + $0x8] sm:$0xf]
        %v1730 = vld [vmem:[%s1726 + $0xc] sm:$0xf]
        %v1735 = vcombine.low %v1722, %v1723
        %v1736 = vcombine.low %v1724, %v1725
        %v1739 = vpack.c.bf16 %v1736, %v1735
        %s1740 = scalar_lea.vmem %s6, 1
        %v1741 = vld [vmem:[%s1740] sm:$0x1]
        %v1743 = vlaneseq
        %v1744 = vshrl.u32 %v1743, 7
        %v1745 = vsub.s32 0, %v1744
        %v1746 = vrot.slane %v1741, %v1745
        %v1752 = vunpack.c.l.b16 %v1727
        %v1753 = vunpack.c.l.b16 %v1728
        %v1754 = vunpack.c.l.b16 %v1729
        %v1755 = vunpack.c.l.b16 %v1730
        %v1756 = vpack.c.b16 %v1753, %v1752
        %v1757 = vpack.c.b16 %v1755, %v1754
        %v1761 = vsel %vm776, %v1739, 0
        %1763 = vmatprep.subr.bf16.mxu0 0
        %1764 = vmatpush1.bf16.msra.mxu0 %v1756
        %1765 = vmatprep.subr.bf16.mxu0 0
        %1766 = vmatpush1.bf16.msra.mxu0 %v1757
        %1767 = vmatprep.subr.bf16.mxu0 0
        %1768 = vmatpush1.bf16.msra.mxu0 0
        %1769 = vmatprep.subr.bf16.mxu0 0
        %1770 = vmatpush1.bf16.msra.mxu0 0
        %1771 = vmatprep.subr.bf16.mxu0 0
        %1772 = vmatpush1.bf16.msra.mxu0 0
        %1773 = vmatprep.subr.bf16.mxu0 0
        %1774 = vmatpush1.bf16.msra.mxu0 0
        %1775 = vmatprep.subr.bf16.mxu0 0
        %1776 = vmatpush1.bf16.msra.mxu0 0
        %1777 = vmatprep.subr.bf16.mxu0 0
        %1778 = vmatpush1.bf16.msra.mxu0 0
        %1779 = vmatprep.subr.bf16.mxu0 0
        %1780 = vmatpush1.bf16.msra.mxu0 0
        %1781 = vmatprep.subr.bf16.mxu0 0
        %1782 = vmatpush1.bf16.msra.mxu0 0
        %1783 = vmatprep.subr.bf16.mxu0 0
        %1784 = vmatpush1.bf16.msra.mxu0 0
        %1785 = vmatprep.subr.bf16.mxu0 0
        %1786 = vmatpush1.bf16.msra.mxu0 0
        %1787 = vmatprep.subr.bf16.mxu0 0
        %1788 = vmatpush1.bf16.msra.mxu0 0
        %1789 = vmatprep.subr.bf16.mxu0 0
        %1790 = vmatpush1.bf16.msra.mxu0 0
        %1791 = vmatprep.subr.bf16.mxu0 0
        %1792 = vmatpush1.bf16.msra.mxu0 0
        %1793 = vmatprep.subr.bf16.mxu0 0
        %1794 = vmatpush1.bf16.msra.mxu0 0
        %1795 = vmatprep.mubr.bf16.mxu0 0
        %1796 = vmatmul.mubr.bf16.gmra.mrb[0].mxu0 %v1761
        %v1797 = vpop.f32.mrb[0].mxu0
        %v1798 = vadd.f32 %v1746, %v1797
        %v1799 = vpop.f32.mrb[0].mxu0
        %v1800 = vpop.f32.mrb[0].mxu0
        %v1801 = vadd.f32 %v1746, %v1800
        %v1802 = vpop.f32.mrb[0].mxu0
        %1803 = vdwg.mxu0
        %v1804 = vxor.u32 %v1798, 2147483648
        %v1805 = vxor.u32 %v1801, 2147483648
        %v1806 = vmul.f32 %v1804, 1.442695
        %v1807 = vpow.pop %v1806
        %v1808 = vmul.f32 %v1805, 1.442695
        %v1809 = vpow.pop %v1808
        %v1810 = vadd.f32 %v1807, 1.0
        %v1811 = vadd.f32 %v1809, 1.0
        %v1812 = vrcp.pop %v1810
        %v1813 = vmul.f32 1.0, %v1812
        %v1814 = vrcp.pop %v1811
        %v1815 = vmul.f32 1.0, %v1814
        %v1816 = vmul.f32 %v1798, %v1813
        %v1817 = vmul.f32 %v1801, %v1815
        %s1818 = scalar_lea.vmem %s7, 16
        %v1819 = vld [vmem:[%s1818] sm:$0xf]
        %v1820 = vld [vmem:[%s1818 + $0x4] sm:$0xf]
        %v1821 = vld [vmem:[%s1818 + $0x8] sm:$0xf]
        %v1822 = vld [vmem:[%s1818 + $0xc] sm:$0xf]
        %v1823 = vpack.c.bf16 %v1817, %v1816
        %s1824 = scalar_lea.vmem %s8, 1
        %v1825 = vld [vmem:[%s1824] sm:$0x1]
        %v1827 = vlaneseq
        %v1828 = vshrl.u32 %v1827, 7
        %v1829 = vsub.s32 0, %v1828
        %v1830 = vrot.slane %v1825, %v1829
        %v1836 = vunpack.c.l.b16 %v1819
        %v1837 = vunpack.c.l.b16 %v1820
        %v1838 = vunpack.c.l.b16 %v1821
        %v1839 = vunpack.c.l.b16 %v1822
        %v1840 = vpack.c.b16 %v1837, %v1836
        %v1841 = vpack.c.b16 %v1839, %v1838
        %v1845 = vsel %vm776, %v1823, 0
        %1847 = vmatprep.subr.bf16.mxu0 0
        %1848 = vmatpush1.bf16.msra.mxu0 %v1840
        %1849 = vmatprep.subr.bf16.mxu0 0
        %1850 = vmatpush1.bf16.msra.mxu0 %v1841
        %1851 = vmatprep.subr.bf16.mxu0 0
        %1852 = vmatpush1.bf16.msra.mxu0 0
        %1853 = vmatprep.subr.bf16.mxu0 0
        %1854 = vmatpush1.bf16.msra.mxu0 0
        %1855 = vmatprep.subr.bf16.mxu0 0
        %1856 = vmatpush1.bf16.msra.mxu0 0
        %1857 = vmatprep.subr.bf16.mxu0 0
        %1858 = vmatpush1.bf16.msra.mxu0 0
        %1859 = vmatprep.subr.bf16.mxu0 0
        %1860 = vmatpush1.bf16.msra.mxu0 0
        %1861 = vmatprep.subr.bf16.mxu0 0
        %1862 = vmatpush1.bf16.msra.mxu0 0
        %1863 = vmatprep.subr.bf16.mxu0 0
        %1864 = vmatpush1.bf16.msra.mxu0 0
        %1865 = vmatprep.subr.bf16.mxu0 0
        %1866 = vmatpush1.bf16.msra.mxu0 0
        %1867 = vmatprep.subr.bf16.mxu0 0
        %1868 = vmatpush1.bf16.msra.mxu0 0
        %1869 = vmatprep.subr.bf16.mxu0 0
        %1870 = vmatpush1.bf16.msra.mxu0 0
        %1871 = vmatprep.subr.bf16.mxu0 0
        %1872 = vmatpush1.bf16.msra.mxu0 0
        %1873 = vmatprep.subr.bf16.mxu0 0
        %1874 = vmatpush1.bf16.msra.mxu0 0
        %1875 = vmatprep.subr.bf16.mxu0 0
        %1876 = vmatpush1.bf16.msra.mxu0 0
        %1877 = vmatprep.subr.bf16.mxu0 0
        %1878 = vmatpush1.bf16.msra.mxu0 0
        %1879 = vmatprep.mubr.bf16.mxu0 0
        %1880 = vmatmul.mubr.bf16.gmra.mrb[0].mxu0 %v1845
        %v1881 = vpop.f32.mrb[0].mxu0
        %v1882 = vadd.f32 %v1830, %v1881
        %v1883 = vpop.f32.mrb[0].mxu0
        %v1884 = vpop.f32.mrb[0].mxu0
        %v1885 = vadd.f32 %v1830, %v1884
        %v1886 = vpop.f32.mrb[0].mxu0
        %1887 = vdwg.mxu0
        %v1888 = vxor.u32 %v1882, 2147483648
        %v1889 = vxor.u32 %v1885, 2147483648
        %v1890 = vmul.f32 %v1888, 1.442695
        %v1891 = vpow.pop %v1890
        %v1892 = vmul.f32 %v1889, 1.442695
        %v1893 = vpow.pop %v1892
        %v1894 = vadd.f32 %v1891, 1.0
        %v1895 = vadd.f32 %v1893, 1.0
        %v1896 = vrcp.pop %v1894
        %v1897 = vmul.f32 1.0, %v1896
        %v1898 = vrcp.pop %v1895
        %v1899 = vmul.f32 1.0, %v1898
        %v1900 = vmul.f32 %v1882, %v1897
        %v1901 = vmul.f32 %v1885, %v1899
        %s1902 = scalar_lea.vmem %s9, 16
        %v1903 = vld [vmem:[%s1902] sm:$0xf]
        %v1904 = vld [vmem:[%s1902 + $0x4] sm:$0xf]
        %v1905 = vld [vmem:[%s1902 + $0x8] sm:$0xf]
        %v1906 = vld [vmem:[%s1902 + $0xc] sm:$0xf]
        %v1907 = vpack.c.bf16 %v1901, %v1900
        %s1908 = scalar_lea.vmem %s10, 1
        %v1909 = vld [vmem:[%s1908] sm:$0x1]
        %v1911 = vlaneseq
        %v1912 = vshrl.u32 %v1911, 7
        %v1913 = vsub.s32 0, %v1912
        %v1914 = vrot.slane %v1909, %v1913
        %v1920 = vunpack.c.l.b16 %v1903
        %v1921 = vunpack.c.l.b16 %v1904
        %v1922 = vunpack.c.l.b16 %v1905
        %v1923 = vunpack.c.l.b16 %v1906
        %v1924 = vpack.c.b16 %v1921, %v1920
        %v1925 = vpack.c.b16 %v1923, %v1922
        %v1929 = vsel %vm776, %v1907, 0
        %1931 = vmatprep.subr.bf16.mxu0 0
        %1932 = vmatpush1.bf16.msra.mxu0 %v1924
        %1933 = vmatprep.subr.bf16.mxu0 0
        %1934 = vmatpush1.bf16.msra.mxu0 %v1925
        %1935 = vmatprep.subr.bf16.mxu0 0
        %1936 = vmatpush1.bf16.msra.mxu0 0
        %1937 = vmatprep.subr.bf16.mxu0 0
        %1938 = vmatpush1.bf16.msra.mxu0 0
        %1939 = vmatprep.subr.bf16.mxu0 0
        %1940 = vmatpush1.bf16.msra.mxu0 0
        %1941 = vmatprep.subr.bf16.mxu0 0
        %1942 = vmatpush1.bf16.msra.mxu0 0
        %1943 = vmatprep.subr.bf16.mxu0 0
        %1944 = vmatpush1.bf16.msra.mxu0 0
        %1945 = vmatprep.subr.bf16.mxu0 0
        %1946 = vmatpush1.bf16.msra.mxu0 0
        %1947 = vmatprep.subr.bf16.mxu0 0
        %1948 = vmatpush1.bf16.msra.mxu0 0
        %1949 = vmatprep.subr.bf16.mxu0 0
        %1950 = vmatpush1.bf16.msra.mxu0 0
        %1951 = vmatprep.subr.bf16.mxu0 0
        %1952 = vmatpush1.bf16.msra.mxu0 0
        %1953 = vmatprep.subr.bf16.mxu0 0
        %1954 = vmatpush1.bf16.msra.mxu0 0
        %1955 = vmatprep.subr.bf16.mxu0 0
        %1956 = vmatpush1.bf16.msra.mxu0 0
        %1957 = vmatprep.subr.bf16.mxu0 0
        %1958 = vmatpush1.bf16.msra.mxu0 0
        %1959 = vmatprep.subr.bf16.mxu0 0
        %1960 = vmatpush1.bf16.msra.mxu0 0
        %1961 = vmatprep.subr.bf16.mxu0 0
        %1962 = vmatpush1.bf16.msra.mxu0 0
        %1963 = vmatprep.mubr.bf16.mxu0 0
        %1964 = vmatmul.mubr.bf16.gmra.mrb[0].mxu0 %v1929
        %v1965 = vpop.f32.mrb[0].mxu0
        %v1966 = vadd.f32 %v1914, %v1965
        %v1967 = vpop.f32.mrb[0].mxu0
        %v1968 = vpop.f32.mrb[0].mxu0
        %v1969 = vadd.f32 %v1914, %v1968
        %v1970 = vpop.f32.mrb[0].mxu0
        %1971 = vdwg.mxu0
        %1973 = vset.pattern.permute.xlu0 0
        %1974 = vperm.xlu0 %1973, %v1966
        %v1975 = vpop.permute.xlu0 %1974
        %1977 = vset.pattern.permute.xlu0 0
        %1978 = vperm.xlu0 %1977, %v1969
        %v1979 = vpop.permute.xlu0 %1978
        %v1981 = vunpack.c.l.s4 839922192
        %v1982 = vunpack.c.0.s8 %v1981
        %v1983 = vlaneseq
        %v1984 = vshrl.u32 %v1983, 7
        %v1985 = vsub.s32 %v1982, %v1984
        %v1986 = vrot.slane %v1975, %v1985
        %v1988 = vunpack.c.l.s4 1985246804
        %v1989 = vunpack.c.0.s8 %v1988
        %v1990 = vlaneseq
        %v1991 = vshrl.u32 %v1990, 7
        %v1992 = vsub.s32 %v1989, %v1991
        %v1993 = vrot.slane %v1975, %v1992
        %v1995 = vunpack.c.l.s4 839922192
        %v1996 = vunpack.c.0.s8 %v1995
        %v1997 = vlaneseq
        %v1998 = vshrl.u32 %v1997, 7
        %v1999 = vsub.s32 %v1996, %v1998
        %v2000 = vrot.slane %v1979, %v1999
        %v2002 = vunpack.c.l.s4 1985246804
        %v2003 = vunpack.c.0.s8 %v2002
        %v2004 = vlaneseq
        %v2005 = vshrl.u32 %v2004, 7
        %v2006 = vsub.s32 %v2003, %v2005
        %v2007 = vrot.slane %v1979, %v2006
        %v2012 = vmul.f32 %v724, %v1986
        %v2013 = vmul.f32 %v725, %v1993
        %v2014 = vmul.f32 %v726, %v2000
        %v2015 = vmul.f32 %v727, %v2007
        %v2016 = vsel %vm732, %v2012, 0.0
        %v2017 = vrot.slane %v2016, 4
        %v2018 = vadd.f32 %v2016, %v2017
        %v2019 = vrot.slane %v2018, 2
        %v2020 = vadd.f32 %v2018, %v2019
        %v2021 = vrot.slane %v2020, 1
        %v2022 = vadd.f32 %v2020, %v2021
        %v2023 = vsel %vm732, %v2013, 0.0
        %v2024 = vrot.slane %v2023, 4
        %v2025 = vadd.f32 %v2023, %v2024
        %v2026 = vrot.slane %v2025, 2
        %v2027 = vadd.f32 %v2025, %v2026
        %v2028 = vrot.slane %v2027, 1
        %v2029 = vadd.f32 %v2027, %v2028
        %v2030 = vsel %vm732, %v2014, 0.0
        %v2031 = vrot.slane %v2030, 4
        %v2032 = vadd.f32 %v2030, %v2031
        %v2033 = vrot.slane %v2032, 2
        %v2034 = vadd.f32 %v2032, %v2033
        %v2035 = vrot.slane %v2034, 1
        %v2036 = vadd.f32 %v2034, %v2035
        %v2037 = vsel %vm732, %v2015, 0.0
        %v2038 = vrot.slane %v2037, 4
        %v2039 = vadd.f32 %v2037, %v2038
        %v2040 = vrot.slane %v2039, 2
        %v2041 = vadd.f32 %v2039, %v2040
        %v2042 = vrot.slane %v2041, 1
        %v2043 = vadd.f32 %v2041, %v2042
        %v2048 = vsel %vm1193, %v2029, %v2022
        %v2049 = vsel %vm1195, %v2036, %v2048
        %v2050 = vsel %vm1197, %v2043, %v2049
        %v2052 = vadd.f32 %v675, %v2050
        %2053 = vst.msk [vmem:[%s672] sm:$0xf] %vm732, %v2052
        %v2056 = vcombine.high %v1816, %v1816
        %v2057 = vcombine.high %v1817, %v1817
        %v2060 = vsel %vm1140, %v1816, 0.0
        %v2061 = vrot.slane %v2060, 4
        %v2062 = vadd.f32 %v2060, %v2061
        %v2063 = vrot.slane %v2062, 2
        %v2064 = vadd.f32 %v2062, %v2063
        %v2065 = vrot.slane %v2064, 1
        %v2066 = vadd.f32 %v2064, %v2065
        %v2067 = vsel %vm1140, %v2056, 0.0
        %v2068 = vrot.slane %v2067, 4
        %v2069 = vadd.f32 %v2067, %v2068
        %v2070 = vrot.slane %v2069, 2
        %v2071 = vadd.f32 %v2069, %v2070
        %v2072 = vrot.slane %v2071, 1
        %v2073 = vadd.f32 %v2071, %v2072
        %v2074 = vsel %vm1140, %v1817, 0.0
        %v2075 = vrot.slane %v2074, 4
        %v2076 = vadd.f32 %v2074, %v2075
        %v2077 = vrot.slane %v2076, 2
        %v2078 = vadd.f32 %v2076, %v2077
        %v2079 = vrot.slane %v2078, 1
        %v2080 = vadd.f32 %v2078, %v2079
        %v2081 = vsel %vm1140, %v2057, 0.0
        %v2082 = vrot.slane %v2081, 4
        %v2083 = vadd.f32 %v2081, %v2082
        %v2084 = vrot.slane %v2083, 2
        %v2085 = vadd.f32 %v2083, %v2084
        %v2086 = vrot.slane %v2085, 1
        %v2087 = vadd.f32 %v2085, %v2086
        %s2088 = scalar_lea.vmem %s11, 48
        %v2089 = vld [vmem:[%s2088] sm:$0xf]
        %v2090 = vld [vmem:[%s2088 + $0x4] sm:$0xf]
        %v2091 = vld [vmem:[%s2088 + $0x8] sm:$0xf]
        %v2092 = vld [vmem:[%s2088 + $0xc] sm:$0xf]
        %v2093 = vld [vmem:[%s2088 + $0x10] sm:$0xf]
        %v2094 = vld [vmem:[%s2088 + $0x14] sm:$0xf]
        %v2095 = vld [vmem:[%s2088 + $0x18] sm:$0xf]
        %v2096 = vld [vmem:[%s2088 + $0x1c] sm:$0xf]
        %v2097 = vld [vmem:[%s2088 + $0x20] sm:$0xf]
        %v2098 = vld [vmem:[%s2088 + $0x24] sm:$0xf]
        %v2099 = vld [vmem:[%s2088 + $0x28] sm:$0xf]
        %v2100 = vld [vmem:[%s2088 + $0x2c] sm:$0xf]
        %v2101 = vpack.c.bf16 %v2066, %v2066
        %v2102 = vpack.c.bf16 %v2073, %v2073
        %v2103 = vpack.c.bf16 %v2080, %v2080
        %v2104 = vpack.c.bf16 %v2087, %v2087
        %v2109 = vunpack.c.l.b16 %v2101
        %v2110 = vunpack.c.l.b16 %v2102
        %v2111 = vunpack.c.l.b16 %v2103
        %v2112 = vunpack.c.l.b16 %v2104
        %v2113 = vsel %vm1193, %v2110, %v2109
        %v2114 = vsel %vm1195, %v2111, %v2113
        %v2115 = vsel %vm1197, %v2112, %v2114
        %v2116 = vpack.c.b16 %v2115, %v2115
        %v2121 = vunpack.c.l.b16 %v2093
        %v2122 = vunpack.c.l.b16 %v2094
        %v2123 = vunpack.c.l.b16 %v2095
        %v2124 = vunpack.c.l.b16 %v2096
        %v2125 = vpack.c.b16 %v2122, %v2121
        %v2126 = vpack.c.b16 %v2124, %v2123
        %v2130 = vsel %vm776, %v2116, 0
        %2132 = vmatprep.subr.bf16.mxu0 0
        %2133 = vmatpush1.bf16.msra.mxu0 %v2125
        %2134 = vmatprep.subr.bf16.mxu0 0
        %2135 = vmatpush1.bf16.msra.mxu0 %v2126
        %2136 = vmatprep.subr.bf16.mxu0 0
        %2137 = vmatpush1.bf16.msra.mxu0 0
        %2138 = vmatprep.subr.bf16.mxu0 0
        %2139 = vmatpush1.bf16.msra.mxu0 0
        %2140 = vmatprep.subr.bf16.mxu0 0
        %2141 = vmatpush1.bf16.msra.mxu0 0
        %2142 = vmatprep.subr.bf16.mxu0 0
        %2143 = vmatpush1.bf16.msra.mxu0 0
        %2144 = vmatprep.subr.bf16.mxu0 0
        %2145 = vmatpush1.bf16.msra.mxu0 0
        %2146 = vmatprep.subr.bf16.mxu0 0
        %2147 = vmatpush1.bf16.msra.mxu0 0
        %2148 = vmatprep.subr.bf16.mxu0 0
        %2149 = vmatpush1.bf16.msra.mxu0 0
        %2150 = vmatprep.subr.bf16.mxu0 0
        %2151 = vmatpush1.bf16.msra.mxu0 0
        %2152 = vmatprep.subr.bf16.mxu0 0
        %2153 = vmatpush1.bf16.msra.mxu0 0
        %2154 = vmatprep.subr.bf16.mxu0 0
        %2155 = vmatpush1.bf16.msra.mxu0 0
        %2156 = vmatprep.subr.bf16.mxu0 0
        %2157 = vmatpush1.bf16.msra.mxu0 0
        %2158 = vmatprep.subr.bf16.mxu0 0
        %2159 = vmatpush1.bf16.msra.mxu0 0
        %2160 = vmatprep.subr.bf16.mxu0 0
        %2161 = vmatpush1.bf16.msra.mxu0 0
        %2162 = vmatprep.subr.bf16.mxu0 0
        %2163 = vmatpush1.bf16.msra.mxu0 0
        %2164 = vmatprep.mubr.bf16.mxu0 0
        %2165 = vmatmul.mubr.bf16.gmra.mrb[0].mxu0 %v2130
        %v2166 = vpop.f32.mrb[0].mxu0
        %v2167 = vadd.f32 0.0, %v2166
        %v2168 = vpop.f32.mrb[0].mxu0
        %v2169 = vpop.f32.mrb[0].mxu0
        %v2170 = vpop.f32.mrb[0].mxu0
        %2171 = vdwg.mxu0
        %v2176 = vunpack.c.l.b16 %v2089
        %v2177 = vunpack.c.l.b16 %v2090
        %v2178 = vunpack.c.l.b16 %v2091
        %v2179 = vunpack.c.l.b16 %v2092
        %v2180 = vpack.c.b16 %v2177, %v2176
        %v2181 = vpack.c.b16 %v2179, %v2178
        %2184 = vmatprep.subr.bf16.mxu0 0
        %2185 = vmatpush1.bf16.msra.mxu0 %v2180
        %2186 = vmatprep.subr.bf16.mxu0 0
        %2187 = vmatpush1.bf16.msra.mxu0 %v2181
        %2188 = vmatprep.subr.bf16.mxu0 0
        %2189 = vmatpush1.bf16.msra.mxu0 0
        %2190 = vmatprep.subr.bf16.mxu0 0
        %2191 = vmatpush1.bf16.msra.mxu0 0
        %2192 = vmatprep.subr.bf16.mxu0 0
        %2193 = vmatpush1.bf16.msra.mxu0 0
        %2194 = vmatprep.subr.bf16.mxu0 0
        %2195 = vmatpush1.bf16.msra.mxu0 0
        %2196 = vmatprep.subr.bf16.mxu0 0
        %2197 = vmatpush1.bf16.msra.mxu0 0
        %2198 = vmatprep.subr.bf16.mxu0 0
        %2199 = vmatpush1.bf16.msra.mxu0 0
        %2200 = vmatprep.subr.bf16.mxu0 0
        %2201 = vmatpush1.bf16.msra.mxu0 0
        %2202 = vmatprep.subr.bf16.mxu0 0
        %2203 = vmatpush1.bf16.msra.mxu0 0
        %2204 = vmatprep.subr.bf16.mxu0 0
        %2205 = vmatpush1.bf16.msra.mxu0 0
        %2206 = vmatprep.subr.bf16.mxu0 0
        %2207 = vmatpush1.bf16.msra.mxu0 0
        %2208 = vmatprep.subr.bf16.mxu0 0
        %2209 = vmatpush1.bf16.msra.mxu0 0
        %2210 = vmatprep.subr.bf16.mxu0 0
        %2211 = vmatpush1.bf16.msra.mxu0 0
        %2212 = vmatprep.subr.bf16.mxu0 0
        %2213 = vmatpush1.bf16.msra.mxu0 0
        %2214 = vmatprep.subr.bf16.mxu0 0
        %2215 = vmatpush1.bf16.msra.mxu0 0
        %2216 = vmatprep.mubr.bf16.mxu0 0
        %2217 = vmatmul.mubr.bf16.gmra.mrb[0].mxu0 %v1467
        %v2218 = vpop.f32.mrb[0].mxu0
        %v2219 = vadd.f32 %v2167, %v2218
        %v2220 = vpop.f32.mrb[0].mxu0
        %v2221 = vpop.f32.mrb[0].mxu0
        %v2222 = vpop.f32.mrb[0].mxu0
        %2223 = vdwg.mxu0
        %v2228 = vunpack.c.l.b16 %v2097
        %v2229 = vunpack.c.l.b16 %v2098
        %v2230 = vunpack.c.l.b16 %v2099
        %v2231 = vunpack.c.l.b16 %v2100
        %v2232 = vpack.c.b16 %v2229, %v2228
        %v2233 = vpack.c.b16 %v2231, %v2230
        %2236 = vmatprep.subr.bf16.mxu0 0
        %2237 = vmatpush1.bf16.msra.mxu0 %v2232
        %2238 = vmatprep.subr.bf16.mxu0 0
        %2239 = vmatpush1.bf16.msra.mxu0 %v2233
        %2240 = vmatprep.subr.bf16.mxu0 0
        %2241 = vmatpush1.bf16.msra.mxu0 0
        %2242 = vmatprep.subr.bf16.mxu0 0
        %2243 = vmatpush1.bf16.msra.mxu0 0
        %2244 = vmatprep.subr.bf16.mxu0 0
        %2245 = vmatpush1.bf16.msra.mxu0 0
        %2246 = vmatprep.subr.bf16.mxu0 0
        %2247 = vmatpush1.bf16.msra.mxu0 0
        %2248 = vmatprep.subr.bf16.mxu0 0
        %2249 = vmatpush1.bf16.msra.mxu0 0
        %2250 = vmatprep.subr.bf16.mxu0 0
        %2251 = vmatpush1.bf16.msra.mxu0 0
        %2252 = vmatprep.subr.bf16.mxu0 0
        %2253 = vmatpush1.bf16.msra.mxu0 0
        %2254 = vmatprep.subr.bf16.mxu0 0
        %2255 = vmatpush1.bf16.msra.mxu0 0
        %2256 = vmatprep.subr.bf16.mxu0 0
        %2257 = vmatpush1.bf16.msra.mxu0 0
        %2258 = vmatprep.subr.bf16.mxu0 0
        %2259 = vmatpush1.bf16.msra.mxu0 0
        %2260 = vmatprep.subr.bf16.mxu0 0
        %2261 = vmatpush1.bf16.msra.mxu0 0
        %2262 = vmatprep.subr.bf16.mxu0 0
        %2263 = vmatpush1.bf16.msra.mxu0 0
        %2264 = vmatprep.subr.bf16.mxu0 0
        %2265 = vmatpush1.bf16.msra.mxu0 0
        %2266 = vmatprep.subr.bf16.mxu0 0
        %2267 = vmatpush1.bf16.msra.mxu0 0
        %2268 = vmatprep.mubr.bf16.mxu0 0
        %2269 = vmatmul.mubr.bf16.gmra.mrb[0].mxu0 %v1467
        %v2270 = vpop.f32.mrb[0].mxu0
        %v2271 = vadd.f32 0.0, %v2270
        %v2272 = vpop.f32.mrb[0].mxu0
        %v2273 = vpop.f32.mrb[0].mxu0
        %v2274 = vpop.f32.mrb[0].mxu0
        %2275 = vdwg.mxu0
        %v2276 = vadd.f32 %v2219, %v2271
        %s2277 = scalar_lea.vmem %s12, 1
        %v2278 = vld [vmem:[%s2277] sm:$0x1]
        %v2280 = vlaneseq
        %v2281 = vshrl.u32 %v2280, 7
        %v2282 = vsub.s32 0, %v2281
        %v2283 = vrot.slane %v2278, %v2282
        %v2285 = vadd.f32 %v2276, %v2283
        %v2286 = vxor.u32 %v2285, 2147483648
        %v2287 = vmul.f32 %v2286, 1.442695
        %v2288 = vpow.pop %v2287
        %v2289 = vadd.f32 %v2288, 1.0
        %v2290 = vrcp.pop %v2289
        %v2291 = vmul.f32 1.0, %v2290
        %v2292 = vmul.f32 %v2285, %v2291
        %s2293 = scalar_lea.vmem %s13, 16
        %v2294 = vld [vmem:[%s2293] sm:$0xf]
        %v2295 = vld [vmem:[%s2293 + $0x4] sm:$0xf]
        %v2296 = vld [vmem:[%s2293 + $0x8] sm:$0xf]
        %v2297 = vld [vmem:[%s2293 + $0xc] sm:$0xf]
        %v2298 = vpack.c.bf16 %v2292, %v2292
        %s2299 = scalar_lea.vmem %s14, 1
        %v2300 = vld [vmem:[%s2299] sm:$0x1]
        %v2302 = vlaneseq
        %v2303 = vshrl.u32 %v2302, 7
        %v2304 = vsub.s32 0, %v2303
        %v2305 = vrot.slane %v2300, %v2304
        %v2311 = vunpack.c.l.b16 %v2294
        %v2312 = vunpack.c.l.b16 %v2295
        %v2313 = vunpack.c.l.b16 %v2296
        %v2314 = vunpack.c.l.b16 %v2297
        %v2315 = vpack.c.b16 %v2312, %v2311
        %v2316 = vpack.c.b16 %v2314, %v2313
        %v2320 = vsel %vm776, %v2298, 0
        %2322 = vmatprep.subr.bf16.mxu0 0
        %2323 = vmatpush1.bf16.msra.mxu0 %v2315
        %2324 = vmatprep.subr.bf16.mxu0 0
        %2325 = vmatpush1.bf16.msra.mxu0 %v2316
        %2326 = vmatprep.subr.bf16.mxu0 0
        %2327 = vmatpush1.bf16.msra.mxu0 0
        %2328 = vmatprep.subr.bf16.mxu0 0
        %2329 = vmatpush1.bf16.msra.mxu0 0
        %2330 = vmatprep.subr.bf16.mxu0 0
        %2331 = vmatpush1.bf16.msra.mxu0 0
        %2332 = vmatprep.subr.bf16.mxu0 0
        %2333 = vmatpush1.bf16.msra.mxu0 0
        %2334 = vmatprep.subr.bf16.mxu0 0
        %2335 = vmatpush1.bf16.msra.mxu0 0
        %2336 = vmatprep.subr.bf16.mxu0 0
        %2337 = vmatpush1.bf16.msra.mxu0 0
        %2338 = vmatprep.subr.bf16.mxu0 0
        %2339 = vmatpush1.bf16.msra.mxu0 0
        %2340 = vmatprep.subr.bf16.mxu0 0
        %2341 = vmatpush1.bf16.msra.mxu0 0
        %2342 = vmatprep.subr.bf16.mxu0 0
        %2343 = vmatpush1.bf16.msra.mxu0 0
        %2344 = vmatprep.subr.bf16.mxu0 0
        %2345 = vmatpush1.bf16.msra.mxu0 0
        %2346 = vmatprep.subr.bf16.mxu0 0
        %2347 = vmatpush1.bf16.msra.mxu0 0
        %2348 = vmatprep.subr.bf16.mxu0 0
        %2349 = vmatpush1.bf16.msra.mxu0 0
        %2350 = vmatprep.subr.bf16.mxu0 0
        %2351 = vmatpush1.bf16.msra.mxu0 0
        %2352 = vmatprep.subr.bf16.mxu0 0
        %2353 = vmatpush1.bf16.msra.mxu0 0
        %2354 = vmatprep.mubr.bf16.mxu0 0
        %2355 = vmatmul.mubr.bf16.gmra.mrb[0].mxu0 %v2320
        %v2356 = vpop.f32.mrb[0].mxu0
        %v2357 = vadd.f32 %v2305, %v2356
        %v2358 = vpop.f32.mrb[0].mxu0
        %v2359 = vpop.f32.mrb[0].mxu0
        %v2360 = vpop.f32.mrb[0].mxu0
        %2361 = vdwg.mxu0
        %v2362 = vld [vmem:[%s15] sm:$0xf]
        %v2363 = vld [vmem:[%s15 + $0x4] sm:$0xf]
        %v2364 = vld [vmem:[%s15 + $0x8] sm:$0xf]
        %v2365 = vld [vmem:[%s15 + $0xc] sm:$0xf]
        %v2366 = vpack.c.bf16 %v2357, %v2357
        %v2367 = vld [vmem:[%s16] sm:$0x1]
        %v2369 = vlaneseq
        %v2370 = vshrl.u32 %v2369, 7
        %v2371 = vsub.s32 0, %v2370
        %v2372 = vrot.slane %v2367, %v2371
        %v2378 = vunpack.c.l.b16 %v2362
        %v2379 = vunpack.c.l.b16 %v2363
        %v2380 = vunpack.c.l.b16 %v2364
        %v2381 = vunpack.c.l.b16 %v2365
        %v2382 = vpack.c.b16 %v2379, %v2378
        %v2383 = vpack.c.b16 %v2381, %v2380
        %v2387 = vsel %vm776, %v2366, 0
        %2389 = vmatprep.subr.bf16.mxu0 0
        %2390 = vmatpush1.bf16.msra.mxu0 %v2382
        %2391 = vmatprep.subr.bf16.mxu0 0
        %2392 = vmatpush1.bf16.msra.mxu0 %v2383
        %2393 = vmatprep.subr.bf16.mxu0 0
        %2394 = vmatpush1.bf16.msra.mxu0 0
        %2395 = vmatprep.subr.bf16.mxu0 0
        %2396 = vmatpush1.bf16.msra.mxu0 0
        %2397 = vmatprep.subr.bf16.mxu0 0
        %2398 = vmatpush1.bf16.msra.mxu0 0
        %2399 = vmatprep.subr.bf16.mxu0 0
        %2400 = vmatpush1.bf16.msra.mxu0 0
        %2401 = vmatprep.subr.bf16.mxu0 0
        %2402 = vmatpush1.bf16.msra.mxu0 0
        %2403 = vmatprep.subr.bf16.mxu0 0
        %2404 = vmatpush1.bf16.msra.mxu0 0
        %2405 = vmatprep.subr.bf16.mxu0 0
        %2406 = vmatpush1.bf16.msra.mxu0 0
        %2407 = vmatprep.subr.bf16.mxu0 0
        %2408 = vmatpush1.bf16.msra.mxu0 0
        %2409 = vmatprep.subr.bf16.mxu0 0
        %2410 = vmatpush1.bf16.msra.mxu0 0
        %2411 = vmatprep.subr.bf16.mxu0 0
        %2412 = vmatpush1.bf16.msra.mxu0 0
        %2413 = vmatprep.subr.bf16.mxu0 0
        %2414 = vmatpush1.bf16.msra.mxu0 0
        %2415 = vmatprep.subr.bf16.mxu0 0
        %2416 = vmatpush1.bf16.msra.mxu0 0
        %2417 = vmatprep.subr.bf16.mxu0 0
        %2418 = vmatpush1.bf16.msra.mxu0 0
        %2419 = vmatprep.subr.bf16.mxu0 0
        %2420 = vmatpush1.bf16.msra.mxu0 0
        %2421 = vmatprep.mubr.bf16.mxu0 0
        %2422 = vmatmul.mubr.bf16.gmra.mrb[0].mxu0 %v2387
        %v2423 = vpop.f32.mrb[0].mxu0
        %v2424 = vadd.f32 %v2372, %v2423
        %v2425 = vpop.f32.mrb[0].mxu0
        %v2426 = vpop.f32.mrb[0].mxu0
        %v2427 = vpop.f32.mrb[0].mxu0
        %2428 = vdwg.mxu0
        %v2429 = vxor.u32 %v2424, 2147483648
        %v2430 = vmul.f32 %v2429, 1.442695
        %v2431 = vpow.pop %v2430
        %v2432 = vadd.f32 %v2431, 1.0
        %v2433 = vrcp.pop %v2432
        %v2434 = vmul.f32 1.0, %v2433
        %v2435 = vmul.f32 %v2424, %v2434
        %v2436 = vld [vmem:[%s17] sm:$0xf]
        %v2437 = vld [vmem:[%s17 + $0x4] sm:$0xf]
        %v2438 = vpack.c.bf16 %v2435, %v2435
        %v2439 = vld [vmem:[%s18] sm:$0x1]
        %v2441 = vlaneseq
        %v2442 = vshrl.u32 %v2441, 7
        %v2443 = vsub.s32 0, %v2442
        %v2444 = vrot.slane %v2439, %v2443
        %v2448 = vunpack.c.l.b16 %v2436
        %v2449 = vunpack.c.l.b16 %v2437
        %v2450 = vpack.c.b16 %v2449, %v2448
        %vm2452 = vcmask 130048
        %v2454 = vsel %vm2452, %v2438, 0
        %2456 = vmatprep.subr.bf16.mxu0 0
        %2457 = vmatpush1.bf16.msra.mxu0 %v2450
        %2458 = vmatprep.subr.bf16.mxu0 0
        %2459 = vmatpush1.bf16.msra.mxu0 0
        %2460 = vmatprep.subr.bf16.mxu0 0
        %2461 = vmatpush1.bf16.msra.mxu0 0
        %2462 = vmatprep.subr.bf16.mxu0 0
        %2463 = vmatpush1.bf16.msra.mxu0 0
        %2464 = vmatprep.subr.bf16.mxu0 0
        %2465 = vmatpush1.bf16.msra.mxu0 0
        %2466 = vmatprep.subr.bf16.mxu0 0
        %2467 = vmatpush1.bf16.msra.mxu0 0
        %2468 = vmatprep.subr.bf16.mxu0 0
        %2469 = vmatpush1.bf16.msra.mxu0 0
        %2470 = vmatprep.subr.bf16.mxu0 0
        %2471 = vmatpush1.bf16.msra.mxu0 0
        %2472 = vmatprep.subr.bf16.mxu0 0
        %2473 = vmatpush1.bf16.msra.mxu0 0
        %2474 = vmatprep.subr.bf16.mxu0 0
        %2475 = vmatpush1.bf16.msra.mxu0 0
        %2476 = vmatprep.subr.bf16.mxu0 0
        %2477 = vmatpush1.bf16.msra.mxu0 0
        %2478 = vmatprep.subr.bf16.mxu0 0
        %2479 = vmatpush1.bf16.msra.mxu0 0
        %2480 = vmatprep.subr.bf16.mxu0 0
        %2481 = vmatpush1.bf16.msra.mxu0 0
        %2482 = vmatprep.subr.bf16.mxu0 0
        %2483 = vmatpush1.bf16.msra.mxu0 0
        %2484 = vmatprep.subr.bf16.mxu0 0
        %2485 = vmatpush1.bf16.msra.mxu0 0
        %2486 = vmatprep.subr.bf16.mxu0 0
        %2487 = vmatpush1.bf16.msra.mxu0 0
        %2488 = vmatprep.mubr.bf16.mxu0 0
        %2489 = vmatmul.mubr.bf16.gmra.mrb[0].mxu0 %v2454
        %v2490 = vpop.f32.mrb[0].mxu0
        %v2491 = vadd.f32 %v2444, %v2490
        %v2492 = vpop.f32.mrb[0].mxu0
        %v2493 = vpop.f32.mrb[0].mxu0
        %v2494 = vpop.f32.mrb[0].mxu0
        %2495 = vdwg.mxu0
        %vm2496 = vcmask 35840
        %2497 = vst.msk [vmem:[%s649] sm:$0xf] %vm2496, %v2491
        %s2498 = sand.u32 %s457, 1
        %s2499 = scalar_lea.sflag [#allocation3], %s2498
        %s2500 = sand.u32 %s457, 1
        %s2501 = smul.addr %s2500, 4
        %s2502 = scalar_lea.vmem [#allocation2], %s2501
        %p2503 = scmp.lt.s32.totalorder %s35, 1
        %s2504 = scalar_select %p2503, %s35, 1
        %s2505 = smul.addr %s2504, 4
        %s2506 = scalar_lea.vmem %s20, %s2505
        // Predicated region
        $region97: #{decoder_forward.3} parent=95 // pred_check
          %p2507 = pneg %p467
        $region98: #{decoder_forward.3} parent=95 // pred_check_branch
          %2509 = sbr.rel (%p2507) target = $region100
        $region99: #{decoder_forward.3} parent=95 // pred_region
          %s2511 = ssub.s32 64, 64
          %2512 = vsyncadd %s2499, %s2511
          %s2513 = smul.addr %s35, 64
          %s2514 = scalar_lea.hbm %s19, %s2513
          %s2516 = sshll.u32 %s2502, 4
          %s2517 = int_to_ptr.vmem [resolvable:$true] %s2516
          %2519 = dma.vmem_to_hbm [thread:$0]  %s2517, 64, %s2514, %s2499
        $region100: #{decoder_forward.3} parent=95 // pred_fallthru
          _
        // Predicated region
        $region101: #{decoder_forward.3} parent=95 // pred_check
          %p2520 = pneg %p493
        $region102: #{decoder_forward.3} parent=95 // pred_check_branch
          %2522 = sbr.rel (%p2520) target = $region104
        $region103: #{decoder_forward.3} parent=95 // pred_region
          _
        $region104: #{decoder_forward.3} parent=95 // pred_fallthru
          _
      $region96: #{decoder_forward.3} parent=5 // pred_fallthru
        _
      %p2523 = scmp.le.s32.totalorder 2, %s30
      // Predicated region
      $region105: #{decoder_forward.3} parent=5 // pred_check
        %p2524 = pneg %p2523
      $region106: #{decoder_forward.3} parent=5 // pred_check_branch
        %2526 = sbr.rel (%p2524) target = $region108
      $region107: #{decoder_forward.3} parent=5 // pred_region
        %s2527 = ssub.s32 %s30, 2
        // Predicated region
        $region109: #{decoder_forward.3} parent=107 // pred_check
          %p2528 = pneg %p473
        $region110: #{decoder_forward.3} parent=107 // pred_check_branch
          %2530 = sbr.rel (%p2528) target = $region112
        $region111: #{decoder_forward.3} parent=107 // pred_region
          %s2531 = sand.u32 %s458, 1
          %s2532 = scalar_lea.sflag [#allocation3], %s2531
          %s2533 = sand.u32 %s458, 1
          %s2534 = smul.addr %s2533, 4
          %s2535 = scalar_lea.vmem [#allocation2], %s2534
          %2536 = dma.done %s2532, 64
        $region112: #{decoder_forward.3} parent=107 // pred_fallthru
          _
        // Predicated region
        $region113: #{decoder_forward.3} parent=107 // pred_check
          %p2537 = pneg %p499
        $region114: #{decoder_forward.3} parent=107 // pred_check_branch
          %2539 = sbr.rel (%p2537) target = $region116
        $region115: #{decoder_forward.3} parent=107 // pred_region
          %p2540 = scmp.lt.s32.totalorder %s36, 1
          %s2541 = scalar_select %p2540, %s36, 1
          %s2542 = smul.addr %s2541, 4
          %s2543 = scalar_lea.vmem %s20, %s2542
        $region116: #{decoder_forward.3} parent=107 // pred_fallthru
          _
      $region108: #{decoder_forward.3} parent=5 // pred_fallthru
        _
    $region6: #{decoder_forward.3} parent=1 // loop_footer
      %s34 = sadd.s32 1, %s30
    $region7: #{decoder_forward.3} parent=1 // loop_footer_branch
      %29 = sbr.rel target = $region3
    $region8: #{decoder_forward.3} parent=1 // loop_exit
      _
    %2544 = vsyncpa [#allocation3], 1
    %s2545 = scalar_lea.sflag [#allocation3], 1
    %2546 = vsyncpa %s2545, 1

</llo_original>
